<compile_context>
chip_gen: v5e
topology: v5e:2x2
jax: 0.10.0
libtpu: 0.0.40
codegen_flags: <defaults>
</compile_context>

<pallas_src>
import functools

import jax
import jax.numpy as jnp
from jax.experimental import pallas as pl
from jax.experimental.pallas import tpu as pltpu


LATENT_DIM = 512   # fixed by the module (self.latent_dim = 512)


def _round_up(x, m):
    return (x + m - 1) // m * m


def _leaky_relu(x, slope=0.2):
    return jnp.where(x > 0, x, slope * x)


def _discriminator_kernel(img_ref, lbl_ref,
                          w0_ref, ltab_ref,
                          w1_ref, b1_ref,
                          w2_ref, b2_ref,
                          w3_ref, b3_ref,
                          o_ref):
    """One batch tile of the whole MLP.

    img_ref  : (TB, D_img_pad) f32    flattened (zero-padded) image block
    lbl_ref  : (TB, 1)         int32  class labels for this tile
    w0_ref   : (D_img_pad,512) bf16   image part of the first Linear
    ltab_ref : (NC_pad, 512)   f32    embed @ W0_label + b0 (label+bias contribution)
    w1/w2    : (512, 512)      bf16   hidden Linears; b1/b2: (1, 512) f32
    w3_ref   : (1, 512)        f32    head weight as a row; b3_ref: (1, 1) f32
    o_ref    : (TB, 1)         f32    sigmoid output column
    """
    tb = img_ref.shape[0]
    ncp = ltab_ref.shape[0]

    # Block 1: Linear(D_in, 512) -> LeakyReLU(0.2)   (normalize=False, no dropout)
    #   concat([img, emb(lbl)]) @ W0 + b0
    #     == img @ W0_img  +  one_hot(lbl) @ (embed @ W0_lbl + b0)
    x = img_ref[...].astype(jnp.bfloat16)                       # cast in VMEM (VPU)
    h = jnp.dot(x, w0_ref[...], preferred_element_type=jnp.float32)
    lane = jax.lax.broadcasted_iota(jnp.int32, (tb, ncp), 1)
    onehot = (lane == lbl_ref[...]).astype(jnp.float32)         # exact row select
    h = h + jnp.dot(onehot, ltab_ref[...], preferred_element_type=jnp.float32)
    h = _leaky_relu(h)

    # Block 2: Linear(512, 512) -> Dropout (eval: identity) -> LeakyReLU(0.2)
    h = jnp.dot(h.astype(jnp.bfloat16), w1_ref[...],
                preferred_element_type=jnp.float32) + b1_ref[...]
    h = _leaky_relu(h)

    # Block 3: Linear(512, 512) -> Dropout (eval: identity) -> LeakyReLU(0.2)
    h = jnp.dot(h.astype(jnp.bfloat16), w2_ref[...],
                preferred_element_type=jnp.float32) + b2_ref[...]
    h = _leaky_relu(h)

    # Head: Linear(512, 1) -> Sigmoid, as VPU mul + lane reduce (no 128-lane padding).
    logit = jnp.sum(h * w3_ref[...], axis=-1, keepdims=True) + b3_ref[...]
    o_ref[...] = jax.nn.sigmoid(logit)


@functools.partial(jax.jit, static_argnames=("block_b",))
def discriminator_forward(img, labels, params, *, block_b=512):
    """Flatten / split-at-concat / pad on the wrapper side; run the MLP as one kernel."""
    B = img.shape[0]
    d_img = 1
    for s in img.shape[1:]:
        d_img *= s
    d_img_pad = _round_up(d_img, 128)

    num_classes = params["embed"].shape[0]
    nc_pad = _round_up(max(num_classes, 128), 128)

    # Batch tile: >=128 rows always; chosen so B > TB gives >=2 grid steps (v7x dual TC).
    TB = min(block_b, max(128, _round_up(-(-B // 2), 128)))
    B_pad = _round_up(B, TB)
    grid = (B_pad // TB,)

    # Image features: flatten (free reshape), zero-pad K to 128 and B to B_pad; stay f32,
    # the kernel casts to bf16 right before the first dot.
    img_x = img.reshape(B, d_img).astype(jnp.float32)
    if d_img_pad != d_img or B_pad != B:
        img_x = jnp.pad(img_x, ((0, B_pad - B), (0, d_img_pad - d_img)))

    lbl_x = labels.astype(jnp.int32).reshape(B, 1)
    if B_pad != B:
        lbl_x = jnp.pad(lbl_x, ((0, B_pad - B), (0, 0)))

    # Split first Linear's weight at the original concat boundary [img | label_embed].
    w0_img = params["w0"][:d_img].astype(jnp.bfloat16)
    if d_img_pad != d_img:
        w0_img = jnp.pad(w0_img, ((0, d_img_pad - d_img), (0, 0)))

    # Label + bias contribution table (b0 folded in), kept f32 so row selection is exact.
    w0_lbl = params["w0"][d_img:].astype(jnp.float32)
    lbl_table = (params["embed"].astype(jnp.float32) @ w0_lbl
                 + params["b0"].astype(jnp.float32))            # (num_classes, 512)
    if nc_pad != num_classes:
        lbl_table = jnp.pad(lbl_table, ((0, nc_pad - num_classes), (0, 0)))

    w3_row = params["w3"].astype(jnp.float32).T                 # (1, 512)
    b3 = params["b3"].astype(jnp.float32).reshape(1, 1)

    operands = (
        img_x,
        lbl_x,
        w0_img,
        lbl_table,
        params["w1"].astype(jnp.bfloat16), params["b1"].astype(jnp.float32),
        params["w2"].astype(jnp.bfloat16), params["b2"].astype(jnp.float32),
        w3_row, b3,
    )

    def stream_spec(cols):
        return pl.BlockSpec((TB, cols), lambda i: (i, 0))

    def resident_spec(shape):
        return pl.BlockSpec(shape, lambda i: (0, 0))            # all residents are 2D

    in_specs = [
        stream_spec(d_img_pad),                                  # image block (f32)
        stream_spec(1),                                          # labels (int32)
        resident_spec(w0_img.shape),
        resident_spec(lbl_table.shape),
        resident_spec(params["w1"].shape), resident_spec(params["b1"].shape),
        resident_spec(params["w2"].shape), resident_spec(params["b2"].shape),
        resident_spec(w3_row.shape), resident_spec(b3.shape),
    ]

    # Explicit scoped-VMEM budget: 2x resident weights (buffering) + 3x streamed tile
    # (double-buffered in/out) + margin; floor 16 MiB, cap at v7x physical 64 MiB.
    resident_bytes = (w0_img.size * 2 + lbl_table.size * 4
                      + 2 * LATENT_DIM * LATENT_DIM * 2
                      + 2 * LATENT_DIM * 4 + LATENT_DIM * 4 + 4)
    stream_bytes = TB * (d_img_pad * 4 + 4 + 4)
    vmem_limit = int(min(64 << 20,
                         max(16 << 20,
                             2 * resident_bytes + 3 * stream_bytes + (4 << 20))))

    mm_terms = (d_img_pad * LATENT_DIM + nc_pad * LATENT_DIM
                + 2 * LATENT_DIM * LATENT_DIM + LATENT_DIM)
    cost = pl.CostEstimate(
        flops=2 * B_pad * mm_terms,
        transcendentals=B_pad,
        bytes_accessed=int(resident_bytes
                           + B_pad * (d_img_pad * 4 + 4 + 4)),
    )

    out = pl.pallas_call(
        _discriminator_kernel,
        out_shape=jax.ShapeDtypeStruct((B_pad, 1), jnp.float32),
        grid=grid,
        in_specs=in_specs,
        out_specs=stream_spec(1),
        compiler_params=pltpu.CompilerParams(
            dimension_semantics=("parallel",),
            vmem_limit_bytes=vmem_limit),
        cost_estimate=cost,
    )(*operands)

    return out[:B]                                               # (B, 1)


def init_params(key, num_classes, image_shape):
    """Deterministic synthetic init matching the PyTorch module's parameter shapes."""
    d_img = 1
    for s in image_shape:
        d_img *= s
    d_in = num_classes + d_img

    keys = jax.random.split(key, 9)

    def linear(kw, kb, n_in, n_out):
        bound = 1.0 / jnp.sqrt(jnp.float32(n_in))
        w = jax.random.uniform(kw, (n_in, n_out), jnp.float32, -bound, bound)
        b = jax.random.uniform(kb, (1, n_out), jnp.float32, -bound, bound)
        return w, b

    embed = jax.random.normal(keys[0], (num_classes, num_classes), jnp.float32)
    w0, b0 = linear(keys[1], keys[2], d_in, LATENT_DIM)
    w1, b1 = linear(keys[3], keys[4], LATENT_DIM, LATENT_DIM)
    w2, b2 = linear(keys[5], keys[6], LATENT_DIM, LATENT_DIM)
    w3, b3 = linear(keys[7], keys[8], LATENT_DIM, 1)

    return {
        "embed": embed,
        "w0": w0, "b0": b0,
        "w1": w1, "b1": b1,
        "w2": w2, "b2": b2,
        "w3": w3, "b3": b3,
    }


def _reference_forward(img, labels, params):
    """Pure-JAX reference mirroring the kernel's bf16-weight / f32-accum math."""
    B = img.shape[0]
    d_img = 1
    for s in img.shape[1:]:
        d_img *= s
    img_f = img.reshape(B, d_img)
    w0_img = params["w0"][:d_img]
    w0_lbl = params["w0"][d_img:]

    lbl_table = (params["embed"].astype(jnp.float32) @ w0_lbl.astype(jnp.float32)
                 + params["b0"].astype(jnp.float32))
    lbl_contrib = jnp.take(lbl_table, labels, axis=0)

    h = jnp.dot(img_f.astype(jnp.bfloat16), w0_img.astype(jnp.bfloat16),
                preferred_element_type=jnp.float32)
    h = _leaky_relu(h + lbl_contrib)
    h = _leaky_relu(jnp.dot(h.astype(jnp.bfloat16), params["w1"].astype(jnp.bfloat16),
                            preferred_element_type=jnp.float32) + params["b1"])
    h = _leaky_relu(jnp.dot(h.astype(jnp.bfloat16), params["w2"].astype(jnp.bfloat16),
                            preferred_element_type=jnp.float32) + params["b2"])
    logit = jnp.dot(h, params["w3"].astype(jnp.float32)) + params["b3"]
    return jax.nn.sigmoid(logit)


if __name__ == "__main__":
    num_classes = 10
    image_shape = (1, 16, 16)   # small CHW image; D_in = 10 + 256 = 266
    B = 8

    key = jax.random.PRNGKey(0)
    k_params, k_img, k_lbl = jax.random.split(key, 3)

    params = init_params(k_params, num_classes, image_shape)
    img = jax.random.normal(k_img, (B,) + image_shape, jnp.float32)       # NCHW
    labels = jax.random.randint(k_lbl, (B,), 0, num_classes, jnp.int32)

    out = discriminator_forward(img, labels, params)
    out = jax.block_until_ready(out)

    ref = _reference_forward(img, labels, params)
    assert out.shape == (B, 1)
    assert jnp.allclose(out, ref, atol=2e-3, rtol=2e-3), "mismatch vs JAX reference"

    print("KERNEL_OK")
</pallas_src>

<mosaic_0001>
module attributes {stable_mosaic.version = 11 : i64} {
  func.func @_discriminator_kernel(%arg0: i32, %arg1: memref<128x256xf32, #tpu.memory_space<vmem>>, %arg2: memref<128x1xi32, #tpu.memory_space<vmem>>, %arg3: memref<256x512xbf16, #tpu.memory_space<vmem>>, %arg4: memref<128x512xf32, #tpu.memory_space<vmem>>, %arg5: memref<512x512xbf16, #tpu.memory_space<vmem>>, %arg6: memref<1x512xf32, #tpu.memory_space<vmem>>, %arg7: memref<512x512xbf16, #tpu.memory_space<vmem>>, %arg8: memref<1x512xf32, #tpu.memory_space<vmem>>, %arg9: memref<1x512xf32, #tpu.memory_space<vmem>>, %arg10: memref<1x1xf32, #tpu.memory_space<vmem>>, %arg11: memref<128x1xf32, #tpu.memory_space<vmem>>) attributes {dimension_semantics = [#tpu.dimension_semantics<parallel>], iteration_bounds = array<i64: 1>, scalar_prefetch = 0 : i64, scratch_operands = 0 : i64, tpu.core_type = #tpu.core_type<tc>, window_params = [{transform_indices = @transform_0, window_bounds = array<i64: 128, 256>}, {transform_indices = @transform_1, window_bounds = array<i64: 128, 1>}, {pipeline_mode = #tpu.pipeline_mode<synchronous>, transform_indices = @transform_2, window_bounds = array<i64: 256, 512>}, {pipeline_mode = #tpu.pipeline_mode<synchronous>, transform_indices = @transform_3, window_bounds = array<i64: 128, 512>}, {pipeline_mode = #tpu.pipeline_mode<synchronous>, transform_indices = @transform_4, window_bounds = array<i64: 512, 512>}, {pipeline_mode = #tpu.pipeline_mode<synchronous>, transform_indices = @transform_5, window_bounds = array<i64: 1, 512>}, {pipeline_mode = #tpu.pipeline_mode<synchronous>, transform_indices = @transform_6, window_bounds = array<i64: 512, 512>}, {pipeline_mode = #tpu.pipeline_mode<synchronous>, transform_indices = @transform_7, window_bounds = array<i64: 1, 512>}, {pipeline_mode = #tpu.pipeline_mode<synchronous>, transform_indices = @transform_8, window_bounds = array<i64: 1, 512>}, {pipeline_mode = #tpu.pipeline_mode<synchronous>, transform_indices = @transform_9, window_bounds = array<i64: 1, 1>}, {transform_indices = @transform_10, window_bounds = array<i64: 128, 1>}]} {
    %c0 = arith.constant 0 : index
    %c0_0 = arith.constant 0 : index
    %0 = vector.load %arg1[%c0, %c0_0] : memref<128x256xf32, #tpu.memory_space<vmem>>, vector<128x256xf32>
    %1 = arith.truncf %0 : vector<128x256xf32> to vector<128x256xbf16>
    %c0_1 = arith.constant 0 : index
    %c0_2 = arith.constant 0 : index
    %2 = vector.load %arg3[%c0_1, %c0_2] : memref<256x512xbf16, #tpu.memory_space<vmem>>, vector<256x512xbf16>
    %cst = arith.constant dense<0.000000e+00> : vector<128x512xf32>
    %3 = tpu.matmul %1, %2, %cst {dimension_numbers = #tpu.dot_dimension_numbers<[1], [0], [0], [1], [0, 0, 1, 1], [], []>} : vector<128x256xbf16>, vector<256x512xbf16>, vector<128x512xf32> -> vector<128x512xf32>
    %4 = tpu.iota {dimensions = array<i32: 1>} : vector<128x128xi32>
    %c0_3 = arith.constant 0 : index
    %c0_4 = arith.constant 0 : index
    %5 = vector.load %arg2[%c0_3, %c0_4] : memref<128x1xi32, #tpu.memory_space<vmem>>, vector<128x1xi32>
    %6 = vector.broadcast %5 : vector<128x1xi32> to vector<128x128xi32>
    %7 = arith.cmpi eq, %4, %6 : vector<128x128xi32>
    %8 = arith.extui %7 : vector<128x128xi1> to vector<128x128xi32>
    %9 = arith.sitofp %8 : vector<128x128xi32> to vector<128x128xf32>
    %c0_5 = arith.constant 0 : index
    %c0_6 = arith.constant 0 : index
    %10 = vector.load %arg4[%c0_5, %c0_6] : memref<128x512xf32, #tpu.memory_space<vmem>>, vector<128x512xf32>
    %cst_7 = arith.constant dense<0.000000e+00> : vector<128x512xf32>
    %11 = tpu.matmul %9, %10, %cst_7 {dimension_numbers = #tpu.dot_dimension_numbers<[1], [0], [0], [1], [0, 0, 1, 1], [], []>} : vector<128x128xf32>, vector<128x512xf32>, vector<128x512xf32> -> vector<128x512xf32>
    %12 = arith.addf %3, %11 : vector<128x512xf32>
    %cst_8 = arith.constant 0.000000e+00 : f32
    %13 = vector.broadcast %cst_8 : f32 to vector<128x512xf32>
    %14 = arith.cmpf ogt, %12, %13 : vector<128x512xf32>
    %cst_9 = arith.constant 2.000000e-01 : f32
    %15 = vector.broadcast %cst_9 : f32 to vector<128x512xf32>
    %16 = arith.mulf %15, %12 : vector<128x512xf32>
    %17 = arith.select %14, %12, %16 : vector<128x512xi1>, vector<128x512xf32>
    %18 = arith.truncf %17 : vector<128x512xf32> to vector<128x512xbf16>
    %c0_10 = arith.constant 0 : index
    %c0_11 = arith.constant 0 : index
    %19 = vector.load %arg5[%c0_10, %c0_11] : memref<512x512xbf16, #tpu.memory_space<vmem>>, vector<512x512xbf16>
    %cst_12 = arith.constant dense<0.000000e+00> : vector<128x512xf32>
    %20 = tpu.matmul %18, %19, %cst_12 {dimension_numbers = #tpu.dot_dimension_numbers<[1], [0], [0], [1], [0, 0, 1, 1], [], []>} : vector<128x512xbf16>, vector<512x512xbf16>, vector<128x512xf32> -> vector<128x512xf32>
    %c0_13 = arith.constant 0 : index
    %c0_14 = arith.constant 0 : index
    %21 = vector.load %arg6[%c0_13, %c0_14] : memref<1x512xf32, #tpu.memory_space<vmem>>, vector<1x512xf32>
    %22 = vector.broadcast %21 : vector<1x512xf32> to vector<128x512xf32>
    %23 = arith.addf %20, %22 : vector<128x512xf32>
    %cst_15 = arith.constant 0.000000e+00 : f32
    %24 = vector.broadcast %cst_15 : f32 to vector<128x512xf32>
    %25 = arith.cmpf ogt, %23, %24 : vector<128x512xf32>
    %cst_16 = arith.constant 2.000000e-01 : f32
    %26 = vector.broadcast %cst_16 : f32 to vector<128x512xf32>
    %27 = arith.mulf %26, %23 : vector<128x512xf32>
    %28 = arith.select %25, %23, %27 : vector<128x512xi1>, vector<128x512xf32>
    %29 = arith.truncf %28 : vector<128x512xf32> to vector<128x512xbf16>
    %c0_17 = arith.constant 0 : index
    %c0_18 = arith.constant 0 : index
    %30 = vector.load %arg7[%c0_17, %c0_18] : memref<512x512xbf16, #tpu.memory_space<vmem>>, vector<512x512xbf16>
    %cst_19 = arith.constant dense<0.000000e+00> : vector<128x512xf32>
    %31 = tpu.matmul %29, %30, %cst_19 {dimension_numbers = #tpu.dot_dimension_numbers<[1], [0], [0], [1], [0, 0, 1, 1], [], []>} : vector<128x512xbf16>, vector<512x512xbf16>, vector<128x512xf32> -> vector<128x512xf32>
    %c0_20 = arith.constant 0 : index
    %c0_21 = arith.constant 0 : index
    %32 = vector.load %arg8[%c0_20, %c0_21] : memref<1x512xf32, #tpu.memory_space<vmem>>, vector<1x512xf32>
    %33 = vector.broadcast %32 : vector<1x512xf32> to vector<128x512xf32>
    %34 = arith.addf %31, %33 : vector<128x512xf32>
    %cst_22 = arith.constant 0.000000e+00 : f32
    %35 = vector.broadcast %cst_22 : f32 to vector<128x512xf32>
    %36 = arith.cmpf ogt, %34, %35 : vector<128x512xf32>
    %cst_23 = arith.constant 2.000000e-01 : f32
    %37 = vector.broadcast %cst_23 : f32 to vector<128x512xf32>
    %38 = arith.mulf %37, %34 : vector<128x512xf32>
    %39 = arith.select %36, %34, %38 : vector<128x512xi1>, vector<128x512xf32>
    %c0_24 = arith.constant 0 : index
    %c0_25 = arith.constant 0 : index
    %40 = vector.load %arg9[%c0_24, %c0_25] : memref<1x512xf32, #tpu.memory_space<vmem>>, vector<1x512xf32>
    %41 = vector.broadcast %40 : vector<1x512xf32> to vector<128x512xf32>
    %42 = arith.mulf %39, %41 : vector<128x512xf32>
    %cst_26 = arith.constant dense<0.000000e+00> : vector<128xf32>
    %43 = vector.multi_reduction <add>, %42, %cst_26 [1] : vector<128x512xf32> to vector<128xf32>
    %44 = vector.shape_cast %43 : vector<128xf32> to vector<128x1xf32>
    %c0_27 = arith.constant 0 : index
    %c0_28 = arith.constant 0 : index
    %45 = vector.load %arg10[%c0_27, %c0_28] : memref<1x1xf32, #tpu.memory_space<vmem>>, vector<1x1xf32>
    %46 = vector.broadcast %45 : vector<1x1xf32> to vector<128x1xf32>
    %47 = arith.addf %44, %46 : vector<128x1xf32>
    %48 = arith.negf %47 : vector<128x1xf32>
    %49 = math.exp %48 : vector<128x1xf32>
    %cst_29 = arith.constant 1.000000e+00 : f32
    %50 = vector.broadcast %cst_29 : f32 to vector<128x1xf32>
    %51 = arith.addf %50, %49 : vector<128x1xf32>
    %52 = arith.divf %50, %51 : vector<128x1xf32>
    %c0_30 = arith.constant 0 : index
    %c0_31 = arith.constant 0 : index
    %53 = vector.load %arg11[%c0_30, %c0_31] : memref<128x1xf32, #tpu.memory_space<vmem>>, vector<128x1xf32>
    tpu.vector_store %arg11[%c0_30, %c0_31], %52 {strides = array<i32>} : memref<128x1xf32, #tpu.memory_space<vmem>>, vector<128x1xf32>,
    return
  }
  func.func @transform_0(%arg0: i32) -> (i32, i32) {
    %c0_i32 = arith.constant 0 : i32
    %c0_i32_0 = arith.constant 0 : i32
    return %arg0, %c0_i32 : i32, i32
  }
  func.func @transform_1(%arg0: i32) -> (i32, i32) {
    %c0_i32 = arith.constant 0 : i32
    %c0_i32_0 = arith.constant 0 : i32
    return %arg0, %c0_i32 : i32, i32
  }
  func.func @transform_2(%arg0: i32) -> (i32, i32) {
    %c0_i32 = arith.constant 0 : i32
    %c0_i32_0 = arith.constant 0 : i32
    %c0_i32_1 = arith.constant 0 : i32
    return %c0_i32, %c0_i32_0 : i32, i32
  }
  func.func @transform_3(%arg0: i32) -> (i32, i32) {
    %c0_i32 = arith.constant 0 : i32
    %c0_i32_0 = arith.constant 0 : i32
    %c0_i32_1 = arith.constant 0 : i32
    return %c0_i32, %c0_i32_0 : i32, i32
  }
  func.func @transform_4(%arg0: i32) -> (i32, i32) {
    %c0_i32 = arith.constant 0 : i32
    %c0_i32_0 = arith.constant 0 : i32
    %c0_i32_1 = arith.constant 0 : i32
    return %c0_i32, %c0_i32_0 : i32, i32
  }
  func.func @transform_5(%arg0: i32) -> (i32, i32) {
    %c0_i32 = arith.constant 0 : i32
    %c0_i32_0 = arith.constant 0 : i32
    %c0_i32_1 = arith.constant 0 : i32
    return %c0_i32, %c0_i32_0 : i32, i32
  }
  func.func @transform_6(%arg0: i32) -> (i32, i32) {
    %c0_i32 = arith.constant 0 : i32
    %c0_i32_0 = arith.constant 0 : i32
    %c0_i32_1 = arith.constant 0 : i32
    return %c0_i32, %c0_i32_0 : i32, i32
  }
  func.func @transform_7(%arg0: i32) -> (i32, i32) {
    %c0_i32 = arith.constant 0 : i32
    %c0_i32_0 = arith.constant 0 : i32
    %c0_i32_1 = arith.constant 0 : i32
    return %c0_i32, %c0_i32_0 : i32, i32
  }
  func.func @transform_8(%arg0: i32) -> (i32, i32) {
    %c0_i32 = arith.constant 0 : i32
    %c0_i32_0 = arith.constant 0 : i32
    %c0_i32_1 = arith.constant 0 : i32
    return %c0_i32, %c0_i32_0 : i32, i32
  }
  func.func @transform_9(%arg0: i32) -> (i32, i32) {
    %c0_i32 = arith.constant 0 : i32
    %c0_i32_0 = arith.constant 0 : i32
    %c0_i32_1 = arith.constant 0 : i32
    return %c0_i32, %c0_i32_0 : i32, i32
  }
  func.func @transform_10(%arg0: i32) -> (i32, i32) {
    %c0_i32 = arith.constant 0 : i32
    %c0_i32_0 = arith.constant 0 : i32
    return %arg0, %c0_i32 : i32, i32
  }
}

</mosaic_0001>

<llo_original>
// kernel: discriminator_forward.1
$region0: #{discriminator_forward.1}
  #allocation0 [shape = 'u32[]', space=smem, size = 0x4, offset = 0x4, fixed_abs, tag = 'smem constant byte address 0x4 - core index']
  #allocation1 [shape = 'u32[72,128]{1,0:T(1,128)}', space=vmem, size = 0x9000, scoped, tag = 'internal scratch']
  #allocation2 [shape = 'f32[1,1]{1,0:T(1,128)S(1)}', space=vmem, size = 0x200, scoped, tag = 'scoped memory for discriminator_forward.1']
  %s0 = inlined_call_operand.vmem [shape: f32[128,256], index: 0, kind: input, shape index: {}]
  %s1 = inlined_call_operand.vmem [shape: s32[128,1], index: 1, kind: input, shape index: {}]
  %s2 = inlined_call_operand.vmem [shape: bf16[256,512], index: 2, kind: input, shape index: {}]
  %s3 = inlined_call_operand.vmem [shape: f32[128,512], index: 3, kind: input, shape index: {}]
  %s4 = inlined_call_operand.vmem [shape: bf16[512,512], index: 4, kind: input, shape index: {}]
  %s5 = inlined_call_operand.vmem [shape: f32[1,512], index: 5, kind: input, shape index: {}]
  %s6 = inlined_call_operand.vmem [shape: bf16[512,512], index: 6, kind: input, shape index: {}]
  %s7 = inlined_call_operand.vmem [shape: f32[1,512], index: 7, kind: input, shape index: {}]
  %s8 = inlined_call_operand.vmem [shape: f32[1,512], index: 8, kind: input, shape index: {}]
  %s9 = inlined_call_operand.<no memory space> [shape: f32[1,1], index: 9, kind: input, shape index: {}]
  %s10 = inlined_call_operand.vmem [shape: f32[128,1], index: 10, kind: output, shape index: {}]
  %s11 = sld [smem:[#allocation0]]
  $region50: #{discriminator_forward.1} parent=0
    _
  %s13 = ssub.s32 1, %s11
  %s14 = scalar_select 0, %s13, %s11
  %v15 = vstv %s9
  %16 = vst [vmem:[#allocation2] sm:$0x1] %v15
  // Predicated region
  $region2: #{discriminator_forward.1} parent=0 // pred_check
    _
  $region3: #{discriminator_forward.1} parent=0 // pred_check_branch
    %18 = sbr.rel (0) target = $region5
  $region4: #{discriminator_forward.1} parent=0 // pred_region
    _
  $region5: #{discriminator_forward.1} parent=0 // pred_fallthru
    _
  // Predicated region
  $region6: #{discriminator_forward.1} parent=0 // pred_check
    _
  $region7: #{discriminator_forward.1} parent=0 // pred_check_branch
    %20 = sbr.rel (0) target = $region9
  $region8: #{discriminator_forward.1} parent=0 // pred_region
    _
  $region9: #{discriminator_forward.1} parent=0 // pred_fallthru
    _
  // Predicated region
  $region10: #{discriminator_forward.1} parent=0 // pred_check
    _
  $region11: #{discriminator_forward.1} parent=0 // pred_check_branch
    %22 = sbr.rel (0) target = $region13
  $region12: #{discriminator_forward.1} parent=0 // pred_region
    _
  $region13: #{discriminator_forward.1} parent=0 // pred_fallthru
    _
  // Predicated region
  $region14: #{discriminator_forward.1} parent=0 // pred_check
    _
  $region15: #{discriminator_forward.1} parent=0 // pred_check_branch
    %24 = sbr.rel (0) target = $region17
  $region16: #{discriminator_forward.1} parent=0 // pred_region
    _
  $region17: #{discriminator_forward.1} parent=0 // pred_fallthru
    _
  // Predicated region
  $region18: #{discriminator_forward.1} parent=0 // pred_check
    _
  $region19: #{discriminator_forward.1} parent=0 // pred_check_branch
    %26 = sbr.rel (0) target = $region21
  $region20: #{discriminator_forward.1} parent=0 // pred_region
    _
  $region21: #{discriminator_forward.1} parent=0 // pred_fallthru
    _
  // Predicated region
  $region22: #{discriminator_forward.1} parent=0 // pred_check
    _
  $region23: #{discriminator_forward.1} parent=0 // pred_check_branch
    %28 = sbr.rel (0) target = $region25
  $region24: #{discriminator_forward.1} parent=0 // pred_region
    _
  $region25: #{discriminator_forward.1} parent=0 // pred_fallthru
    _
  // Predicated region
  $region26: #{discriminator_forward.1} parent=0 // pred_check
    _
  $region27: #{discriminator_forward.1} parent=0 // pred_check_branch
    %30 = sbr.rel (0) target = $region29
  $region28: #{discriminator_forward.1} parent=0 // pred_region
    _
  $region29: #{discriminator_forward.1} parent=0 // pred_fallthru
    _
  // Predicated region
  $region30: #{discriminator_forward.1} parent=0 // pred_check
    _
  $region31: #{discriminator_forward.1} parent=0 // pred_check_branch
    %32 = sbr.rel (0) target = $region33
  $region32: #{discriminator_forward.1} parent=0 // pred_region
    _
  $region33: #{discriminator_forward.1} parent=0 // pred_fallthru
    _
  // Predicated region
  $region34: #{discriminator_forward.1} parent=0 // pred_check
    _
  $region35: #{discriminator_forward.1} parent=0 // pred_check_branch
    %34 = sbr.rel (0) target = $region37
  $region36: #{discriminator_forward.1} parent=0 // pred_region
    _
  $region37: #{discriminator_forward.1} parent=0 // pred_fallthru
    _
  // Predicated region
  $region38: #{discriminator_forward.1} parent=0 // pred_check
    _
  $region39: #{discriminator_forward.1} parent=0 // pred_check_branch
    %36 = sbr.rel (0) target = $region41
  $region40: #{discriminator_forward.1} parent=0 // pred_region
    _
  $region41: #{discriminator_forward.1} parent=0 // pred_fallthru
    _
  %v37 = vld [vmem:[%s0] sm:$0xff]
  %v38 = vld [vmem:[%s0 + $0x8] sm:$0xff]
  %v39 = vld [vmem:[%s0 + $0x10] sm:$0xff]
  %v40 = vld [vmem:[%s0 + $0x18] sm:$0xff]
  %v41 = vld [vmem:[%s0 + $0x20] sm:$0xff]
  %v42 = vld [vmem:[%s0 + $0x28] sm:$0xff]
  %v43 = vld [vmem:[%s0 + $0x30] sm:$0xff]
  %v44 = vld [vmem:[%s0 + $0x38] sm:$0xff]
  %v45 = vld [vmem:[%s0 + $0x40] sm:$0xff]
  %v46 = vld [vmem:[%s0 + $0x48] sm:$0xff]
  %v47 = vld [vmem:[%s0 + $0x50] sm:$0xff]
  %v48 = vld [vmem:[%s0 + $0x58] sm:$0xff]
  %v49 = vld [vmem:[%s0 + $0x60] sm:$0xff]
  %v50 = vld [vmem:[%s0 + $0x68] sm:$0xff]
  %v51 = vld [vmem:[%s0 + $0x70] sm:$0xff]
  %v52 = vld [vmem:[%s0 + $0x78] sm:$0xff]
  %v53 = vld [vmem:[%s0 + $0x80] sm:$0xff]
  %v54 = vld [vmem:[%s0 + $0x88] sm:$0xff]
  %v55 = vld [vmem:[%s0 + $0x90] sm:$0xff]
  %v56 = vld [vmem:[%s0 + $0x98] sm:$0xff]
  %v57 = vld [vmem:[%s0 + $0xa0] sm:$0xff]
  %v58 = vld [vmem:[%s0 + $0xa8] sm:$0xff]
  %v59 = vld [vmem:[%s0 + $0xb0] sm:$0xff]
  %v60 = vld [vmem:[%s0 + $0xb8] sm:$0xff]
  %v61 = vld [vmem:[%s0 + $0xc0] sm:$0xff]
  %v62 = vld [vmem:[%s0 + $0xc8] sm:$0xff]
  %v63 = vld [vmem:[%s0 + $0xd0] sm:$0xff]
  %v64 = vld [vmem:[%s0 + $0xd8] sm:$0xff]
  %v65 = vld [vmem:[%s0 + $0xe0] sm:$0xff]
  %v66 = vld [vmem:[%s0 + $0xe8] sm:$0xff]
  %v67 = vld [vmem:[%s0 + $0xf0] sm:$0xff]
  %v68 = vld [vmem:[%s0 + $0xf8] sm:$0xff]
  %v69 = vpack.c.bf16 %v39, %v37
  %v70 = vpack.c.bf16 %v40, %v38
  %v71 = vpack.c.bf16 %v43, %v41
  %v72 = vpack.c.bf16 %v44, %v42
  %v73 = vpack.c.bf16 %v47, %v45
  %v74 = vpack.c.bf16 %v48, %v46
  %v75 = vpack.c.bf16 %v51, %v49
  %v76 = vpack.c.bf16 %v52, %v50
  %v77 = vpack.c.bf16 %v55, %v53
  %v78 = vpack.c.bf16 %v56, %v54
  %v79 = vpack.c.bf16 %v59, %v57
  %v80 = vpack.c.bf16 %v60, %v58
  %v81 = vpack.c.bf16 %v63, %v61
  %v82 = vpack.c.bf16 %v64, %v62
  %v83 = vpack.c.bf16 %v67, %v65
  %v84 = vpack.c.bf16 %v68, %v66
  %v85 = vld [vmem:[%s2] sm:$0xff]
  %v86 = vld [vmem:[%s2 + $0x8] sm:$0xff]
  %v87 = vld [vmem:[%s2 + $0x10] sm:$0xff]
  %v88 = vld [vmem:[%s2 + $0x18] sm:$0xff]
  %v89 = vld [vmem:[%s2 + $0x20] sm:$0xff]
  %v90 = vld [vmem:[%s2 + $0x28] sm:$0xff]
  %v91 = vld [vmem:[%s2 + $0x30] sm:$0xff]
  %v92 = vld [vmem:[%s2 + $0x38] sm:$0xff]
  %v93 = vld [vmem:[%s2 + $0x40] sm:$0xff]
  %v94 = vld [vmem:[%s2 + $0x48] sm:$0xff]
  %v95 = vld [vmem:[%s2 + $0x50] sm:$0xff]
  %v96 = vld [vmem:[%s2 + $0x58] sm:$0xff]
  %v97 = vld [vmem:[%s2 + $0x60] sm:$0xff]
  %v98 = vld [vmem:[%s2 + $0x68] sm:$0xff]
  %v99 = vld [vmem:[%s2 + $0x70] sm:$0xff]
  %v100 = vld [vmem:[%s2 + $0x78] sm:$0xff]
  %v101 = vld [vmem:[%s2 + $0x80] sm:$0xff]
  %v102 = vld [vmem:[%s2 + $0x88] sm:$0xff]
  %v103 = vld [vmem:[%s2 + $0x90] sm:$0xff]
  %v104 = vld [vmem:[%s2 + $0x98] sm:$0xff]
  %v105 = vld [vmem:[%s2 + $0xa0] sm:$0xff]
  %v106 = vld [vmem:[%s2 + $0xa8] sm:$0xff]
  %v107 = vld [vmem:[%s2 + $0xb0] sm:$0xff]
  %v108 = vld [vmem:[%s2 + $0xb8] sm:$0xff]
  %v109 = vld [vmem:[%s2 + $0xc0] sm:$0xff]
  %v110 = vld [vmem:[%s2 + $0xc8] sm:$0xff]
  %v111 = vld [vmem:[%s2 + $0xd0] sm:$0xff]
  %v112 = vld [vmem:[%s2 + $0xd8] sm:$0xff]
  %v113 = vld [vmem:[%s2 + $0xe0] sm:$0xff]
  %v114 = vld [vmem:[%s2 + $0xe8] sm:$0xff]
  %v115 = vld [vmem:[%s2 + $0xf0] sm:$0xff]
  %v116 = vld [vmem:[%s2 + $0xf8] sm:$0xff]
  %v117 = vld [vmem:[%s2 + $0x100] sm:$0xff]
  %v118 = vld [vmem:[%s2 + $0x108] sm:$0xff]
  %v119 = vld [vmem:[%s2 + $0x110] sm:$0xff]
  %v120 = vld [vmem:[%s2 + $0x118] sm:$0xff]
  %v121 = vld [vmem:[%s2 + $0x120] sm:$0xff]
  %v122 = vld [vmem:[%s2 + $0x128] sm:$0xff]
  %v123 = vld [vmem:[%s2 + $0x130] sm:$0xff]
  %v124 = vld [vmem:[%s2 + $0x138] sm:$0xff]
  %v125 = vld [vmem:[%s2 + $0x140] sm:$0xff]
  %v126 = vld [vmem:[%s2 + $0x148] sm:$0xff]
  %v127 = vld [vmem:[%s2 + $0x150] sm:$0xff]
  %v128 = vld [vmem:[%s2 + $0x158] sm:$0xff]
  %v129 = vld [vmem:[%s2 + $0x160] sm:$0xff]
  %v130 = vld [vmem:[%s2 + $0x168] sm:$0xff]
  %v131 = vld [vmem:[%s2 + $0x170] sm:$0xff]
  %v132 = vld [vmem:[%s2 + $0x178] sm:$0xff]
  %v133 = vld [vmem:[%s2 + $0x180] sm:$0xff]
  %v134 = vld [vmem:[%s2 + $0x188] sm:$0xff]
  %v135 = vld [vmem:[%s2 + $0x190] sm:$0xff]
  %v136 = vld [vmem:[%s2 + $0x198] sm:$0xff]
  %v137 = vld [vmem:[%s2 + $0x1a0] sm:$0xff]
  %v138 = vld [vmem:[%s2 + $0x1a8] sm:$0xff]
  %v139 = vld [vmem:[%s2 + $0x1b0] sm:$0xff]
  %v140 = vld [vmem:[%s2 + $0x1b8] sm:$0xff]
  %v141 = vld [vmem:[%s2 + $0x1c0] sm:$0xff]
  %v142 = vld [vmem:[%s2 + $0x1c8] sm:$0xff]
  %v143 = vld [vmem:[%s2 + $0x1d0] sm:$0xff]
  %v144 = vld [vmem:[%s2 + $0x1d8] sm:$0xff]
  %v145 = vld [vmem:[%s2 + $0x1e0] sm:$0xff]
  %v146 = vld [vmem:[%s2 + $0x1e8] sm:$0xff]
  %v147 = vld [vmem:[%s2 + $0x1f0] sm:$0xff]
  %v148 = vld [vmem:[%s2 + $0x1f8] sm:$0xff]
  %v149 = vlaneseq
  %v150 = vand.u32 %v149, 127
  %v151 = vld [vmem:[%s1] sm:$0xff]
  %v152 = vld [vmem:[%s1 + $0x8] sm:$0xff]
  %v153 = vld [vmem:[%s1 + $0x10] sm:$0xff]
  %v154 = vld [vmem:[%s1 + $0x18] sm:$0xff]
  %v155 = vld [vmem:[%s1 + $0x20] sm:$0xff]
  %v156 = vld [vmem:[%s1 + $0x28] sm:$0xff]
  %v157 = vld [vmem:[%s1 + $0x30] sm:$0xff]
  %v158 = vld [vmem:[%s1 + $0x38] sm:$0xff]
  %v159 = vld [vmem:[%s1 + $0x40] sm:$0xff]
  %v160 = vld [vmem:[%s1 + $0x48] sm:$0xff]
  %v161 = vld [vmem:[%s1 + $0x50] sm:$0xff]
  %v162 = vld [vmem:[%s1 + $0x58] sm:$0xff]
  %v163 = vld [vmem:[%s1 + $0x60] sm:$0xff]
  %v164 = vld [vmem:[%s1 + $0x68] sm:$0xff]
  %v165 = vld [vmem:[%s1 + $0x70] sm:$0xff]
  %v166 = vld [vmem:[%s1 + $0x78] sm:$0xff]
  %167 = vset.pattern.permute.xlu0 0
  %168 = vperm.xlu0 %167, %v151
  %v169 = vpop.permute.xlu0 %168
  %170 = vset.pattern.permute.xlu0 0
  %171 = vperm.xlu0 %170, %v152
  %v172 = vpop.permute.xlu0 %171
  %173 = vset.pattern.permute.xlu0 0
  %174 = vperm.xlu0 %173, %v153
  %v175 = vpop.permute.xlu0 %174
  %176 = vset.pattern.permute.xlu0 0
  %177 = vperm.xlu0 %176, %v154
  %v178 = vpop.permute.xlu0 %177
  %179 = vset.pattern.permute.xlu0 0
  %180 = vperm.xlu0 %179, %v155
  %v181 = vpop.permute.xlu0 %180
  %182 = vset.pattern.permute.xlu0 0
  %183 = vperm.xlu0 %182, %v156
  %v184 = vpop.permute.xlu0 %183
  %185 = vset.pattern.permute.xlu0 0
  %186 = vperm.xlu0 %185, %v157
  %v187 = vpop.permute.xlu0 %186
  %188 = vset.pattern.permute.xlu0 0
  %189 = vperm.xlu0 %188, %v158
  %v190 = vpop.permute.xlu0 %189
  %191 = vset.pattern.permute.xlu0 0
  %192 = vperm.xlu0 %191, %v159
  %v193 = vpop.permute.xlu0 %192
  %194 = vset.pattern.permute.xlu0 0
  %195 = vperm.xlu0 %194, %v160
  %v196 = vpop.permute.xlu0 %195
  %197 = vset.pattern.permute.xlu0 0
  %198 = vperm.xlu0 %197, %v161
  %v199 = vpop.permute.xlu0 %198
  %200 = vset.pattern.permute.xlu0 0
  %201 = vperm.xlu0 %200, %v162
  %v202 = vpop.permute.xlu0 %201
  %203 = vset.pattern.permute.xlu0 0
  %204 = vperm.xlu0 %203, %v163
  %v205 = vpop.permute.xlu0 %204
  %206 = vset.pattern.permute.xlu0 0
  %207 = vperm.xlu0 %206, %v164
  %v208 = vpop.permute.xlu0 %207
  %209 = vset.pattern.permute.xlu0 0
  %210 = vperm.xlu0 %209, %v165
  %v211 = vpop.permute.xlu0 %210
  %212 = vset.pattern.permute.xlu0 0
  %213 = vperm.xlu0 %212, %v166
  %v214 = vpop.permute.xlu0 %213
  %vm215 = vcmp.eq.s32.totalorder %v150, %v169
  %vm216 = vcmp.eq.s32.totalorder %v150, %v172
  %vm217 = vcmp.eq.s32.totalorder %v150, %v175
  %vm218 = vcmp.eq.s32.totalorder %v150, %v178
  %vm219 = vcmp.eq.s32.totalorder %v150, %v181
  %vm220 = vcmp.eq.s32.totalorder %v150, %v184
  %vm221 = vcmp.eq.s32.totalorder %v150, %v187
  %vm222 = vcmp.eq.s32.totalorder %v150, %v190
  %vm223 = vcmp.eq.s32.totalorder %v150, %v193
  %vm224 = vcmp.eq.s32.totalorder %v150, %v196
  %vm225 = vcmp.eq.s32.totalorder %v150, %v199
  %vm226 = vcmp.eq.s32.totalorder %v150, %v202
  %vm227 = vcmp.eq.s32.totalorder %v150, %v205
  %vm228 = vcmp.eq.s32.totalorder %v150, %v208
  %vm229 = vcmp.eq.s32.totalorder %v150, %v211
  %vm230 = vcmp.eq.s32.totalorder %v150, %v214
  %v231 = vsel %vm215, 1, 0
  %v232 = vsel %vm216, 1, 0
  %v233 = vsel %vm217, 1, 0
  %v234 = vsel %vm218, 1, 0
  %v235 = vsel %vm219, 1, 0
  %v236 = vsel %vm220, 1, 0
  %v237 = vsel %vm221, 1, 0
  %v238 = vsel %vm222, 1, 0
  %v239 = vsel %vm223, 1, 0
  %v240 = vsel %vm224, 1, 0
  %v241 = vsel %vm225, 1, 0
  %v242 = vsel %vm226, 1, 0
  %v243 = vsel %vm227, 1, 0
  %v244 = vsel %vm228, 1, 0
  %v245 = vsel %vm229, 1, 0
  %v246 = vsel %vm230, 1, 0
  %v247 = vcvt.s32.f32 %v231
  %v248 = vcvt.s32.f32 %v232
  %v249 = vcvt.s32.f32 %v233
  %v250 = vcvt.s32.f32 %v234
  %v251 = vcvt.s32.f32 %v235
  %v252 = vcvt.s32.f32 %v236
  %v253 = vcvt.s32.f32 %v237
  %v254 = vcvt.s32.f32 %v238
  %v255 = vcvt.s32.f32 %v239
  %v256 = vcvt.s32.f32 %v240
  %v257 = vcvt.s32.f32 %v241
  %v258 = vcvt.s32.f32 %v242
  %v259 = vcvt.s32.f32 %v243
  %v260 = vcvt.s32.f32 %v244
  %v261 = vcvt.s32.f32 %v245
  %v262 = vcvt.s32.f32 %v246
  %v263 = vld [vmem:[%s3] sm:$0xff]
  %v264 = vld [vmem:[%s3 + $0x8] sm:$0xff]
  %v265 = vld [vmem:[%s3 + $0x10] sm:$0xff]
  %v266 = vld [vmem:[%s3 + $0x18] sm:$0xff]
  %v267 = vld [vmem:[%s3 + $0x20] sm:$0xff]
  %v268 = vld [vmem:[%s3 + $0x28] sm:$0xff]
  %v269 = vld [vmem:[%s3 + $0x30] sm:$0xff]
  %v270 = vld [vmem:[%s3 + $0x38] sm:$0xff]
  %v271 = vld [vmem:[%s3 + $0x40] sm:$0xff]
  %v272 = vld [vmem:[%s3 + $0x48] sm:$0xff]
  %v273 = vld [vmem:[%s3 + $0x50] sm:$0xff]
  %v274 = vld [vmem:[%s3 + $0x58] sm:$0xff]
  %v275 = vld [vmem:[%s3 + $0x60] sm:$0xff]
  %v276 = vld [vmem:[%s3 + $0x68] sm:$0xff]
  %v277 = vld [vmem:[%s3 + $0x70] sm:$0xff]
  %v278 = vld [vmem:[%s3 + $0x78] sm:$0xff]
  %v279 = vld [vmem:[%s3 + $0x80] sm:$0xff]
  %v280 = vld [vmem:[%s3 + $0x88] sm:$0xff]
  %v281 = vld [vmem:[%s3 + $0x90] sm:$0xff]
  %v282 = vld [vmem:[%s3 + $0x98] sm:$0xff]
  %v283 = vld [vmem:[%s3 + $0xa0] sm:$0xff]
  %v284 = vld [vmem:[%s3 + $0xa8] sm:$0xff]
  %v285 = vld [vmem:[%s3 + $0xb0] sm:$0xff]
  %v286 = vld [vmem:[%s3 + $0xb8] sm:$0xff]
  %v287 = vld [vmem:[%s3 + $0xc0] sm:$0xff]
  %v288 = vld [vmem:[%s3 + $0xc8] sm:$0xff]
  %v289 = vld [vmem:[%s3 + $0xd0] sm:$0xff]
  %v290 = vld [vmem:[%s3 + $0xd8] sm:$0xff]
  %v291 = vld [vmem:[%s3 + $0xe0] sm:$0xff]
  %v292 = vld [vmem:[%s3 + $0xe8] sm:$0xff]
  %v293 = vld [vmem:[%s3 + $0xf0] sm:$0xff]
  %v294 = vld [vmem:[%s3 + $0xf8] sm:$0xff]
  %v295 = vld [vmem:[%s3 + $0x100] sm:$0xff]
  %v296 = vld [vmem:[%s3 + $0x108] sm:$0xff]
  %v297 = vld [vmem:[%s3 + $0x110] sm:$0xff]
  %v298 = vld [vmem:[%s3 + $0x118] sm:$0xff]
  %v299 = vld [vmem:[%s3 + $0x120] sm:$0xff]
  %v300 = vld [vmem:[%s3 + $0x128] sm:$0xff]
  %v301 = vld [vmem:[%s3 + $0x130] sm:$0xff]
  %v302 = vld [vmem:[%s3 + $0x138] sm:$0xff]
  %v303 = vld [vmem:[%s3 + $0x140] sm:$0xff]
  %v304 = vld [vmem:[%s3 + $0x148] sm:$0xff]
  %v305 = vld [vmem:[%s3 + $0x150] sm:$0xff]
  %v306 = vld [vmem:[%s3 + $0x158] sm:$0xff]
  %v307 = vld [vmem:[%s3 + $0x160] sm:$0xff]
  %v308 = vld [vmem:[%s3 + $0x168] sm:$0xff]
  %v309 = vld [vmem:[%s3 + $0x170] sm:$0xff]
  %v310 = vld [vmem:[%s3 + $0x178] sm:$0xff]
  %v311 = vld [vmem:[%s3 + $0x180] sm:$0xff]
  %v312 = vld [vmem:[%s3 + $0x188] sm:$0xff]
  %v313 = vld [vmem:[%s3 + $0x190] sm:$0xff]
  %v314 = vld [vmem:[%s3 + $0x198] sm:$0xff]
  %v315 = vld [vmem:[%s3 + $0x1a0] sm:$0xff]
  %v316 = vld [vmem:[%s3 + $0x1a8] sm:$0xff]
  %v317 = vld [vmem:[%s3 + $0x1b0] sm:$0xff]
  %v318 = vld [vmem:[%s3 + $0x1b8] sm:$0xff]
  %v319 = vld [vmem:[%s3 + $0x1c0] sm:$0xff]
  %v320 = vld [vmem:[%s3 + $0x1c8] sm:$0xff]
  %v321 = vld [vmem:[%s3 + $0x1d0] sm:$0xff]
  %v322 = vld [vmem:[%s3 + $0x1d8] sm:$0xff]
  %v323 = vld [vmem:[%s3 + $0x1e0] sm:$0xff]
  %v324 = vld [vmem:[%s3 + $0x1e8] sm:$0xff]
  %v325 = vld [vmem:[%s3 + $0x1f0] sm:$0xff]
  %v326 = vld [vmem:[%s3 + $0x1f8] sm:$0xff]
  %327 = vmatpush.msra.mxu0 %v323
  %328 = vmatpush.msra.mxu0 %v319
  %329 = vmatpush.msra.mxu0 %v315
  %330 = vmatpush.msra.mxu0 %v311
  %331 = vmatpush.msra.mxu0 %v307
  %332 = vmatpush.msra.mxu0 %v303
  %333 = vmatpush.msra.mxu0 %v299
  %334 = vmatpush.msra.mxu0 %v295
  %335 = vmatpush.msra.mxu0 %v291
  %336 = vmatpush.msra.mxu0 %v287
  %337 = vmatpush.msra.mxu0 %v283
  %338 = vmatpush.msra.mxu0 %v279
  %339 = vmatpush.msra.mxu0 %v275
  %340 = vmatpush.msra.mxu0 %v271
  %341 = vmatpush.msra.mxu0 %v267
  %342 = vmatpush.msra.mxu0 %v263
  %343 = vmatmul.f32.gmra.mxu0 %v247
  %v344 = vpop.f32.mrf.mxu0
  %v345 = vadd.f32 0.0, %v344
  %346 = vmatmul.f32.gmra.mxu0 %v248
  %v347 = vpop.f32.mrf.mxu0
  %v348 = vadd.f32 0.0, %v347
  %349 = vmatmul.f32.gmra.mxu0 %v249
  %v350 = vpop.f32.mrf.mxu0
  %v351 = vadd.f32 0.0, %v350
  %352 = vmatmul.f32.gmra.mxu0 %v250
  %v353 = vpop.f32.mrf.mxu0
  %v354 = vadd.f32 0.0, %v353
  %355 = vmatmul.f32.gmra.mxu0 %v251
  %v356 = vpop.f32.mrf.mxu0
  %v357 = vadd.f32 0.0, %v356
  %358 = vmatmul.f32.gmra.mxu0 %v252
  %v359 = vpop.f32.mrf.mxu0
  %v360 = vadd.f32 0.0, %v359
  %361 = vmatmul.f32.gmra.mxu0 %v253
  %v362 = vpop.f32.mrf.mxu0
  %v363 = vadd.f32 0.0, %v362
  %364 = vmatmul.f32.gmra.mxu0 %v254
  %v365 = vpop.f32.mrf.mxu0
  %v366 = vadd.f32 0.0, %v365
  %367 = vmatmul.f32.gmra.mxu0 %v255
  %v368 = vpop.f32.mrf.mxu0
  %v369 = vadd.f32 0.0, %v368
  %370 = vmatmul.f32.gmra.mxu0 %v256
  %v371 = vpop.f32.mrf.mxu0
  %v372 = vadd.f32 0.0, %v371
  %373 = vmatmul.f32.gmra.mxu0 %v257
  %v374 = vpop.f32.mrf.mxu0
  %v375 = vadd.f32 0.0, %v374
  %376 = vmatmul.f32.gmra.mxu0 %v258
  %v377 = vpop.f32.mrf.mxu0
  %v378 = vadd.f32 0.0, %v377
  %379 = vmatmul.f32.gmra.mxu0 %v259
  %v380 = vpop.f32.mrf.mxu0
  %v381 = vadd.f32 0.0, %v380
  %382 = vmatmul.f32.gmra.mxu0 %v260
  %v383 = vpop.f32.mrf.mxu0
  %v384 = vadd.f32 0.0, %v383
  %385 = vmatmul.f32.gmra.mxu0 %v261
  %v386 = vpop.f32.mrf.mxu0
  %v387 = vadd.f32 0.0, %v386
  %388 = vmatmul.f32.gmra.mxu0 %v262
  %v389 = vpop.f32.mrf.mxu0
  %v390 = vadd.f32 0.0, %v389
  %391 = vdwg.mxu0
  %392 = vmatpush.msra.mxu0 %v324
  %393 = vmatpush.msra.mxu0 %v320
  %394 = vmatpush.msra.mxu0 %v316
  %395 = vmatpush.msra.mxu0 %v312
  %396 = vmatpush.msra.mxu0 %v308
  %397 = vmatpush.msra.mxu0 %v304
  %398 = vmatpush.msra.mxu0 %v300
  %399 = vmatpush.msra.mxu0 %v296
  %400 = vmatpush.msra.mxu0 %v292
  %401 = vmatpush.msra.mxu0 %v288
  %402 = vmatpush.msra.mxu0 %v284
  %403 = vmatpush.msra.mxu0 %v280
  %404 = vmatpush.msra.mxu0 %v276
  %405 = vmatpush.msra.mxu0 %v272
  %406 = vmatpush.msra.mxu0 %v268
  %407 = vmatpush.msra.mxu0 %v264
  %408 = vmatmul.f32.gmra.mxu0 %v247
  %v409 = vpop.f32.mrf.mxu0
  %v410 = vadd.f32 0.0, %v409
  %411 = vmatmul.f32.gmra.mxu0 %v248
  %v412 = vpop.f32.mrf.mxu0
  %v413 = vadd.f32 0.0, %v412
  %414 = vmatmul.f32.gmra.mxu0 %v249
  %v415 = vpop.f32.mrf.mxu0
  %v416 = vadd.f32 0.0, %v415
  %417 = vmatmul.f32.gmra.mxu0 %v250
  %v418 = vpop.f32.mrf.mxu0
  %v419 = vadd.f32 0.0, %v418
  %420 = vmatmul.f32.gmra.mxu0 %v251
  %v421 = vpop.f32.mrf.mxu0
  %v422 = vadd.f32 0.0, %v421
  %423 = vmatmul.f32.gmra.mxu0 %v252
  %v424 = vpop.f32.mrf.mxu0
  %v425 = vadd.f32 0.0, %v424
  %426 = vmatmul.f32.gmra.mxu0 %v253
  %v427 = vpop.f32.mrf.mxu0
  %v428 = vadd.f32 0.0, %v427
  %429 = vmatmul.f32.gmra.mxu0 %v254
  %v430 = vpop.f32.mrf.mxu0
  %v431 = vadd.f32 0.0, %v430
  %432 = vmatmul.f32.gmra.mxu0 %v255
  %v433 = vpop.f32.mrf.mxu0
  %v434 = vadd.f32 0.0, %v433
  %435 = vmatmul.f32.gmra.mxu0 %v256
  %v436 = vpop.f32.mrf.mxu0
  %v437 = vadd.f32 0.0, %v436
  %438 = vmatmul.f32.gmra.mxu0 %v257
  %v439 = vpop.f32.mrf.mxu0
  %v440 = vadd.f32 0.0, %v439
  %441 = vmatmul.f32.gmra.mxu0 %v258
  %v442 = vpop.f32.mrf.mxu0
  %v443 = vadd.f32 0.0, %v442
  %444 = vmatmul.f32.gmra.mxu0 %v259
  %v445 = vpop.f32.mrf.mxu0
  %v446 = vadd.f32 0.0, %v445
  %447 = vmatmul.f32.gmra.mxu0 %v260
  %v448 = vpop.f32.mrf.mxu0
  %v449 = vadd.f32 0.0, %v448
  %450 = vmatmul.f32.gmra.mxu0 %v261
  %v451 = vpop.f32.mrf.mxu0
  %v452 = vadd.f32 0.0, %v451
  %453 = vmatmul.f32.gmra.mxu0 %v262
  %v454 = vpop.f32.mrf.mxu0
  %v455 = vadd.f32 0.0, %v454
  %456 = vdwg.mxu0
  %457 = vmatpush.msra.mxu0 %v325
  %458 = vmatpush.msra.mxu0 %v321
  %459 = vmatpush.msra.mxu0 %v317
  %460 = vmatpush.msra.mxu0 %v313
  %461 = vmatpush.msra.mxu0 %v309
  %462 = vmatpush.msra.mxu0 %v305
  %463 = vmatpush.msra.mxu0 %v301
  %464 = vmatpush.msra.mxu0 %v297
  %465 = vmatpush.msra.mxu0 %v293
  %466 = vmatpush.msra.mxu0 %v289
  %467 = vmatpush.msra.mxu0 %v285
  %468 = vmatpush.msra.mxu0 %v281
  %469 = vmatpush.msra.mxu0 %v277
  %470 = vmatpush.msra.mxu0 %v273
  %471 = vmatpush.msra.mxu0 %v269
  %472 = vmatpush.msra.mxu0 %v265
  %473 = vmatmul.f32.gmra.mxu0 %v247
  %v474 = vpop.f32.mrf.mxu0
  %v475 = vadd.f32 0.0, %v474
  %476 = vmatmul.f32.gmra.mxu0 %v248
  %v477 = vpop.f32.mrf.mxu0
  %v478 = vadd.f32 0.0, %v477
  %479 = vmatmul.f32.gmra.mxu0 %v249
  %v480 = vpop.f32.mrf.mxu0
  %v481 = vadd.f32 0.0, %v480
  %482 = vmatmul.f32.gmra.mxu0 %v250
  %v483 = vpop.f32.mrf.mxu0
  %v484 = vadd.f32 0.0, %v483
  %485 = vmatmul.f32.gmra.mxu0 %v251
  %v486 = vpop.f32.mrf.mxu0
  %v487 = vadd.f32 0.0, %v486
  %488 = vmatmul.f32.gmra.mxu0 %v252
  %v489 = vpop.f32.mrf.mxu0
  %v490 = vadd.f32 0.0, %v489
  %491 = vmatmul.f32.gmra.mxu0 %v253
  %v492 = vpop.f32.mrf.mxu0
  %v493 = vadd.f32 0.0, %v492
  %494 = vmatmul.f32.gmra.mxu0 %v254
  %v495 = vpop.f32.mrf.mxu0
  %v496 = vadd.f32 0.0, %v495
  %497 = vmatmul.f32.gmra.mxu0 %v255
  %v498 = vpop.f32.mrf.mxu0
  %v499 = vadd.f32 0.0, %v498
  %500 = vmatmul.f32.gmra.mxu0 %v256
  %v501 = vpop.f32.mrf.mxu0
  %v502 = vadd.f32 0.0, %v501
  %503 = vmatmul.f32.gmra.mxu0 %v257
  %v504 = vpop.f32.mrf.mxu0
  %v505 = vadd.f32 0.0, %v504
  %506 = vmatmul.f32.gmra.mxu0 %v258
  %v507 = vpop.f32.mrf.mxu0
  %v508 = vadd.f32 0.0, %v507
  %509 = vmatmul.f32.gmra.mxu0 %v259
  %v510 = vpop.f32.mrf.mxu0
  %v511 = vadd.f32 0.0, %v510
  %512 = vmatmul.f32.gmra.mxu0 %v260
  %v513 = vpop.f32.mrf.mxu0
  %v514 = vadd.f32 0.0, %v513
  %515 = vmatmul.f32.gmra.mxu0 %v261
  %v516 = vpop.f32.mrf.mxu0
  %v517 = vadd.f32 0.0, %v516
  %518 = vmatmul.f32.gmra.mxu0 %v262
  %v519 = vpop.f32.mrf.mxu0
  %v520 = vadd.f32 0.0, %v519
  %521 = vdwg.mxu0
  %522 = vmatpush.msra.mxu0 %v326
  %523 = vmatpush.msra.mxu0 %v322
  %524 = vmatpush.msra.mxu0 %v318
  %525 = vmatpush.msra.mxu0 %v314
  %526 = vmatpush.msra.mxu0 %v310
  %527 = vmatpush.msra.mxu0 %v306
  %528 = vmatpush.msra.mxu0 %v302
  %529 = vmatpush.msra.mxu0 %v298
  %530 = vmatpush.msra.mxu0 %v294
  %531 = vmatpush.msra.mxu0 %v290
  %532 = vmatpush.msra.mxu0 %v286
  %533 = vmatpush.msra.mxu0 %v282
  %534 = vmatpush.msra.mxu0 %v278
  %535 = vmatpush.msra.mxu0 %v274
  %536 = vmatpush.msra.mxu0 %v270
  %537 = vmatpush.msra.mxu0 %v266
  %538 = vmatmul.f32.gmra.mxu0 %v247
  %v539 = vpop.f32.mrf.mxu0
  %v540 = vadd.f32 0.0, %v539
  %541 = vmatmul.f32.gmra.mxu0 %v248
  %v542 = vpop.f32.mrf.mxu0
  %v543 = vadd.f32 0.0, %v542
  %544 = vmatmul.f32.gmra.mxu0 %v249
  %v545 = vpop.f32.mrf.mxu0
  %v546 = vadd.f32 0.0, %v545
  %547 = vmatmul.f32.gmra.mxu0 %v250
  %v548 = vpop.f32.mrf.mxu0
  %v549 = vadd.f32 0.0, %v548
  %550 = vmatmul.f32.gmra.mxu0 %v251
  %v551 = vpop.f32.mrf.mxu0
  %v552 = vadd.f32 0.0, %v551
  %553 = vmatmul.f32.gmra.mxu0 %v252
  %v554 = vpop.f32.mrf.mxu0
  %v555 = vadd.f32 0.0, %v554
  %556 = vmatmul.f32.gmra.mxu0 %v253
  %v557 = vpop.f32.mrf.mxu0
  %v558 = vadd.f32 0.0, %v557
  %559 = vmatmul.f32.gmra.mxu0 %v254
  %v560 = vpop.f32.mrf.mxu0
  %v561 = vadd.f32 0.0, %v560
  %562 = vmatmul.f32.gmra.mxu0 %v255
  %v563 = vpop.f32.mrf.mxu0
  %v564 = vadd.f32 0.0, %v563
  %565 = vmatmul.f32.gmra.mxu0 %v256
  %v566 = vpop.f32.mrf.mxu0
  %v567 = vadd.f32 0.0, %v566
  %568 = vmatmul.f32.gmra.mxu0 %v257
  %v569 = vpop.f32.mrf.mxu0
  %v570 = vadd.f32 0.0, %v569
  %571 = vmatmul.f32.gmra.mxu0 %v258
  %v572 = vpop.f32.mrf.mxu0
  %v573 = vadd.f32 0.0, %v572
  %574 = vmatmul.f32.gmra.mxu0 %v259
  %v575 = vpop.f32.mrf.mxu0
  %v576 = vadd.f32 0.0, %v575
  %577 = vmatmul.f32.gmra.mxu0 %v260
  %v578 = vpop.f32.mrf.mxu0
  %v579 = vadd.f32 0.0, %v578
  %580 = vmatmul.f32.gmra.mxu0 %v261
  %v581 = vpop.f32.mrf.mxu0
  %v582 = vadd.f32 0.0, %v581
  %583 = vmatmul.f32.gmra.mxu0 %v262
  %v584 = vpop.f32.mrf.mxu0
  %v585 = vadd.f32 0.0, %v584
  %586 = vdwg.mxu0
  %v651 = vunpack.c.l.b16 %v85
  %v652 = vunpack.c.h.b16 %v85
  %v653 = vunpack.c.l.b16 %v86
  %v654 = vunpack.c.h.b16 %v86
  %v655 = vunpack.c.l.b16 %v87
  %v656 = vunpack.c.h.b16 %v87
  %v657 = vunpack.c.l.b16 %v88
  %v658 = vunpack.c.h.b16 %v88
  %v659 = vunpack.c.l.b16 %v89
  %v660 = vunpack.c.h.b16 %v89
  %v661 = vunpack.c.l.b16 %v90
  %v662 = vunpack.c.h.b16 %v90
  %v663 = vunpack.c.l.b16 %v91
  %v664 = vunpack.c.h.b16 %v91
  %v665 = vunpack.c.l.b16 %v92
  %v666 = vunpack.c.h.b16 %v92
  %v667 = vunpack.c.l.b16 %v93
  %v668 = vunpack.c.h.b16 %v93
  %v669 = vunpack.c.l.b16 %v94
  %v670 = vunpack.c.h.b16 %v94
  %v671 = vunpack.c.l.b16 %v95
  %v672 = vunpack.c.h.b16 %v95
  %v673 = vunpack.c.l.b16 %v96
  %v674 = vunpack.c.h.b16 %v96
  %v675 = vunpack.c.l.b16 %v97
  %v676 = vunpack.c.h.b16 %v97
  %v677 = vunpack.c.l.b16 %v98
  %v678 = vunpack.c.h.b16 %v98
  %v679 = vunpack.c.l.b16 %v99
  %v680 = vunpack.c.h.b16 %v99
  %v681 = vunpack.c.l.b16 %v100
  %v682 = vunpack.c.h.b16 %v100
  %v683 = vunpack.c.l.b16 %v101
  %v684 = vunpack.c.h.b16 %v101
  %v685 = vunpack.c.l.b16 %v102
  %v686 = vunpack.c.h.b16 %v102
  %v687 = vunpack.c.l.b16 %v103
  %v688 = vunpack.c.h.b16 %v103
  %v689 = vunpack.c.l.b16 %v104
  %v690 = vunpack.c.h.b16 %v104
  %v691 = vunpack.c.l.b16 %v105
  %v692 = vunpack.c.h.b16 %v105
  %v693 = vunpack.c.l.b16 %v106
  %v694 = vunpack.c.h.b16 %v106
  %v695 = vunpack.c.l.b16 %v107
  %v696 = vunpack.c.h.b16 %v107
  %v697 = vunpack.c.l.b16 %v108
  %v698 = vunpack.c.h.b16 %v108
  %v699 = vunpack.c.l.b16 %v109
  %v700 = vunpack.c.h.b16 %v109
  %v701 = vunpack.c.l.b16 %v110
  %v702 = vunpack.c.h.b16 %v110
  %v703 = vunpack.c.l.b16 %v111
  %v704 = vunpack.c.h.b16 %v111
  %v705 = vunpack.c.l.b16 %v112
  %v706 = vunpack.c.h.b16 %v112
  %v707 = vunpack.c.l.b16 %v113
  %v708 = vunpack.c.h.b16 %v113
  %v709 = vunpack.c.l.b16 %v114
  %v710 = vunpack.c.h.b16 %v114
  %v711 = vunpack.c.l.b16 %v115
  %v712 = vunpack.c.h.b16 %v115
  %v713 = vunpack.c.l.b16 %v116
  %v714 = vunpack.c.h.b16 %v116
  %v715 = vunpack.c.l.b16 %v117
  %v716 = vunpack.c.h.b16 %v117
  %v717 = vunpack.c.l.b16 %v118
  %v718 = vunpack.c.h.b16 %v118
  %v719 = vunpack.c.l.b16 %v119
  %v720 = vunpack.c.h.b16 %v119
  %v721 = vunpack.c.l.b16 %v120
  %v722 = vunpack.c.h.b16 %v120
  %v723 = vunpack.c.l.b16 %v121
  %v724 = vunpack.c.h.b16 %v121
  %v725 = vunpack.c.l.b16 %v122
  %v726 = vunpack.c.h.b16 %v122
  %v727 = vunpack.c.l.b16 %v123
  %v728 = vunpack.c.h.b16 %v123
  %v729 = vunpack.c.l.b16 %v124
  %v730 = vunpack.c.h.b16 %v124
  %v731 = vunpack.c.l.b16 %v125
  %v732 = vunpack.c.h.b16 %v125
  %v733 = vunpack.c.l.b16 %v126
  %v734 = vunpack.c.h.b16 %v126
  %v735 = vunpack.c.l.b16 %v127
  %v736 = vunpack.c.h.b16 %v127
  %v737 = vunpack.c.l.b16 %v128
  %v738 = vunpack.c.h.b16 %v128
  %v739 = vunpack.c.l.b16 %v129
  %v740 = vunpack.c.h.b16 %v129
  %v741 = vunpack.c.l.b16 %v130
  %v742 = vunpack.c.h.b16 %v130
  %v743 = vunpack.c.l.b16 %v131
  %v744 = vunpack.c.h.b16 %v131
  %v745 = vunpack.c.l.b16 %v132
  %v746 = vunpack.c.h.b16 %v132
  %v747 = vunpack.c.l.b16 %v133
  %v748 = vunpack.c.h.b16 %v133
  %v749 = vunpack.c.l.b16 %v134
  %v750 = vunpack.c.h.b16 %v134
  %v751 = vunpack.c.l.b16 %v135
  %v752 = vunpack.c.h.b16 %v135
  %v753 = vunpack.c.l.b16 %v136
  %v754 = vunpack.c.h.b16 %v136
  %v755 = vunpack.c.l.b16 %v137
  %v756 = vunpack.c.h.b16 %v137
  %v757 = vunpack.c.l.b16 %v138
  %v758 = vunpack.c.h.b16 %v138
  %v759 = vunpack.c.l.b16 %v139
  %v760 = vunpack.c.h.b16 %v139
  %v761 = vunpack.c.l.b16 %v140
  %v762 = vunpack.c.h.b16 %v140
  %v763 = vunpack.c.l.b16 %v141
  %v764 = vunpack.c.h.b16 %v141
  %v765 = vunpack.c.l.b16 %v142
  %v766 = vunpack.c.h.b16 %v142
  %v767 = vunpack.c.l.b16 %v143
  %v768 = vunpack.c.h.b16 %v143
  %v769 = vunpack.c.l.b16 %v144
  %v770 = vunpack.c.h.b16 %v144
  %v771 = vunpack.c.l.b16 %v145
  %v772 = vunpack.c.h.b16 %v145
  %v773 = vunpack.c.l.b16 %v146
  %v774 = vunpack.c.h.b16 %v146
  %v775 = vunpack.c.l.b16 %v147
  %v776 = vunpack.c.h.b16 %v147
  %v777 = vunpack.c.l.b16 %v148
  %v778 = vunpack.c.h.b16 %v148
  %v779 = vpack.c.b16 %v655, %v651
  %v780 = vpack.c.b16 %v656, %v652
  %v781 = vpack.c.b16 %v657, %v653
  %v782 = vpack.c.b16 %v658, %v654
  %v783 = vpack.c.b16 %v663, %v659
  %v784 = vpack.c.b16 %v664, %v660
  %v785 = vpack.c.b16 %v665, %v661
  %v786 = vpack.c.b16 %v666, %v662
  %v787 = vpack.c.b16 %v671, %v667
  %v788 = vpack.c.b16 %v672, %v668
  %v789 = vpack.c.b16 %v673, %v669
  %v790 = vpack.c.b16 %v674, %v670
  %v791 = vpack.c.b16 %v679, %v675
  %v792 = vpack.c.b16 %v680, %v676
  %v793 = vpack.c.b16 %v681, %v677
  %v794 = vpack.c.b16 %v682, %v678
  %v795 = vpack.c.b16 %v687, %v683
  %v796 = vpack.c.b16 %v688, %v684
  %v797 = vpack.c.b16 %v689, %v685
  %v798 = vpack.c.b16 %v690, %v686
  %v799 = vpack.c.b16 %v695, %v691
  %v800 = vpack.c.b16 %v696, %v692
  %v801 = vpack.c.b16 %v697, %v693
  %v802 = vpack.c.b16 %v698, %v694
  %v803 = vpack.c.b16 %v703, %v699
  %v804 = vpack.c.b16 %v704, %v700
  %v805 = vpack.c.b16 %v705, %v701
  %v806 = vpack.c.b16 %v706, %v702
  %v807 = vpack.c.b16 %v711, %v707
  %v808 = vpack.c.b16 %v712, %v708
  %v809 = vpack.c.b16 %v713, %v709
  %v810 = vpack.c.b16 %v714, %v710
  %v811 = vpack.c.b16 %v719, %v715
  %v812 = vpack.c.b16 %v720, %v716
  %v813 = vpack.c.b16 %v721, %v717
  %v814 = vpack.c.b16 %v722, %v718
  %v815 = vpack.c.b16 %v727, %v723
  %v816 = vpack.c.b16 %v728, %v724
  %v817 = vpack.c.b16 %v729, %v725
  %v818 = vpack.c.b16 %v730, %v726
  %v819 = vpack.c.b16 %v735, %v731
  %v820 = vpack.c.b16 %v736, %v732
  %v821 = vpack.c.b16 %v737, %v733
  %v822 = vpack.c.b16 %v738, %v734
  %v823 = vpack.c.b16 %v743, %v739
  %v824 = vpack.c.b16 %v744, %v740
  %v825 = vpack.c.b16 %v745, %v741
  %v826 = vpack.c.b16 %v746, %v742
  %v827 = vpack.c.b16 %v751, %v747
  %v828 = vpack.c.b16 %v752, %v748
  %v829 = vpack.c.b16 %v753, %v749
  %v830 = vpack.c.b16 %v754, %v750
  %v831 = vpack.c.b16 %v759, %v755
  %v832 = vpack.c.b16 %v760, %v756
  %v833 = vpack.c.b16 %v761, %v757
  %v834 = vpack.c.b16 %v762, %v758
  %v835 = vpack.c.b16 %v767, %v763
  %v836 = vpack.c.b16 %v768, %v764
  %v837 = vpack.c.b16 %v769, %v765
  %v838 = vpack.c.b16 %v770, %v766
  %v839 = vpack.c.b16 %v775, %v771
  %v840 = vpack.c.b16 %v776, %v772
  %v841 = vpack.c.b16 %v777, %v773
  %v842 = vpack.c.b16 %v778, %v774
  %907 = vmatpush.bf16.msra.mxu0 %v807
  %908 = vmatpush.bf16.msra.mxu0 %v803
  %909 = vmatpush.bf16.msra.mxu0 %v799
  %910 = vmatpush.bf16.msra.mxu0 %v795
  %911 = vmatpush.bf16.msra.mxu0 %v791
  %912 = vmatpush.bf16.msra.mxu0 %v787
  %913 = vmatpush.bf16.msra.mxu0 %v783
  %914 = vmatpush.bf16.msra.mxu0 %v779
  %915 = vmatmul.bf16.gmra.mxu0 %v69
  %v916 = vpop.f32.mrf.mxu0
  %v917 = vadd.f32 %v345, %v916
  %v918 = vpop.f32.mrf.mxu0
  %v919 = vadd.f32 %v348, %v918
  %920 = vmatmul.bf16.gmra.mxu0 %v71
  %v921 = vpop.f32.mrf.mxu0
  %v922 = vadd.f32 %v351, %v921
  %v923 = vpop.f32.mrf.mxu0
  %v924 = vadd.f32 %v354, %v923
  %925 = vmatmul.bf16.gmra.mxu0 %v73
  %v926 = vpop.f32.mrf.mxu0
  %v927 = vadd.f32 %v357, %v926
  %v928 = vpop.f32.mrf.mxu0
  %v929 = vadd.f32 %v360, %v928
  %930 = vmatmul.bf16.gmra.mxu0 %v75
  %v931 = vpop.f32.mrf.mxu0
  %v932 = vadd.f32 %v363, %v931
  %v933 = vpop.f32.mrf.mxu0
  %v934 = vadd.f32 %v366, %v933
  %935 = vmatmul.bf16.gmra.mxu0 %v77
  %v936 = vpop.f32.mrf.mxu0
  %v937 = vadd.f32 %v369, %v936
  %v938 = vpop.f32.mrf.mxu0
  %v939 = vadd.f32 %v372, %v938
  %940 = vmatmul.bf16.gmra.mxu0 %v79
  %v941 = vpop.f32.mrf.mxu0
  %v942 = vadd.f32 %v375, %v941
  %v943 = vpop.f32.mrf.mxu0
  %v944 = vadd.f32 %v378, %v943
  %945 = vmatmul.bf16.gmra.mxu0 %v81
  %v946 = vpop.f32.mrf.mxu0
  %v947 = vadd.f32 %v381, %v946
  %v948 = vpop.f32.mrf.mxu0
  %v949 = vadd.f32 %v384, %v948
  %950 = vmatmul.bf16.gmra.mxu0 %v83
  %v951 = vpop.f32.mrf.mxu0
  %v952 = vadd.f32 %v387, %v951
  %v953 = vpop.f32.mrf.mxu0
  %v954 = vadd.f32 %v390, %v953
  %955 = vdwg.mxu0
  %956 = vmatpush.bf16.msra.mxu0 %v839
  %957 = vmatpush.bf16.msra.mxu0 %v835
  %958 = vmatpush.bf16.msra.mxu0 %v831
  %959 = vmatpush.bf16.msra.mxu0 %v827
  %960 = vmatpush.bf16.msra.mxu0 %v823
  %961 = vmatpush.bf16.msra.mxu0 %v819
  %962 = vmatpush.bf16.msra.mxu0 %v815
  %963 = vmatpush.bf16.msra.mxu0 %v811
  %964 = vmatmul.bf16.gmra.mxu0 %v70
  %v965 = vpop.f32.mrf.mxu0
  %v966 = vadd.f32 %v917, %v965
  %v967 = vpop.f32.mrf.mxu0
  %v968 = vadd.f32 %v919, %v967
  %969 = vmatmul.bf16.gmra.mxu0 %v72
  %v970 = vpop.f32.mrf.mxu0
  %v971 = vadd.f32 %v922, %v970
  %v972 = vpop.f32.mrf.mxu0
  %v973 = vadd.f32 %v924, %v972
  %974 = vmatmul.bf16.gmra.mxu0 %v74
  %v975 = vpop.f32.mrf.mxu0
  %v976 = vadd.f32 %v927, %v975
  %v977 = vpop.f32.mrf.mxu0
  %v978 = vadd.f32 %v929, %v977
  %979 = vmatmul.bf16.gmra.mxu0 %v76
  %v980 = vpop.f32.mrf.mxu0
  %v981 = vadd.f32 %v932, %v980
  %v982 = vpop.f32.mrf.mxu0
  %v983 = vadd.f32 %v934, %v982
  %984 = vmatmul.bf16.gmra.mxu0 %v78
  %v985 = vpop.f32.mrf.mxu0
  %v986 = vadd.f32 %v937, %v985
  %v987 = vpop.f32.mrf.mxu0
  %v988 = vadd.f32 %v939, %v987
  %989 = vmatmul.bf16.gmra.mxu0 %v80
  %v990 = vpop.f32.mrf.mxu0
  %v991 = vadd.f32 %v942, %v990
  %v992 = vpop.f32.mrf.mxu0
  %v993 = vadd.f32 %v944, %v992
  %994 = vmatmul.bf16.gmra.mxu0 %v82
  %v995 = vpop.f32.mrf.mxu0
  %v996 = vadd.f32 %v947, %v995
  %v997 = vpop.f32.mrf.mxu0
  %v998 = vadd.f32 %v949, %v997
  %999 = vmatmul.bf16.gmra.mxu0 %v84
  %v1000 = vpop.f32.mrf.mxu0
  %v1001 = vadd.f32 %v952, %v1000
  %v1002 = vpop.f32.mrf.mxu0
  %v1003 = vadd.f32 %v954, %v1002
  %1004 = vdwg.mxu0
  %1005 = vmatpush.bf16.msra.mxu0 %v808
  %1006 = vmatpush.bf16.msra.mxu0 %v804
  %1007 = vmatpush.bf16.msra.mxu0 %v800
  %1008 = vmatpush.bf16.msra.mxu0 %v796
  %1009 = vmatpush.bf16.msra.mxu0 %v792
  %1010 = vmatpush.bf16.msra.mxu0 %v788
  %1011 = vmatpush.bf16.msra.mxu0 %v784
  %1012 = vmatpush.bf16.msra.mxu0 %v780
  %1013 = vmatmul.bf16.gmra.mxu0 %v69
  %v1014 = vpop.f32.mrf.mxu0
  %v1015 = vadd.f32 %v410, %v1014
  %v1016 = vpop.f32.mrf.mxu0
  %v1017 = vadd.f32 %v413, %v1016
  %1018 = vmatmul.bf16.gmra.mxu0 %v71
  %v1019 = vpop.f32.mrf.mxu0
  %v1020 = vadd.f32 %v416, %v1019
  %v1021 = vpop.f32.mrf.mxu0
  %v1022 = vadd.f32 %v419, %v1021
  %1023 = vmatmul.bf16.gmra.mxu0 %v73
  %v1024 = vpop.f32.mrf.mxu0
  %v1025 = vadd.f32 %v422, %v1024
  %v1026 = vpop.f32.mrf.mxu0
  %v1027 = vadd.f32 %v425, %v1026
  %1028 = vmatmul.bf16.gmra.mxu0 %v75
  %v1029 = vpop.f32.mrf.mxu0
  %v1030 = vadd.f32 %v428, %v1029
  %v1031 = vpop.f32.mrf.mxu0
  %v1032 = vadd.f32 %v431, %v1031
  %1033 = vmatmul.bf16.gmra.mxu0 %v77
  %v1034 = vpop.f32.mrf.mxu0
  %v1035 = vadd.f32 %v434, %v1034
  %v1036 = vpop.f32.mrf.mxu0
  %v1037 = vadd.f32 %v437, %v1036
  %1038 = vmatmul.bf16.gmra.mxu0 %v79
  %v1039 = vpop.f32.mrf.mxu0
  %v1040 = vadd.f32 %v440, %v1039
  %v1041 = vpop.f32.mrf.mxu0
  %v1042 = vadd.f32 %v443, %v1041
  %1043 = vmatmul.bf16.gmra.mxu0 %v81
  %v1044 = vpop.f32.mrf.mxu0
  %v1045 = vadd.f32 %v446, %v1044
  %v1046 = vpop.f32.mrf.mxu0
  %v1047 = vadd.f32 %v449, %v1046
  %1048 = vmatmul.bf16.gmra.mxu0 %v83
  %v1049 = vpop.f32.mrf.mxu0
  %v1050 = vadd.f32 %v452, %v1049
  %v1051 = vpop.f32.mrf.mxu0
  %v1052 = vadd.f32 %v455, %v1051
  %1053 = vdwg.mxu0
  %1054 = vmatpush.bf16.msra.mxu0 %v840
  %1055 = vmatpush.bf16.msra.mxu0 %v836
  %1056 = vmatpush.bf16.msra.mxu0 %v832
  %1057 = vmatpush.bf16.msra.mxu0 %v828
  %1058 = vmatpush.bf16.msra.mxu0 %v824
  %1059 = vmatpush.bf16.msra.mxu0 %v820
  %1060 = vmatpush.bf16.msra.mxu0 %v816
  %1061 = vmatpush.bf16.msra.mxu0 %v812
  %1062 = vmatmul.bf16.gmra.mxu0 %v70
  %v1063 = vpop.f32.mrf.mxu0
  %v1064 = vadd.f32 %v1015, %v1063
  %v1065 = vpop.f32.mrf.mxu0
  %v1066 = vadd.f32 %v1017, %v1065
  %1067 = vmatmul.bf16.gmra.mxu0 %v72
  %v1068 = vpop.f32.mrf.mxu0
  %v1069 = vadd.f32 %v1020, %v1068
  %v1070 = vpop.f32.mrf.mxu0
  %v1071 = vadd.f32 %v1022, %v1070
  %1072 = vmatmul.bf16.gmra.mxu0 %v74
  %v1073 = vpop.f32.mrf.mxu0
  %v1074 = vadd.f32 %v1025, %v1073
  %v1075 = vpop.f32.mrf.mxu0
  %v1076 = vadd.f32 %v1027, %v1075
  %1077 = vmatmul.bf16.gmra.mxu0 %v76
  %v1078 = vpop.f32.mrf.mxu0
  %v1079 = vadd.f32 %v1030, %v1078
  %v1080 = vpop.f32.mrf.mxu0
  %v1081 = vadd.f32 %v1032, %v1080
  %1082 = vmatmul.bf16.gmra.mxu0 %v78
  %v1083 = vpop.f32.mrf.mxu0
  %v1084 = vadd.f32 %v1035, %v1083
  %v1085 = vpop.f32.mrf.mxu0
  %v1086 = vadd.f32 %v1037, %v1085
  %1087 = vmatmul.bf16.gmra.mxu0 %v80
  %v1088 = vpop.f32.mrf.mxu0
  %v1089 = vadd.f32 %v1040, %v1088
  %v1090 = vpop.f32.mrf.mxu0
  %v1091 = vadd.f32 %v1042, %v1090
  %1092 = vmatmul.bf16.gmra.mxu0 %v82
  %v1093 = vpop.f32.mrf.mxu0
  %v1094 = vadd.f32 %v1045, %v1093
  %v1095 = vpop.f32.mrf.mxu0
  %v1096 = vadd.f32 %v1047, %v1095
  %1097 = vmatmul.bf16.gmra.mxu0 %v84
  %v1098 = vpop.f32.mrf.mxu0
  %v1099 = vadd.f32 %v1050, %v1098
  %v1100 = vpop.f32.mrf.mxu0
  %v1101 = vadd.f32 %v1052, %v1100
  %1102 = vdwg.mxu0
  %1103 = vmatpush.bf16.msra.mxu0 %v809
  %1104 = vmatpush.bf16.msra.mxu0 %v805
  %1105 = vmatpush.bf16.msra.mxu0 %v801
  %1106 = vmatpush.bf16.msra.mxu0 %v797
  %1107 = vmatpush.bf16.msra.mxu0 %v793
  %1108 = vmatpush.bf16.msra.mxu0 %v789
  %1109 = vmatpush.bf16.msra.mxu0 %v785
  %1110 = vmatpush.bf16.msra.mxu0 %v781
  %1111 = vmatmul.bf16.gmra.mxu0 %v69
  %v1112 = vpop.f32.mrf.mxu0
  %v1113 = vadd.f32 %v475, %v1112
  %v1114 = vpop.f32.mrf.mxu0
  %v1115 = vadd.f32 %v478, %v1114
  %1116 = vmatmul.bf16.gmra.mxu0 %v71
  %v1117 = vpop.f32.mrf.mxu0
  %v1118 = vadd.f32 %v481, %v1117
  %v1119 = vpop.f32.mrf.mxu0
  %v1120 = vadd.f32 %v484, %v1119
  %1121 = vmatmul.bf16.gmra.mxu0 %v73
  %v1122 = vpop.f32.mrf.mxu0
  %v1123 = vadd.f32 %v487, %v1122
  %v1124 = vpop.f32.mrf.mxu0
  %v1125 = vadd.f32 %v490, %v1124
  %1126 = vmatmul.bf16.gmra.mxu0 %v75
  %v1127 = vpop.f32.mrf.mxu0
  %v1128 = vadd.f32 %v493, %v1127
  %v1129 = vpop.f32.mrf.mxu0
  %v1130 = vadd.f32 %v496, %v1129
  %1131 = vmatmul.bf16.gmra.mxu0 %v77
  %v1132 = vpop.f32.mrf.mxu0
  %v1133 = vadd.f32 %v499, %v1132
  %v1134 = vpop.f32.mrf.mxu0
  %v1135 = vadd.f32 %v502, %v1134
  %1136 = vmatmul.bf16.gmra.mxu0 %v79
  %v1137 = vpop.f32.mrf.mxu0
  %v1138 = vadd.f32 %v505, %v1137
  %v1139 = vpop.f32.mrf.mxu0
  %v1140 = vadd.f32 %v508, %v1139
  %1141 = vmatmul.bf16.gmra.mxu0 %v81
  %v1142 = vpop.f32.mrf.mxu0
  %v1143 = vadd.f32 %v511, %v1142
  %v1144 = vpop.f32.mrf.mxu0
  %v1145 = vadd.f32 %v514, %v1144
  %1146 = vmatmul.bf16.gmra.mxu0 %v83
  %v1147 = vpop.f32.mrf.mxu0
  %v1148 = vadd.f32 %v517, %v1147
  %v1149 = vpop.f32.mrf.mxu0
  %v1150 = vadd.f32 %v520, %v1149
  %1151 = vdwg.mxu0
  %1152 = vmatpush.bf16.msra.mxu0 %v841
  %1153 = vmatpush.bf16.msra.mxu0 %v837
  %1154 = vmatpush.bf16.msra.mxu0 %v833
  %1155 = vmatpush.bf16.msra.mxu0 %v829
  %1156 = vmatpush.bf16.msra.mxu0 %v825
  %1157 = vmatpush.bf16.msra.mxu0 %v821
  %1158 = vmatpush.bf16.msra.mxu0 %v817
  %1159 = vmatpush.bf16.msra.mxu0 %v813
  %1160 = vmatmul.bf16.gmra.mxu0 %v70
  %v1161 = vpop.f32.mrf.mxu0
  %v1162 = vadd.f32 %v1113, %v1161
  %v1163 = vpop.f32.mrf.mxu0
  %v1164 = vadd.f32 %v1115, %v1163
  %1165 = vmatmul.bf16.gmra.mxu0 %v72
  %v1166 = vpop.f32.mrf.mxu0
  %v1167 = vadd.f32 %v1118, %v1166
  %v1168 = vpop.f32.mrf.mxu0
  %v1169 = vadd.f32 %v1120, %v1168
  %1170 = vmatmul.bf16.gmra.mxu0 %v74
  %v1171 = vpop.f32.mrf.mxu0
  %v1172 = vadd.f32 %v1123, %v1171
  %v1173 = vpop.f32.mrf.mxu0
  %v1174 = vadd.f32 %v1125, %v1173
  %1175 = vmatmul.bf16.gmra.mxu0 %v76
  %v1176 = vpop.f32.mrf.mxu0
  %v1177 = vadd.f32 %v1128, %v1176
  %v1178 = vpop.f32.mrf.mxu0
  %v1179 = vadd.f32 %v1130, %v1178
  %1180 = vmatmul.bf16.gmra.mxu0 %v78
  %v1181 = vpop.f32.mrf.mxu0
  %v1182 = vadd.f32 %v1133, %v1181
  %v1183 = vpop.f32.mrf.mxu0
  %v1184 = vadd.f32 %v1135, %v1183
  %1185 = vmatmul.bf16.gmra.mxu0 %v80
  %v1186 = vpop.f32.mrf.mxu0
  %v1187 = vadd.f32 %v1138, %v1186
  %v1188 = vpop.f32.mrf.mxu0
  %v1189 = vadd.f32 %v1140, %v1188
  %1190 = vmatmul.bf16.gmra.mxu0 %v82
  %v1191 = vpop.f32.mrf.mxu0
  %v1192 = vadd.f32 %v1143, %v1191
  %v1193 = vpop.f32.mrf.mxu0
  %v1194 = vadd.f32 %v1145, %v1193
  %1195 = vmatmul.bf16.gmra.mxu0 %v84
  %v1196 = vpop.f32.mrf.mxu0
  %v1197 = vadd.f32 %v1148, %v1196
  %v1198 = vpop.f32.mrf.mxu0
  %v1199 = vadd.f32 %v1150, %v1198
  %1200 = vdwg.mxu0
  %1201 = vmatpush.bf16.msra.mxu0 %v810
  %1202 = vmatpush.bf16.msra.mxu0 %v806
  %1203 = vmatpush.bf16.msra.mxu0 %v802
  %1204 = vmatpush.bf16.msra.mxu0 %v798
  %1205 = vmatpush.bf16.msra.mxu0 %v794
  %1206 = vmatpush.bf16.msra.mxu0 %v790
  %1207 = vmatpush.bf16.msra.mxu0 %v786
  %1208 = vmatpush.bf16.msra.mxu0 %v782
  %1209 = vmatmul.bf16.gmra.mxu0 %v69
  %v1210 = vpop.f32.mrf.mxu0
  %v1211 = vadd.f32 %v540, %v1210
  %v1212 = vpop.f32.mrf.mxu0
  %v1213 = vadd.f32 %v543, %v1212
  %1214 = vmatmul.bf16.gmra.mxu0 %v71
  %v1215 = vpop.f32.mrf.mxu0
  %v1216 = vadd.f32 %v546, %v1215
  %v1217 = vpop.f32.mrf.mxu0
  %v1218 = vadd.f32 %v549, %v1217
  %1219 = vmatmul.bf16.gmra.mxu0 %v73
  %v1220 = vpop.f32.mrf.mxu0
  %v1221 = vadd.f32 %v552, %v1220
  %v1222 = vpop.f32.mrf.mxu0
  %v1223 = vadd.f32 %v555, %v1222
  %1224 = vmatmul.bf16.gmra.mxu0 %v75
  %v1225 = vpop.f32.mrf.mxu0
  %v1226 = vadd.f32 %v558, %v1225
  %v1227 = vpop.f32.mrf.mxu0
  %v1228 = vadd.f32 %v561, %v1227
  %1229 = vmatmul.bf16.gmra.mxu0 %v77
  %v1230 = vpop.f32.mrf.mxu0
  %v1231 = vadd.f32 %v564, %v1230
  %v1232 = vpop.f32.mrf.mxu0
  %v1233 = vadd.f32 %v567, %v1232
  %1234 = vmatmul.bf16.gmra.mxu0 %v79
  %v1235 = vpop.f32.mrf.mxu0
  %v1236 = vadd.f32 %v570, %v1235
  %v1237 = vpop.f32.mrf.mxu0
  %v1238 = vadd.f32 %v573, %v1237
  %1239 = vmatmul.bf16.gmra.mxu0 %v81
  %v1240 = vpop.f32.mrf.mxu0
  %v1241 = vadd.f32 %v576, %v1240
  %v1242 = vpop.f32.mrf.mxu0
  %v1243 = vadd.f32 %v579, %v1242
  %1244 = vmatmul.bf16.gmra.mxu0 %v83
  %v1245 = vpop.f32.mrf.mxu0
  %v1246 = vadd.f32 %v582, %v1245
  %v1247 = vpop.f32.mrf.mxu0
  %v1248 = vadd.f32 %v585, %v1247
  %1249 = vdwg.mxu0
  %1250 = vmatpush.bf16.msra.mxu0 %v842
  %1251 = vmatpush.bf16.msra.mxu0 %v838
  %1252 = vmatpush.bf16.msra.mxu0 %v834
  %1253 = vmatpush.bf16.msra.mxu0 %v830
  %1254 = vmatpush.bf16.msra.mxu0 %v826
  %1255 = vmatpush.bf16.msra.mxu0 %v822
  %1256 = vmatpush.bf16.msra.mxu0 %v818
  %1257 = vmatpush.bf16.msra.mxu0 %v814
  %1258 = vmatmul.bf16.gmra.mxu0 %v70
  %v1259 = vpop.f32.mrf.mxu0
  %v1260 = vadd.f32 %v1211, %v1259
  %v1261 = vpop.f32.mrf.mxu0
  %v1262 = vadd.f32 %v1213, %v1261
  %1263 = vmatmul.bf16.gmra.mxu0 %v72
  %v1264 = vpop.f32.mrf.mxu0
  %v1265 = vadd.f32 %v1216, %v1264
  %v1266 = vpop.f32.mrf.mxu0
  %v1267 = vadd.f32 %v1218, %v1266
  %1268 = vmatmul.bf16.gmra.mxu0 %v74
  %v1269 = vpop.f32.mrf.mxu0
  %v1270 = vadd.f32 %v1221, %v1269
  %v1271 = vpop.f32.mrf.mxu0
  %v1272 = vadd.f32 %v1223, %v1271
  %1273 = vmatmul.bf16.gmra.mxu0 %v76
  %v1274 = vpop.f32.mrf.mxu0
  %v1275 = vadd.f32 %v1226, %v1274
  %v1276 = vpop.f32.mrf.mxu0
  %v1277 = vadd.f32 %v1228, %v1276
  %1278 = vmatmul.bf16.gmra.mxu0 %v78
  %v1279 = vpop.f32.mrf.mxu0
  %v1280 = vadd.f32 %v1231, %v1279
  %v1281 = vpop.f32.mrf.mxu0
  %v1282 = vadd.f32 %v1233, %v1281
  %1283 = vmatmul.bf16.gmra.mxu0 %v80
  %v1284 = vpop.f32.mrf.mxu0
  %v1285 = vadd.f32 %v1236, %v1284
  %v1286 = vpop.f32.mrf.mxu0
  %v1287 = vadd.f32 %v1238, %v1286
  %1288 = vmatmul.bf16.gmra.mxu0 %v82
  %v1289 = vpop.f32.mrf.mxu0
  %v1290 = vadd.f32 %v1241, %v1289
  %v1291 = vpop.f32.mrf.mxu0
  %v1292 = vadd.f32 %v1243, %v1291
  %1293 = vmatmul.bf16.gmra.mxu0 %v84
  %v1294 = vpop.f32.mrf.mxu0
  %v1295 = vadd.f32 %v1246, %v1294
  %v1296 = vpop.f32.mrf.mxu0
  %v1297 = vadd.f32 %v1248, %v1296
  %1298 = vdwg.mxu0
  %vm1299 = vcmp.gt.f32.partialorder %v966, 0.0
  %vm1300 = vcmp.gt.f32.partialorder %v1064, 0.0
  %vm1301 = vcmp.gt.f32.partialorder %v1162, 0.0
  %vm1302 = vcmp.gt.f32.partialorder %v1260, 0.0
  %vm1303 = vcmp.gt.f32.partialorder %v968, 0.0
  %vm1304 = vcmp.gt.f32.partialorder %v1066, 0.0
  %vm1305 = vcmp.gt.f32.partialorder %v1164, 0.0
  %vm1306 = vcmp.gt.f32.partialorder %v1262, 0.0
  %vm1307 = vcmp.gt.f32.partialorder %v971, 0.0
  %vm1308 = vcmp.gt.f32.partialorder %v1069, 0.0
  %vm1309 = vcmp.gt.f32.partialorder %v1167, 0.0
  %vm1310 = vcmp.gt.f32.partialorder %v1265, 0.0
  %vm1311 = vcmp.gt.f32.partialorder %v973, 0.0
  %vm1312 = vcmp.gt.f32.partialorder %v1071, 0.0
  %vm1313 = vcmp.gt.f32.partialorder %v1169, 0.0
  %vm1314 = vcmp.gt.f32.partialorder %v1267, 0.0
  %vm1315 = vcmp.gt.f32.partialorder %v976, 0.0
  %vm1316 = vcmp.gt.f32.partialorder %v1074, 0.0
  %vm1317 = vcmp.gt.f32.partialorder %v1172, 0.0
  %vm1318 = vcmp.gt.f32.partialorder %v1270, 0.0
  %vm1319 = vcmp.gt.f32.partialorder %v978, 0.0
  %vm1320 = vcmp.gt.f32.partialorder %v1076, 0.0
  %vm1321 = vcmp.gt.f32.partialorder %v1174, 0.0
  %vm1322 = vcmp.gt.f32.partialorder %v1272, 0.0
  %vm1323 = vcmp.gt.f32.partialorder %v981, 0.0
  %vm1324 = vcmp.gt.f32.partialorder %v1079, 0.0
  %vm1325 = vcmp.gt.f32.partialorder %v1177, 0.0
  %vm1326 = vcmp.gt.f32.partialorder %v1275, 0.0
  %vm1327 = vcmp.gt.f32.partialorder %v983, 0.0
  %vm1328 = vcmp.gt.f32.partialorder %v1081, 0.0
  %vm1329 = vcmp.gt.f32.partialorder %v1179, 0.0
  %vm1330 = vcmp.gt.f32.partialorder %v1277, 0.0
  %vm1331 = vcmp.gt.f32.partialorder %v986, 0.0
  %vm1332 = vcmp.gt.f32.partialorder %v1084, 0.0
  %vm1333 = vcmp.gt.f32.partialorder %v1182, 0.0
  %vm1334 = vcmp.gt.f32.partialorder %v1280, 0.0
  %vm1335 = vcmp.gt.f32.partialorder %v988, 0.0
  %vm1336 = vcmp.gt.f32.partialorder %v1086, 0.0
  %vm1337 = vcmp.gt.f32.partialorder %v1184, 0.0
  %vm1338 = vcmp.gt.f32.partialorder %v1282, 0.0
  %vm1339 = vcmp.gt.f32.partialorder %v991, 0.0
  %vm1340 = vcmp.gt.f32.partialorder %v1089, 0.0
  %vm1341 = vcmp.gt.f32.partialorder %v1187, 0.0
  %vm1342 = vcmp.gt.f32.partialorder %v1285, 0.0
  %vm1343 = vcmp.gt.f32.partialorder %v993, 0.0
  %vm1344 = vcmp.gt.f32.partialorder %v1091, 0.0
  %vm1345 = vcmp.gt.f32.partialorder %v1189, 0.0
  %vm1346 = vcmp.gt.f32.partialorder %v1287, 0.0
  %vm1347 = vcmp.gt.f32.partialorder %v996, 0.0
  %vm1348 = vcmp.gt.f32.partialorder %v1094, 0.0
  %vm1349 = vcmp.gt.f32.partialorder %v1192, 0.0
  %vm1350 = vcmp.gt.f32.partialorder %v1290, 0.0
  %vm1351 = vcmp.gt.f32.partialorder %v998, 0.0
  %vm1352 = vcmp.gt.f32.partialorder %v1096, 0.0
  %vm1353 = vcmp.gt.f32.partialorder %v1194, 0.0
  %vm1354 = vcmp.gt.f32.partialorder %v1292, 0.0
  %vm1355 = vcmp.gt.f32.partialorder %v1001, 0.0
  %vm1356 = vcmp.gt.f32.partialorder %v1099, 0.0
  %vm1357 = vcmp.gt.f32.partialorder %v1197, 0.0
  %vm1358 = vcmp.gt.f32.partialorder %v1295, 0.0
  %vm1359 = vcmp.gt.f32.partialorder %v1003, 0.0
  %vm1360 = vcmp.gt.f32.partialorder %v1101, 0.0
  %vm1361 = vcmp.gt.f32.partialorder %v1199, 0.0
  %vm1362 = vcmp.gt.f32.partialorder %v1297, 0.0
  %v1363 = vmul.f32 %v966, 0.2
  %v1364 = vmul.f32 %v1064, 0.2
  %v1365 = vmul.f32 %v1162, 0.2
  %v1366 = vmul.f32 %v1260, 0.2
  %v1367 = vmul.f32 %v968, 0.2
  %v1368 = vmul.f32 %v1066, 0.2
  %v1369 = vmul.f32 %v1164, 0.2
  %v1370 = vmul.f32 %v1262, 0.2
  %v1371 = vmul.f32 %v971, 0.2
  %v1372 = vmul.f32 %v1069, 0.2
  %v1373 = vmul.f32 %v1167, 0.2
  %v1374 = vmul.f32 %v1265, 0.2
  %v1375 = vmul.f32 %v973, 0.2
  %v1376 = vmul.f32 %v1071, 0.2
  %v1377 = vmul.f32 %v1169, 0.2
  %v1378 = vmul.f32 %v1267, 0.2
  %v1379 = vmul.f32 %v976, 0.2
  %v1380 = vmul.f32 %v1074, 0.2
  %v1381 = vmul.f32 %v1172, 0.2
  %v1382 = vmul.f32 %v1270, 0.2
  %v1383 = vmul.f32 %v978, 0.2
  %v1384 = vmul.f32 %v1076, 0.2
  %v1385 = vmul.f32 %v1174, 0.2
  %v1386 = vmul.f32 %v1272, 0.2
  %v1387 = vmul.f32 %v981, 0.2
  %v1388 = vmul.f32 %v1079, 0.2
  %v1389 = vmul.f32 %v1177, 0.2
  %v1390 = vmul.f32 %v1275, 0.2
  %v1391 = vmul.f32 %v983, 0.2
  %v1392 = vmul.f32 %v1081, 0.2
  %v1393 = vmul.f32 %v1179, 0.2
  %v1394 = vmul.f32 %v1277, 0.2
  %v1395 = vmul.f32 %v986, 0.2
  %v1396 = vmul.f32 %v1084, 0.2
  %v1397 = vmul.f32 %v1182, 0.2
  %v1398 = vmul.f32 %v1280, 0.2
  %v1399 = vmul.f32 %v988, 0.2
  %v1400 = vmul.f32 %v1086, 0.2
  %v1401 = vmul.f32 %v1184, 0.2
  %v1402 = vmul.f32 %v1282, 0.2
  %v1403 = vmul.f32 %v991, 0.2
  %v1404 = vmul.f32 %v1089, 0.2
  %v1405 = vmul.f32 %v1187, 0.2
  %v1406 = vmul.f32 %v1285, 0.2
  %v1407 = vmul.f32 %v993, 0.2
  %v1408 = vmul.f32 %v1091, 0.2
  %v1409 = vmul.f32 %v1189, 0.2
  %v1410 = vmul.f32 %v1287, 0.2
  %v1411 = vmul.f32 %v996, 0.2
  %v1412 = vmul.f32 %v1094, 0.2
  %v1413 = vmul.f32 %v1192, 0.2
  %v1414 = vmul.f32 %v1290, 0.2
  %v1415 = vmul.f32 %v998, 0.2
  %v1416 = vmul.f32 %v1096, 0.2
  %v1417 = vmul.f32 %v1194, 0.2
  %v1418 = vmul.f32 %v1292, 0.2
  %v1419 = vmul.f32 %v1001, 0.2
  %v1420 = vmul.f32 %v1099, 0.2
  %v1421 = vmul.f32 %v1197, 0.2
  %v1422 = vmul.f32 %v1295, 0.2
  %v1423 = vmul.f32 %v1003, 0.2
  %v1424 = vmul.f32 %v1101, 0.2
  %v1425 = vmul.f32 %v1199, 0.2
  %v1426 = vmul.f32 %v1297, 0.2
  %v1427 = vsel %vm1299, %v966, %v1363
  %v1428 = vsel %vm1300, %v1064, %v1364
  %v1429 = vsel %vm1301, %v1162, %v1365
  %v1430 = vsel %vm1302, %v1260, %v1366
  %v1431 = vsel %vm1303, %v968, %v1367
  %v1432 = vsel %vm1304, %v1066, %v1368
  %v1433 = vsel %vm1305, %v1164, %v1369
  %v1434 = vsel %vm1306, %v1262, %v1370
  %v1435 = vsel %vm1307, %v971, %v1371
  %v1436 = vsel %vm1308, %v1069, %v1372
  %v1437 = vsel %vm1309, %v1167, %v1373
  %v1438 = vsel %vm1310, %v1265, %v1374
  %v1439 = vsel %vm1311, %v973, %v1375
  %v1440 = vsel %vm1312, %v1071, %v1376
  %v1441 = vsel %vm1313, %v1169, %v1377
  %v1442 = vsel %vm1314, %v1267, %v1378
  %v1443 = vsel %vm1315, %v976, %v1379
  %v1444 = vsel %vm1316, %v1074, %v1380
  %v1445 = vsel %vm1317, %v1172, %v1381
  %v1446 = vsel %vm1318, %v1270, %v1382
  %v1447 = vsel %vm1319, %v978, %v1383
  %v1448 = vsel %vm1320, %v1076, %v1384
  %v1449 = vsel %vm1321, %v1174, %v1385
  %v1450 = vsel %vm1322, %v1272, %v1386
  %v1451 = vsel %vm1323, %v981, %v1387
  %v1452 = vsel %vm1324, %v1079, %v1388
  %v1453 = vsel %vm1325, %v1177, %v1389
  %v1454 = vsel %vm1326, %v1275, %v1390
  %v1455 = vsel %vm1327, %v983, %v1391
  %v1456 = vsel %vm1328, %v1081, %v1392
  %v1457 = vsel %vm1329, %v1179, %v1393
  %v1458 = vsel %vm1330, %v1277, %v1394
  %v1459 = vsel %vm1331, %v986, %v1395
  %v1460 = vsel %vm1332, %v1084, %v1396
  %v1461 = vsel %vm1333, %v1182, %v1397
  %v1462 = vsel %vm1334, %v1280, %v1398
  %v1463 = vsel %vm1335, %v988, %v1399
  %v1464 = vsel %vm1336, %v1086, %v1400
  %v1465 = vsel %vm1337, %v1184, %v1401
  %v1466 = vsel %vm1338, %v1282, %v1402
  %v1467 = vsel %vm1339, %v991, %v1403
  %v1468 = vsel %vm1340, %v1089, %v1404
  %v1469 = vsel %vm1341, %v1187, %v1405
  %v1470 = vsel %vm1342, %v1285, %v1406
  %v1471 = vsel %vm1343, %v993, %v1407
  %v1472 = vsel %vm1344, %v1091, %v1408
  %v1473 = vsel %vm1345, %v1189, %v1409
  %v1474 = vsel %vm1346, %v1287, %v1410
  %v1475 = vsel %vm1347, %v996, %v1411
  %v1476 = vsel %vm1348, %v1094, %v1412
  %v1477 = vsel %vm1349, %v1192, %v1413
  %v1478 = vsel %vm1350, %v1290, %v1414
  %v1479 = vsel %vm1351, %v998, %v1415
  %v1480 = vsel %vm1352, %v1096, %v1416
  %v1481 = vsel %vm1353, %v1194, %v1417
  %v1482 = vsel %vm1354, %v1292, %v1418
  %v1483 = vsel %vm1355, %v1001, %v1419
  %v1484 = vsel %vm1356, %v1099, %v1420
  %v1485 = vsel %vm1357, %v1197, %v1421
  %v1486 = vsel %vm1358, %v1295, %v1422
  %v1487 = vsel %vm1359, %v1003, %v1423
  %v1488 = vsel %vm1360, %v1101, %v1424
  %v1489 = vsel %vm1361, %v1199, %v1425
  %v1490 = vsel %vm1362, %v1297, %v1426
  %v1491 = vpack.c.bf16 %v1431, %v1427
  %v1492 = vpack.c.bf16 %v1432, %v1428
  %v1493 = vpack.c.bf16 %v1433, %v1429
  %v1494 = vpack.c.bf16 %v1434, %v1430
  %v1495 = vpack.c.bf16 %v1439, %v1435
  %v1496 = vpack.c.bf16 %v1440, %v1436
  %v1497 = vpack.c.bf16 %v1441, %v1437
  %v1498 = vpack.c.bf16 %v1442, %v1438
  %v1499 = vpack.c.bf16 %v1447, %v1443
  %v1500 = vpack.c.bf16 %v1448, %v1444
  %v1501 = vpack.c.bf16 %v1449, %v1445
  %v1502 = vpack.c.bf16 %v1450, %v1446
  %v1503 = vpack.c.bf16 %v1455, %v1451
  %v1504 = vpack.c.bf16 %v1456, %v1452
  %v1505 = vpack.c.bf16 %v1457, %v1453
  %v1506 = vpack.c.bf16 %v1458, %v1454
  %v1507 = vpack.c.bf16 %v1463, %v1459
  %v1508 = vpack.c.bf16 %v1464, %v1460
  %v1509 = vpack.c.bf16 %v1465, %v1461
  %v1510 = vpack.c.bf16 %v1466, %v1462
  %v1511 = vpack.c.bf16 %v1471, %v1467
  %v1512 = vpack.c.bf16 %v1472, %v1468
  %v1513 = vpack.c.bf16 %v1473, %v1469
  %v1514 = vpack.c.bf16 %v1474, %v1470
  %v1515 = vpack.c.bf16 %v1479, %v1475
  %v1516 = vpack.c.bf16 %v1480, %v1476
  %v1517 = vpack.c.bf16 %v1481, %v1477
  %v1518 = vpack.c.bf16 %v1482, %v1478
  %v1519 = vpack.c.bf16 %v1487, %v1483
  %v1520 = vpack.c.bf16 %v1488, %v1484
  %v1521 = vpack.c.bf16 %v1489, %v1485
  %v1522 = vpack.c.bf16 %v1490, %v1486
  %v1523 = vld [vmem:[%s4] sm:$0xff]
  %v1524 = vld [vmem:[%s4 + $0x8] sm:$0xff]
  %v1525 = vld [vmem:[%s4 + $0x10] sm:$0xff]
  %v1526 = vld [vmem:[%s4 + $0x18] sm:$0xff]
  %v1527 = vld [vmem:[%s4 + $0x20] sm:$0xff]
  %v1528 = vld [vmem:[%s4 + $0x28] sm:$0xff]
  %v1529 = vld [vmem:[%s4 + $0x30] sm:$0xff]
  %v1530 = vld [vmem:[%s4 + $0x38] sm:$0xff]
  %v1531 = vld [vmem:[%s4 + $0x40] sm:$0xff]
  %v1532 = vld [vmem:[%s4 + $0x48] sm:$0xff]
  %v1533 = vld [vmem:[%s4 + $0x50] sm:$0xff]
  %v1534 = vld [vmem:[%s4 + $0x58] sm:$0xff]
  %v1535 = vld [vmem:[%s4 + $0x60] sm:$0xff]
  %v1536 = vld [vmem:[%s4 + $0x68] sm:$0xff]
  %v1537 = vld [vmem:[%s4 + $0x70] sm:$0xff]
  %v1538 = vld [vmem:[%s4 + $0x78] sm:$0xff]
  %v1539 = vld [vmem:[%s4 + $0x80] sm:$0xff]
  %v1540 = vld [vmem:[%s4 + $0x88] sm:$0xff]
  %v1541 = vld [vmem:[%s4 + $0x90] sm:$0xff]
  %v1542 = vld [vmem:[%s4 + $0x98] sm:$0xff]
  %v1543 = vld [vmem:[%s4 + $0xa0] sm:$0xff]
  %v1544 = vld [vmem:[%s4 + $0xa8] sm:$0xff]
  %v1545 = vld [vmem:[%s4 + $0xb0] sm:$0xff]
  %v1546 = vld [vmem:[%s4 + $0xb8] sm:$0xff]
  %v1547 = vld [vmem:[%s4 + $0xc0] sm:$0xff]
  %v1548 = vld [vmem:[%s4 + $0xc8] sm:$0xff]
  %v1549 = vld [vmem:[%s4 + $0xd0] sm:$0xff]
  %v1550 = vld [vmem:[%s4 + $0xd8] sm:$0xff]
  %v1551 = vld [vmem:[%s4 + $0xe0] sm:$0xff]
  %v1552 = vld [vmem:[%s4 + $0xe8] sm:$0xff]
  %v1553 = vld [vmem:[%s4 + $0xf0] sm:$0xff]
  %v1554 = vld [vmem:[%s4 + $0xf8] sm:$0xff]
  %v1555 = vld [vmem:[%s4 + $0x100] sm:$0xff]
  %v1556 = vld [vmem:[%s4 + $0x108] sm:$0xff]
  %v1557 = vld [vmem:[%s4 + $0x110] sm:$0xff]
  %v1558 = vld [vmem:[%s4 + $0x118] sm:$0xff]
  %v1559 = vld [vmem:[%s4 + $0x120] sm:$0xff]
  %v1560 = vld [vmem:[%s4 + $0x128] sm:$0xff]
  %v1561 = vld [vmem:[%s4 + $0x130] sm:$0xff]
  %v1562 = vld [vmem:[%s4 + $0x138] sm:$0xff]
  %v1563 = vld [vmem:[%s4 + $0x140] sm:$0xff]
  %v1564 = vld [vmem:[%s4 + $0x148] sm:$0xff]
  %v1565 = vld [vmem:[%s4 + $0x150] sm:$0xff]
  %v1566 = vld [vmem:[%s4 + $0x158] sm:$0xff]
  %v1567 = vld [vmem:[%s4 + $0x160] sm:$0xff]
  %v1568 = vld [vmem:[%s4 + $0x168] sm:$0xff]
  %v1569 = vld [vmem:[%s4 + $0x170] sm:$0xff]
  %v1570 = vld [vmem:[%s4 + $0x178] sm:$0xff]
  %v1571 = vld [vmem:[%s4 + $0x180] sm:$0xff]
  %v1572 = vld [vmem:[%s4 + $0x188] sm:$0xff]
  %v1573 = vld [vmem:[%s4 + $0x190] sm:$0xff]
  %v1574 = vld [vmem:[%s4 + $0x198] sm:$0xff]
  %v1575 = vld [vmem:[%s4 + $0x1a0] sm:$0xff]
  %v1576 = vld [vmem:[%s4 + $0x1a8] sm:$0xff]
  %v1577 = vld [vmem:[%s4 + $0x1b0] sm:$0xff]
  %v1578 = vld [vmem:[%s4 + $0x1b8] sm:$0xff]
  %v1579 = vld [vmem:[%s4 + $0x1c0] sm:$0xff]
  %v1580 = vld [vmem:[%s4 + $0x1c8] sm:$0xff]
  %v1581 = vld [vmem:[%s4 + $0x1d0] sm:$0xff]
  %v1582 = vld [vmem:[%s4 + $0x1d8] sm:$0xff]
  %v1583 = vld [vmem:[%s4 + $0x1e0] sm:$0xff]
  %v1584 = vld [vmem:[%s4 + $0x1e8] sm:$0xff]
  %v1585 = vld [vmem:[%s4 + $0x1f0] sm:$0xff]
  %v1586 = vld [vmem:[%s4 + $0x1f8] sm:$0xff]
  %v1587 = vld [vmem:[%s4 + $0x200] sm:$0xff]
  %v1588 = vld [vmem:[%s4 + $0x208] sm:$0xff]
  %v1589 = vld [vmem:[%s4 + $0x210] sm:$0xff]
  %v1590 = vld [vmem:[%s4 + $0x218] sm:$0xff]
  %v1591 = vld [vmem:[%s4 + $0x220] sm:$0xff]
  %v1592 = vld [vmem:[%s4 + $0x228] sm:$0xff]
  %v1593 = vld [vmem:[%s4 + $0x230] sm:$0xff]
  %v1594 = vld [vmem:[%s4 + $0x238] sm:$0xff]
  %v1595 = vld [vmem:[%s4 + $0x240] sm:$0xff]
  %v1596 = vld [vmem:[%s4 + $0x248] sm:$0xff]
  %v1597 = vld [vmem:[%s4 + $0x250] sm:$0xff]
  %v1598 = vld [vmem:[%s4 + $0x258] sm:$0xff]
  %v1599 = vld [vmem:[%s4 + $0x260] sm:$0xff]
  %v1600 = vld [vmem:[%s4 + $0x268] sm:$0xff]
  %v1601 = vld [vmem:[%s4 + $0x270] sm:$0xff]
  %v1602 = vld [vmem:[%s4 + $0x278] sm:$0xff]
  %v1603 = vld [vmem:[%s4 + $0x280] sm:$0xff]
  %v1604 = vld [vmem:[%s4 + $0x288] sm:$0xff]
  %v1605 = vld [vmem:[%s4 + $0x290] sm:$0xff]
  %v1606 = vld [vmem:[%s4 + $0x298] sm:$0xff]
  %v1607 = vld [vmem:[%s4 + $0x2a0] sm:$0xff]
  %v1608 = vld [vmem:[%s4 + $0x2a8] sm:$0xff]
  %v1609 = vld [vmem:[%s4 + $0x2b0] sm:$0xff]
  %v1610 = vld [vmem:[%s4 + $0x2b8] sm:$0xff]
  %v1611 = vld [vmem:[%s4 + $0x2c0] sm:$0xff]
  %v1612 = vld [vmem:[%s4 + $0x2c8] sm:$0xff]
  %v1613 = vld [vmem:[%s4 + $0x2d0] sm:$0xff]
  %v1614 = vld [vmem:[%s4 + $0x2d8] sm:$0xff]
  %v1615 = vld [vmem:[%s4 + $0x2e0] sm:$0xff]
  %v1616 = vld [vmem:[%s4 + $0x2e8] sm:$0xff]
  %v1617 = vld [vmem:[%s4 + $0x2f0] sm:$0xff]
  %v1618 = vld [vmem:[%s4 + $0x2f8] sm:$0xff]
  %v1619 = vld [vmem:[%s4 + $0x300] sm:$0xff]
  %v1620 = vld [vmem:[%s4 + $0x308] sm:$0xff]
  %v1621 = vld [vmem:[%s4 + $0x310] sm:$0xff]
  %v1622 = vld [vmem:[%s4 + $0x318] sm:$0xff]
  %v1623 = vld [vmem:[%s4 + $0x320] sm:$0xff]
  %v1624 = vld [vmem:[%s4 + $0x328] sm:$0xff]
  %v1625 = vld [vmem:[%s4 + $0x330] sm:$0xff]
  %v1626 = vld [vmem:[%s4 + $0x338] sm:$0xff]
  %v1627 = vld [vmem:[%s4 + $0x340] sm:$0xff]
  %v1628 = vld [vmem:[%s4 + $0x348] sm:$0xff]
  %v1629 = vld [vmem:[%s4 + $0x350] sm:$0xff]
  %v1630 = vld [vmem:[%s4 + $0x358] sm:$0xff]
  %v1631 = vld [vmem:[%s4 + $0x360] sm:$0xff]
  %v1632 = vld [vmem:[%s4 + $0x368] sm:$0xff]
  %v1633 = vld [vmem:[%s4 + $0x370] sm:$0xff]
  %v1634 = vld [vmem:[%s4 + $0x378] sm:$0xff]
  %v1635 = vld [vmem:[%s4 + $0x380] sm:$0xff]
  %v1636 = vld [vmem:[%s4 + $0x388] sm:$0xff]
  %v1637 = vld [vmem:[%s4 + $0x390] sm:$0xff]
  %v1638 = vld [vmem:[%s4 + $0x398] sm:$0xff]
  %v1639 = vld [vmem:[%s4 + $0x3a0] sm:$0xff]
  %v1640 = vld [vmem:[%s4 + $0x3a8] sm:$0xff]
  %v1641 = vld [vmem:[%s4 + $0x3b0] sm:$0xff]
  %v1642 = vld [vmem:[%s4 + $0x3b8] sm:$0xff]
  %v1643 = vld [vmem:[%s4 + $0x3c0] sm:$0xff]
  %v1644 = vld [vmem:[%s4 + $0x3c8] sm:$0xff]
  %v1645 = vld [vmem:[%s4 + $0x3d0] sm:$0xff]
  %v1646 = vld [vmem:[%s4 + $0x3d8] sm:$0xff]
  %v1647 = vld [vmem:[%s4 + $0x3e0] sm:$0xff]
  %v1648 = vld [vmem:[%s4 + $0x3e8] sm:$0xff]
  %v1649 = vld [vmem:[%s4 + $0x3f0] sm:$0xff]
  %v1650 = vld [vmem:[%s4 + $0x3f8] sm:$0xff]
  %v1651 = vld [vmem:[%s5] sm:$0xf]
  %v1653 = vperm.slane %v1651, 0
  %v1654 = vperm.slane %v1651, 1
  %v1655 = vperm.slane %v1651, 2
  %v1656 = vperm.slane %v1651, 3
  %v1789 = vunpack.c.l.b16 %v1523
  %v1790 = vunpack.c.h.b16 %v1523
  %v1791 = vunpack.c.l.b16 %v1524
  %v1792 = vunpack.c.h.b16 %v1524
  %v1793 = vunpack.c.l.b16 %v1525
  %v1794 = vunpack.c.h.b16 %v1525
  %v1795 = vunpack.c.l.b16 %v1526
  %v1796 = vunpack.c.h.b16 %v1526
  %v1797 = vunpack.c.l.b16 %v1527
  %v1798 = vunpack.c.h.b16 %v1527
  %v1799 = vunpack.c.l.b16 %v1528
  %v1800 = vunpack.c.h.b16 %v1528
  %v1801 = vunpack.c.l.b16 %v1529
  %v1802 = vunpack.c.h.b16 %v1529
  %v1803 = vunpack.c.l.b16 %v1530
  %v1804 = vunpack.c.h.b16 %v1530
  %v1805 = vunpack.c.l.b16 %v1531
  %v1806 = vunpack.c.h.b16 %v1531
  %v1807 = vunpack.c.l.b16 %v1532
  %v1808 = vunpack.c.h.b16 %v1532
  %v1809 = vunpack.c.l.b16 %v1533
  %v1810 = vunpack.c.h.b16 %v1533
  %v1811 = vunpack.c.l.b16 %v1534
  %v1812 = vunpack.c.h.b16 %v1534
  %v1813 = vunpack.c.l.b16 %v1535
  %v1814 = vunpack.c.h.b16 %v1535
  %v1815 = vunpack.c.l.b16 %v1536
  %v1816 = vunpack.c.h.b16 %v1536
  %v1817 = vunpack.c.l.b16 %v1537
  %v1818 = vunpack.c.h.b16 %v1537
  %v1819 = vunpack.c.l.b16 %v1538
  %v1820 = vunpack.c.h.b16 %v1538
  %v1821 = vunpack.c.l.b16 %v1539
  %v1822 = vunpack.c.h.b16 %v1539
  %v1823 = vunpack.c.l.b16 %v1540
  %v1824 = vunpack.c.h.b16 %v1540
  %v1825 = vunpack.c.l.b16 %v1541
  %v1826 = vunpack.c.h.b16 %v1541
  %v1827 = vunpack.c.l.b16 %v1542
  %v1828 = vunpack.c.h.b16 %v1542
  %v1829 = vunpack.c.l.b16 %v1543
  %v1830 = vunpack.c.h.b16 %v1543
  %v1831 = vunpack.c.l.b16 %v1544
  %v1832 = vunpack.c.h.b16 %v1544
  %v1833 = vunpack.c.l.b16 %v1545
  %v1834 = vunpack.c.h.b16 %v1545
  %v1835 = vunpack.c.l.b16 %v1546
  %v1836 = vunpack.c.h.b16 %v1546
  %v1837 = vunpack.c.l.b16 %v1547
  %v1838 = vunpack.c.h.b16 %v1547
  %v1839 = vunpack.c.l.b16 %v1548
  %v1840 = vunpack.c.h.b16 %v1548
  %v1841 = vunpack.c.l.b16 %v1549
  %v1842 = vunpack.c.h.b16 %v1549
  %v1843 = vunpack.c.l.b16 %v1550
  %v1844 = vunpack.c.h.b16 %v1550
  %v1845 = vunpack.c.l.b16 %v1551
  %v1846 = vunpack.c.h.b16 %v1551
  %v1847 = vunpack.c.l.b16 %v1552
  %v1848 = vunpack.c.h.b16 %v1552
  %v1849 = vunpack.c.l.b16 %v1553
  %v1850 = vunpack.c.h.b16 %v1553
  %v1851 = vunpack.c.l.b16 %v1554
  %v1852 = vunpack.c.h.b16 %v1554
  %v1853 = vunpack.c.l.b16 %v1555
  %v1854 = vunpack.c.h.b16 %v1555
  %v1855 = vunpack.c.l.b16 %v1556
  %v1856 = vunpack.c.h.b16 %v1556
  %v1857 = vunpack.c.l.b16 %v1557
  %v1858 = vunpack.c.h.b16 %v1557
  %v1859 = vunpack.c.l.b16 %v1558
  %v1860 = vunpack.c.h.b16 %v1558
  %v1861 = vunpack.c.l.b16 %v1559
  %v1862 = vunpack.c.h.b16 %v1559
  %v1863 = vunpack.c.l.b16 %v1560
  %v1864 = vunpack.c.h.b16 %v1560
  %v1865 = vunpack.c.l.b16 %v1561
  %v1866 = vunpack.c.h.b16 %v1561
  %v1867 = vunpack.c.l.b16 %v1562
  %v1868 = vunpack.c.h.b16 %v1562
  %v1869 = vunpack.c.l.b16 %v1563
  %v1870 = vunpack.c.h.b16 %v1563
  %v1871 = vunpack.c.l.b16 %v1564
  %v1872 = vunpack.c.h.b16 %v1564
  %v1873 = vunpack.c.l.b16 %v1565
  %v1874 = vunpack.c.h.b16 %v1565
  %v1875 = vunpack.c.l.b16 %v1566
  %v1876 = vunpack.c.h.b16 %v1566
  %v1877 = vunpack.c.l.b16 %v1567
  %v1878 = vunpack.c.h.b16 %v1567
  %v1879 = vunpack.c.l.b16 %v1568
  %v1880 = vunpack.c.h.b16 %v1568
  %v1881 = vunpack.c.l.b16 %v1569
  %v1882 = vunpack.c.h.b16 %v1569
  %v1883 = vunpack.c.l.b16 %v1570
  %v1884 = vunpack.c.h.b16 %v1570
  %v1885 = vunpack.c.l.b16 %v1571
  %v1886 = vunpack.c.h.b16 %v1571
  %v1887 = vunpack.c.l.b16 %v1572
  %v1888 = vunpack.c.h.b16 %v1572
  %v1889 = vunpack.c.l.b16 %v1573
  %v1890 = vunpack.c.h.b16 %v1573
  %v1891 = vunpack.c.l.b16 %v1574
  %v1892 = vunpack.c.h.b16 %v1574
  %v1893 = vunpack.c.l.b16 %v1575
  %v1894 = vunpack.c.h.b16 %v1575
  %v1895 = vunpack.c.l.b16 %v1576
  %v1896 = vunpack.c.h.b16 %v1576
  %v1897 = vunpack.c.l.b16 %v1577
  %v1898 = vunpack.c.h.b16 %v1577
  %v1899 = vunpack.c.l.b16 %v1578
  %v1900 = vunpack.c.h.b16 %v1578
  %v1901 = vunpack.c.l.b16 %v1579
  %v1902 = vunpack.c.h.b16 %v1579
  %v1903 = vunpack.c.l.b16 %v1580
  %v1904 = vunpack.c.h.b16 %v1580
  %v1905 = vunpack.c.l.b16 %v1581
  %v1906 = vunpack.c.h.b16 %v1581
  %v1907 = vunpack.c.l.b16 %v1582
  %v1908 = vunpack.c.h.b16 %v1582
  %v1909 = vunpack.c.l.b16 %v1583
  %v1910 = vunpack.c.h.b16 %v1583
  %v1911 = vunpack.c.l.b16 %v1584
  %v1912 = vunpack.c.h.b16 %v1584
  %v1913 = vunpack.c.l.b16 %v1585
  %v1914 = vunpack.c.h.b16 %v1585
  %v1915 = vunpack.c.l.b16 %v1586
  %v1916 = vunpack.c.h.b16 %v1586
  %v1917 = vunpack.c.l.b16 %v1587
  %v1918 = vunpack.c.h.b16 %v1587
  %v1919 = vunpack.c.l.b16 %v1588
  %v1920 = vunpack.c.h.b16 %v1588
  %v1921 = vunpack.c.l.b16 %v1589
  %v1922 = vunpack.c.h.b16 %v1589
  %v1923 = vunpack.c.l.b16 %v1590
  %v1924 = vunpack.c.h.b16 %v1590
  %v1925 = vunpack.c.l.b16 %v1591
  %v1926 = vunpack.c.h.b16 %v1591
  %v1927 = vunpack.c.l.b16 %v1592
  %v1928 = vunpack.c.h.b16 %v1592
  %v1929 = vunpack.c.l.b16 %v1593
  %v1930 = vunpack.c.h.b16 %v1593
  %v1931 = vunpack.c.l.b16 %v1594
  %v1932 = vunpack.c.h.b16 %v1594
  %v1933 = vunpack.c.l.b16 %v1595
  %v1934 = vunpack.c.h.b16 %v1595
  %v1935 = vunpack.c.l.b16 %v1596
  %v1936 = vunpack.c.h.b16 %v1596
  %v1937 = vunpack.c.l.b16 %v1597
  %v1938 = vunpack.c.h.b16 %v1597
  %v1939 = vunpack.c.l.b16 %v1598
  %v1940 = vunpack.c.h.b16 %v1598
  %v1941 = vunpack.c.l.b16 %v1599
  %v1942 = vunpack.c.h.b16 %v1599
  %v1943 = vunpack.c.l.b16 %v1600
  %v1944 = vunpack.c.h.b16 %v1600
  %v1945 = vunpack.c.l.b16 %v1601
  %v1946 = vunpack.c.h.b16 %v1601
  %v1947 = vunpack.c.l.b16 %v1602
  %v1948 = vunpack.c.h.b16 %v1602
  %v1949 = vunpack.c.l.b16 %v1603
  %v1950 = vunpack.c.h.b16 %v1603
  %v1951 = vunpack.c.l.b16 %v1604
  %v1952 = vunpack.c.h.b16 %v1604
  %v1953 = vunpack.c.l.b16 %v1605
  %v1954 = vunpack.c.h.b16 %v1605
  %v1955 = vunpack.c.l.b16 %v1606
  %v1956 = vunpack.c.h.b16 %v1606
  %v1957 = vunpack.c.l.b16 %v1607
  %v1958 = vunpack.c.h.b16 %v1607
  %v1959 = vunpack.c.l.b16 %v1608
  %v1960 = vunpack.c.h.b16 %v1608
  %v1961 = vunpack.c.l.b16 %v1609
  %v1962 = vunpack.c.h.b16 %v1609
  %v1963 = vunpack.c.l.b16 %v1610
  %v1964 = vunpack.c.h.b16 %v1610
  %v1965 = vunpack.c.l.b16 %v1611
  %v1966 = vunpack.c.h.b16 %v1611
  %v1967 = vunpack.c.l.b16 %v1612
  %v1968 = vunpack.c.h.b16 %v1612
  %v1969 = vunpack.c.l.b16 %v1613
  %v1970 = vunpack.c.h.b16 %v1613
  %v1971 = vunpack.c.l.b16 %v1614
  %v1972 = vunpack.c.h.b16 %v1614
  %v1973 = vunpack.c.l.b16 %v1615
  %v1974 = vunpack.c.h.b16 %v1615
  %v1975 = vunpack.c.l.b16 %v1616
  %v1976 = vunpack.c.h.b16 %v1616
  %v1977 = vunpack.c.l.b16 %v1617
  %v1978 = vunpack.c.h.b16 %v1617
  %v1979 = vunpack.c.l.b16 %v1618
  %v1980 = vunpack.c.h.b16 %v1618
  %v1981 = vunpack.c.l.b16 %v1619
  %v1982 = vunpack.c.h.b16 %v1619
  %v1983 = vunpack.c.l.b16 %v1620
  %v1984 = vunpack.c.h.b16 %v1620
  %v1985 = vunpack.c.l.b16 %v1621
  %v1986 = vunpack.c.h.b16 %v1621
  %v1987 = vunpack.c.l.b16 %v1622
  %v1988 = vunpack.c.h.b16 %v1622
  %v1989 = vunpack.c.l.b16 %v1623
  %v1990 = vunpack.c.h.b16 %v1623
  %v1991 = vunpack.c.l.b16 %v1624
  %v1992 = vunpack.c.h.b16 %v1624
  %v1993 = vunpack.c.l.b16 %v1625
  %v1994 = vunpack.c.h.b16 %v1625
  %v1995 = vunpack.c.l.b16 %v1626
  %v1996 = vunpack.c.h.b16 %v1626
  %v1997 = vunpack.c.l.b16 %v1627
  %v1998 = vunpack.c.h.b16 %v1627
  %v1999 = vunpack.c.l.b16 %v1628
  %v2000 = vunpack.c.h.b16 %v1628
  %v2001 = vunpack.c.l.b16 %v1629
  %v2002 = vunpack.c.h.b16 %v1629
  %v2003 = vunpack.c.l.b16 %v1630
  %v2004 = vunpack.c.h.b16 %v1630
  %v2005 = vunpack.c.l.b16 %v1631
  %v2006 = vunpack.c.h.b16 %v1631
  %v2007 = vunpack.c.l.b16 %v1632
  %v2008 = vunpack.c.h.b16 %v1632
  %v2009 = vunpack.c.l.b16 %v1633
  %v2010 = vunpack.c.h.b16 %v1633
  %v2011 = vunpack.c.l.b16 %v1634
  %v2012 = vunpack.c.h.b16 %v1634
  %v2013 = vunpack.c.l.b16 %v1635
  %v2014 = vunpack.c.h.b16 %v1635
  %v2015 = vunpack.c.l.b16 %v1636
  %v2016 = vunpack.c.h.b16 %v1636
  %v2017 = vunpack.c.l.b16 %v1637
  %v2018 = vunpack.c.h.b16 %v1637
  %v2019 = vunpack.c.l.b16 %v1638
  %v2020 = vunpack.c.h.b16 %v1638
  %v2021 = vunpack.c.l.b16 %v1639
  %v2022 = vunpack.c.h.b16 %v1639
  %v2023 = vunpack.c.l.b16 %v1640
  %v2024 = vunpack.c.h.b16 %v1640
  %v2025 = vunpack.c.l.b16 %v1641
  %v2026 = vunpack.c.h.b16 %v1641
  %v2027 = vunpack.c.l.b16 %v1642
  %v2028 = vunpack.c.h.b16 %v1642
  %v2029 = vunpack.c.l.b16 %v1643
  %v2030 = vunpack.c.h.b16 %v1643
  %v2031 = vunpack.c.l.b16 %v1644
  %v2032 = vunpack.c.h.b16 %v1644
  %v2033 = vunpack.c.l.b16 %v1645
  %v2034 = vunpack.c.h.b16 %v1645
  %v2035 = vunpack.c.l.b16 %v1646
  %v2036 = vunpack.c.h.b16 %v1646
  %v2037 = vunpack.c.l.b16 %v1647
  %v2038 = vunpack.c.h.b16 %v1647
  %v2039 = vunpack.c.l.b16 %v1648
  %v2040 = vunpack.c.h.b16 %v1648
  %v2041 = vunpack.c.l.b16 %v1649
  %v2042 = vunpack.c.h.b16 %v1649
  %v2043 = vunpack.c.l.b16 %v1650
  %v2044 = vunpack.c.h.b16 %v1650
  %v2045 = vpack.c.b16 %v1793, %v1789
  %v2046 = vpack.c.b16 %v1794, %v1790
  %v2047 = vpack.c.b16 %v1795, %v1791
  %v2048 = vpack.c.b16 %v1796, %v1792
  %v2049 = vpack.c.b16 %v1801, %v1797
  %v2050 = vpack.c.b16 %v1802, %v1798
  %v2051 = vpack.c.b16 %v1803, %v1799
  %v2052 = vpack.c.b16 %v1804, %v1800
  %v2053 = vpack.c.b16 %v1809, %v1805
  %v2054 = vpack.c.b16 %v1810, %v1806
  %v2055 = vpack.c.b16 %v1811, %v1807
  %v2056 = vpack.c.b16 %v1812, %v1808
  %v2057 = vpack.c.b16 %v1817, %v1813
  %v2058 = vpack.c.b16 %v1818, %v1814
  %v2059 = vpack.c.b16 %v1819, %v1815
  %v2060 = vpack.c.b16 %v1820, %v1816
  %v2061 = vpack.c.b16 %v1825, %v1821
  %v2062 = vpack.c.b16 %v1826, %v1822
  %v2063 = vpack.c.b16 %v1827, %v1823
  %v2064 = vpack.c.b16 %v1828, %v1824
  %v2065 = vpack.c.b16 %v1833, %v1829
  %v2066 = vpack.c.b16 %v1834, %v1830
  %v2067 = vpack.c.b16 %v1835, %v1831
  %v2068 = vpack.c.b16 %v1836, %v1832
  %v2069 = vpack.c.b16 %v1841, %v1837
  %v2070 = vpack.c.b16 %v1842, %v1838
  %v2071 = vpack.c.b16 %v1843, %v1839
  %v2072 = vpack.c.b16 %v1844, %v1840
  %v2073 = vpack.c.b16 %v1849, %v1845
  %v2074 = vpack.c.b16 %v1850, %v1846
  %v2075 = vpack.c.b16 %v1851, %v1847
  %v2076 = vpack.c.b16 %v1852, %v1848
  %v2077 = vpack.c.b16 %v1857, %v1853
  %v2078 = vpack.c.b16 %v1858, %v1854
  %v2079 = vpack.c.b16 %v1859, %v1855
  %v2080 = vpack.c.b16 %v1860, %v1856
  %v2081 = vpack.c.b16 %v1865, %v1861
  %v2082 = vpack.c.b16 %v1866, %v1862
  %v2083 = vpack.c.b16 %v1867, %v1863
  %v2084 = vpack.c.b16 %v1868, %v1864
  %v2085 = vpack.c.b16 %v1873, %v1869
  %v2086 = vpack.c.b16 %v1874, %v1870
  %v2087 = vpack.c.b16 %v1875, %v1871
  %v2088 = vpack.c.b16 %v1876, %v1872
  %v2089 = vpack.c.b16 %v1881, %v1877
  %v2090 = vpack.c.b16 %v1882, %v1878
  %v2091 = vpack.c.b16 %v1883, %v1879
  %v2092 = vpack.c.b16 %v1884, %v1880
  %v2093 = vpack.c.b16 %v1889, %v1885
  %v2094 = vpack.c.b16 %v1890, %v1886
  %v2095 = vpack.c.b16 %v1891, %v1887
  %v2096 = vpack.c.b16 %v1892, %v1888
  %v2097 = vpack.c.b16 %v1897, %v1893
  %v2098 = vpack.c.b16 %v1898, %v1894
  %v2099 = vpack.c.b16 %v1899, %v1895
  %v2100 = vpack.c.b16 %v1900, %v1896
  %v2101 = vpack.c.b16 %v1905, %v1901
  %v2102 = vpack.c.b16 %v1906, %v1902
  %v2103 = vpack.c.b16 %v1907, %v1903
  %v2104 = vpack.c.b16 %v1908, %v1904
  %v2105 = vpack.c.b16 %v1913, %v1909
  %v2106 = vpack.c.b16 %v1914, %v1910
  %v2107 = vpack.c.b16 %v1915, %v1911
  %v2108 = vpack.c.b16 %v1916, %v1912
  %v2109 = vpack.c.b16 %v1921, %v1917
  %v2110 = vpack.c.b16 %v1922, %v1918
  %v2111 = vpack.c.b16 %v1923, %v1919
  %v2112 = vpack.c.b16 %v1924, %v1920
  %v2113 = vpack.c.b16 %v1929, %v1925
  %v2114 = vpack.c.b16 %v1930, %v1926
  %v2115 = vpack.c.b16 %v1931, %v1927
  %v2116 = vpack.c.b16 %v1932, %v1928
  %v2117 = vpack.c.b16 %v1937, %v1933
  %v2118 = vpack.c.b16 %v1938, %v1934
  %v2119 = vpack.c.b16 %v1939, %v1935
  %v2120 = vpack.c.b16 %v1940, %v1936
  %v2121 = vpack.c.b16 %v1945, %v1941
  %v2122 = vpack.c.b16 %v1946, %v1942
  %v2123 = vpack.c.b16 %v1947, %v1943
  %v2124 = vpack.c.b16 %v1948, %v1944
  %v2125 = vpack.c.b16 %v1953, %v1949
  %v2126 = vpack.c.b16 %v1954, %v1950
  %v2127 = vpack.c.b16 %v1955, %v1951
  %v2128 = vpack.c.b16 %v1956, %v1952
  %v2129 = vpack.c.b16 %v1961, %v1957
  %v2130 = vpack.c.b16 %v1962, %v1958
  %v2131 = vpack.c.b16 %v1963, %v1959
  %v2132 = vpack.c.b16 %v1964, %v1960
  %v2133 = vpack.c.b16 %v1969, %v1965
  %v2134 = vpack.c.b16 %v1970, %v1966
  %v2135 = vpack.c.b16 %v1971, %v1967
  %v2136 = vpack.c.b16 %v1972, %v1968
  %v2137 = vpack.c.b16 %v1977, %v1973
  %v2138 = vpack.c.b16 %v1978, %v1974
  %v2139 = vpack.c.b16 %v1979, %v1975
  %v2140 = vpack.c.b16 %v1980, %v1976
  %v2141 = vpack.c.b16 %v1985, %v1981
  %v2142 = vpack.c.b16 %v1986, %v1982
  %v2143 = vpack.c.b16 %v1987, %v1983
  %v2144 = vpack.c.b16 %v1988, %v1984
  %v2145 = vpack.c.b16 %v1993, %v1989
  %v2146 = vpack.c.b16 %v1994, %v1990
  %v2147 = vpack.c.b16 %v1995, %v1991
  %v2148 = vpack.c.b16 %v1996, %v1992
  %v2149 = vpack.c.b16 %v2001, %v1997
  %v2150 = vpack.c.b16 %v2002, %v1998
  %v2151 = vpack.c.b16 %v2003, %v1999
  %v2152 = vpack.c.b16 %v2004, %v2000
  %v2153 = vpack.c.b16 %v2009, %v2005
  %v2154 = vpack.c.b16 %v2010, %v2006
  %v2155 = vpack.c.b16 %v2011, %v2007
  %v2156 = vpack.c.b16 %v2012, %v2008
  %v2157 = vpack.c.b16 %v2017, %v2013
  %v2158 = vpack.c.b16 %v2018, %v2014
  %v2159 = vpack.c.b16 %v2019, %v2015
  %v2160 = vpack.c.b16 %v2020, %v2016
  %v2161 = vpack.c.b16 %v2025, %v2021
  %v2162 = vpack.c.b16 %v2026, %v2022
  %v2163 = vpack.c.b16 %v2027, %v2023
  %v2164 = vpack.c.b16 %v2028, %v2024
  %v2165 = vpack.c.b16 %v2033, %v2029
  %v2166 = vpack.c.b16 %v2034, %v2030
  %v2167 = vpack.c.b16 %v2035, %v2031
  %v2168 = vpack.c.b16 %v2036, %v2032
  %v2169 = vpack.c.b16 %v2041, %v2037
  %v2170 = vpack.c.b16 %v2042, %v2038
  %v2171 = vpack.c.b16 %v2043, %v2039
  %v2172 = vpack.c.b16 %v2044, %v2040
  %2301 = vmatpush.bf16.msra.mxu0 %v2073
  %2302 = vmatpush.bf16.msra.mxu0 %v2069
  %2303 = vmatpush.bf16.msra.mxu0 %v2065
  %2304 = vmatpush.bf16.msra.mxu0 %v2061
  %2305 = vmatpush.bf16.msra.mxu0 %v2057
  %2306 = vmatpush.bf16.msra.mxu0 %v2053
  %2307 = vmatpush.bf16.msra.mxu0 %v2049
  %2308 = vmatpush.bf16.msra.mxu0 %v2045
  %2309 = vmatmul.bf16.gmra.mxu0 %v1491
  %v2310 = vpop.f32.mrf.mxu0
  %v2311 = vadd.f32 %v1653, %v2310
  %v2312 = vpop.f32.mrf.mxu0
  %v2313 = vadd.f32 %v1653, %v2312
  %2314 = vmatmul.bf16.gmra.mxu0 %v1495
  %v2315 = vpop.f32.mrf.mxu0
  %v2316 = vadd.f32 %v1653, %v2315
  %v2317 = vpop.f32.mrf.mxu0
  %v2318 = vadd.f32 %v1653, %v2317
  %2319 = vmatmul.bf16.gmra.mxu0 %v1499
  %v2320 = vpop.f32.mrf.mxu0
  %v2321 = vadd.f32 %v1653, %v2320
  %v2322 = vpop.f32.mrf.mxu0
  %v2323 = vadd.f32 %v1653, %v2322
  %2324 = vmatmul.bf16.gmra.mxu0 %v1503
  %v2325 = vpop.f32.mrf.mxu0
  %v2326 = vadd.f32 %v1653, %v2325
  %v2327 = vpop.f32.mrf.mxu0
  %v2328 = vadd.f32 %v1653, %v2327
  %2329 = vmatmul.bf16.gmra.mxu0 %v1507
  %v2330 = vpop.f32.mrf.mxu0
  %v2331 = vadd.f32 %v1653, %v2330
  %v2332 = vpop.f32.mrf.mxu0
  %v2333 = vadd.f32 %v1653, %v2332
  %2334 = vmatmul.bf16.gmra.mxu0 %v1511
  %v2335 = vpop.f32.mrf.mxu0
  %v2336 = vadd.f32 %v1653, %v2335
  %v2337 = vpop.f32.mrf.mxu0
  %v2338 = vadd.f32 %v1653, %v2337
  %2339 = vmatmul.bf16.gmra.mxu0 %v1515
  %v2340 = vpop.f32.mrf.mxu0
  %v2341 = vadd.f32 %v1653, %v2340
  %v2342 = vpop.f32.mrf.mxu0
  %v2343 = vadd.f32 %v1653, %v2342
  %2344 = vmatmul.bf16.gmra.mxu0 %v1519
  %v2345 = vpop.f32.mrf.mxu0
  %v2346 = vadd.f32 %v1653, %v2345
  %v2347 = vpop.f32.mrf.mxu0
  %v2348 = vadd.f32 %v1653, %v2347
  %2349 = vdwg.mxu0
  %2350 = vmatpush.bf16.msra.mxu0 %v2105
  %2351 = vmatpush.bf16.msra.mxu0 %v2101
  %2352 = vmatpush.bf16.msra.mxu0 %v2097
  %2353 = vmatpush.bf16.msra.mxu0 %v2093
  %2354 = vmatpush.bf16.msra.mxu0 %v2089
  %2355 = vmatpush.bf16.msra.mxu0 %v2085
  %2356 = vmatpush.bf16.msra.mxu0 %v2081
  %2357 = vmatpush.bf16.msra.mxu0 %v2077
  %2358 = vmatmul.bf16.gmra.mxu0 %v1492
  %v2359 = vpop.f32.mrf.mxu0
  %v2360 = vadd.f32 %v2311, %v2359
  %v2361 = vpop.f32.mrf.mxu0
  %v2362 = vadd.f32 %v2313, %v2361
  %2363 = vmatmul.bf16.gmra.mxu0 %v1496
  %v2364 = vpop.f32.mrf.mxu0
  %v2365 = vadd.f32 %v2316, %v2364
  %v2366 = vpop.f32.mrf.mxu0
  %v2367 = vadd.f32 %v2318, %v2366
  %2368 = vmatmul.bf16.gmra.mxu0 %v1500
  %v2369 = vpop.f32.mrf.mxu0
  %v2370 = vadd.f32 %v2321, %v2369
  %v2371 = vpop.f32.mrf.mxu0
  %v2372 = vadd.f32 %v2323, %v2371
  %2373 = vmatmul.bf16.gmra.mxu0 %v1504
  %v2374 = vpop.f32.mrf.mxu0
  %v2375 = vadd.f32 %v2326, %v2374
  %v2376 = vpop.f32.mrf.mxu0
  %v2377 = vadd.f32 %v2328, %v2376
  %2378 = vmatmul.bf16.gmra.mxu0 %v1508
  %v2379 = vpop.f32.mrf.mxu0
  %v2380 = vadd.f32 %v2331, %v2379
  %v2381 = vpop.f32.mrf.mxu0
  %v2382 = vadd.f32 %v2333, %v2381
  %2383 = vmatmul.bf16.gmra.mxu0 %v1512
  %v2384 = vpop.f32.mrf.mxu0
  %v2385 = vadd.f32 %v2336, %v2384
  %v2386 = vpop.f32.mrf.mxu0
  %v2387 = vadd.f32 %v2338, %v2386
  %2388 = vmatmul.bf16.gmra.mxu0 %v1516
  %v2389 = vpop.f32.mrf.mxu0
  %v2390 = vadd.f32 %v2341, %v2389
  %v2391 = vpop.f32.mrf.mxu0
  %v2392 = vadd.f32 %v2343, %v2391
  %2393 = vmatmul.bf16.gmra.mxu0 %v1520
  %v2394 = vpop.f32.mrf.mxu0
  %v2395 = vadd.f32 %v2346, %v2394
  %v2396 = vpop.f32.mrf.mxu0
  %v2397 = vadd.f32 %v2348, %v2396
  %2398 = vdwg.mxu0
  %2399 = vmatpush.bf16.msra.mxu0 %v2137
  %2400 = vmatpush.bf16.msra.mxu0 %v2133
  %2401 = vmatpush.bf16.msra.mxu0 %v2129
  %2402 = vmatpush.bf16.msra.mxu0 %v2125
  %2403 = vmatpush.bf16.msra.mxu0 %v2121
  %2404 = vmatpush.bf16.msra.mxu0 %v2117
  %2405 = vmatpush.bf16.msra.mxu0 %v2113
  %2406 = vmatpush.bf16.msra.mxu0 %v2109
  %2407 = vmatmul.bf16.gmra.mxu0 %v1493
  %v2408 = vpop.f32.mrf.mxu0
  %v2409 = vadd.f32 %v2360, %v2408
  %v2410 = vpop.f32.mrf.mxu0
  %v2411 = vadd.f32 %v2362, %v2410
  %2412 = vmatmul.bf16.gmra.mxu0 %v1497
  %v2413 = vpop.f32.mrf.mxu0
  %v2414 = vadd.f32 %v2365, %v2413
  %v2415 = vpop.f32.mrf.mxu0
  %v2416 = vadd.f32 %v2367, %v2415
  %2417 = vmatmul.bf16.gmra.mxu0 %v1501
  %v2418 = vpop.f32.mrf.mxu0
  %v2419 = vadd.f32 %v2370, %v2418
  %v2420 = vpop.f32.mrf.mxu0
  %v2421 = vadd.f32 %v2372, %v2420
  %2422 = vmatmul.bf16.gmra.mxu0 %v1505
  %v2423 = vpop.f32.mrf.mxu0
  %v2424 = vadd.f32 %v2375, %v2423
  %v2425 = vpop.f32.mrf.mxu0
  %v2426 = vadd.f32 %v2377, %v2425
  %2427 = vmatmul.bf16.gmra.mxu0 %v1509
  %v2428 = vpop.f32.mrf.mxu0
  %v2429 = vadd.f32 %v2380, %v2428
  %v2430 = vpop.f32.mrf.mxu0
  %v2431 = vadd.f32 %v2382, %v2430
  %2432 = vmatmul.bf16.gmra.mxu0 %v1513
  %v2433 = vpop.f32.mrf.mxu0
  %v2434 = vadd.f32 %v2385, %v2433
  %v2435 = vpop.f32.mrf.mxu0
  %v2436 = vadd.f32 %v2387, %v2435
  %2437 = vmatmul.bf16.gmra.mxu0 %v1517
  %v2438 = vpop.f32.mrf.mxu0
  %v2439 = vadd.f32 %v2390, %v2438
  %v2440 = vpop.f32.mrf.mxu0
  %v2441 = vadd.f32 %v2392, %v2440
  %2442 = vmatmul.bf16.gmra.mxu0 %v1521
  %v2443 = vpop.f32.mrf.mxu0
  %v2444 = vadd.f32 %v2395, %v2443
  %v2445 = vpop.f32.mrf.mxu0
  %v2446 = vadd.f32 %v2397, %v2445
  %2447 = vdwg.mxu0
  %2448 = vmatpush.bf16.msra.mxu0 %v2169
  %2449 = vmatpush.bf16.msra.mxu0 %v2165
  %2450 = vmatpush.bf16.msra.mxu0 %v2161
  %2451 = vmatpush.bf16.msra.mxu0 %v2157
  %2452 = vmatpush.bf16.msra.mxu0 %v2153
  %2453 = vmatpush.bf16.msra.mxu0 %v2149
  %2454 = vmatpush.bf16.msra.mxu0 %v2145
  %2455 = vmatpush.bf16.msra.mxu0 %v2141
  %2456 = vmatmul.bf16.gmra.mxu0 %v1494
  %v2457 = vpop.f32.mrf.mxu0
  %v2458 = vadd.f32 %v2409, %v2457
  %v2459 = vpop.f32.mrf.mxu0
  %v2460 = vadd.f32 %v2411, %v2459
  %2461 = vmatmul.bf16.gmra.mxu0 %v1498
  %v2462 = vpop.f32.mrf.mxu0
  %v2463 = vadd.f32 %v2414, %v2462
  %v2464 = vpop.f32.mrf.mxu0
  %v2465 = vadd.f32 %v2416, %v2464
  %2466 = vmatmul.bf16.gmra.mxu0 %v1502
  %v2467 = vpop.f32.mrf.mxu0
  %v2468 = vadd.f32 %v2419, %v2467
  %v2469 = vpop.f32.mrf.mxu0
  %v2470 = vadd.f32 %v2421, %v2469
  %2471 = vmatmul.bf16.gmra.mxu0 %v1506
  %v2472 = vpop.f32.mrf.mxu0
  %v2473 = vadd.f32 %v2424, %v2472
  %v2474 = vpop.f32.mrf.mxu0
  %v2475 = vadd.f32 %v2426, %v2474
  %2476 = vmatmul.bf16.gmra.mxu0 %v1510
  %v2477 = vpop.f32.mrf.mxu0
  %v2478 = vadd.f32 %v2429, %v2477
  %v2479 = vpop.f32.mrf.mxu0
  %v2480 = vadd.f32 %v2431, %v2479
  %2481 = vmatmul.bf16.gmra.mxu0 %v1514
  %v2482 = vpop.f32.mrf.mxu0
  %v2483 = vadd.f32 %v2434, %v2482
  %v2484 = vpop.f32.mrf.mxu0
  %v2485 = vadd.f32 %v2436, %v2484
  %2486 = vmatmul.bf16.gmra.mxu0 %v1518
  %v2487 = vpop.f32.mrf.mxu0
  %v2488 = vadd.f32 %v2439, %v2487
  %v2489 = vpop.f32.mrf.mxu0
  %v2490 = vadd.f32 %v2441, %v2489
  %2491 = vmatmul.bf16.gmra.mxu0 %v1522
  %v2492 = vpop.f32.mrf.mxu0
  %v2493 = vadd.f32 %v2444, %v2492
  %v2494 = vpop.f32.mrf.mxu0
  %v2495 = vadd.f32 %v2446, %v2494
  %2496 = vdwg.mxu0
  %2497 = vmatpush.bf16.msra.mxu0 %v2074
  %2498 = vmatpush.bf16.msra.mxu0 %v2070
  %2499 = vmatpush.bf16.msra.mxu0 %v2066
  %2500 = vmatpush.bf16.msra.mxu0 %v2062
  %2501 = vmatpush.bf16.msra.mxu0 %v2058
  %2502 = vmatpush.bf16.msra.mxu0 %v2054
  %2503 = vmatpush.bf16.msra.mxu0 %v2050
  %2504 = vmatpush.bf16.msra.mxu0 %v2046
  %2505 = vmatmul.bf16.gmra.mxu0 %v1491
  %v2506 = vpop.f32.mrf.mxu0
  %v2507 = vadd.f32 %v1654, %v2506
  %v2508 = vpop.f32.mrf.mxu0
  %v2509 = vadd.f32 %v1654, %v2508
  %2510 = vmatmul.bf16.gmra.mxu0 %v1495
  %v2511 = vpop.f32.mrf.mxu0
  %v2512 = vadd.f32 %v1654, %v2511
  %v2513 = vpop.f32.mrf.mxu0
  %v2514 = vadd.f32 %v1654, %v2513
  %2515 = vmatmul.bf16.gmra.mxu0 %v1499
  %v2516 = vpop.f32.mrf.mxu0
  %v2517 = vadd.f32 %v1654, %v2516
  %v2518 = vpop.f32.mrf.mxu0
  %v2519 = vadd.f32 %v1654, %v2518
  %2520 = vmatmul.bf16.gmra.mxu0 %v1503
  %v2521 = vpop.f32.mrf.mxu0
  %v2522 = vadd.f32 %v1654, %v2521
  %v2523 = vpop.f32.mrf.mxu0
  %v2524 = vadd.f32 %v1654, %v2523
  %2525 = vmatmul.bf16.gmra.mxu0 %v1507
  %v2526 = vpop.f32.mrf.mxu0
  %v2527 = vadd.f32 %v1654, %v2526
  %v2528 = vpop.f32.mrf.mxu0
  %v2529 = vadd.f32 %v1654, %v2528
  %2530 = vmatmul.bf16.gmra.mxu0 %v1511
  %v2531 = vpop.f32.mrf.mxu0
  %v2532 = vadd.f32 %v1654, %v2531
  %v2533 = vpop.f32.mrf.mxu0
  %v2534 = vadd.f32 %v1654, %v2533
  %2535 = vmatmul.bf16.gmra.mxu0 %v1515
  %v2536 = vpop.f32.mrf.mxu0
  %v2537 = vadd.f32 %v1654, %v2536
  %v2538 = vpop.f32.mrf.mxu0
  %v2539 = vadd.f32 %v1654, %v2538
  %2540 = vmatmul.bf16.gmra.mxu0 %v1519
  %v2541 = vpop.f32.mrf.mxu0
  %v2542 = vadd.f32 %v1654, %v2541
  %v2543 = vpop.f32.mrf.mxu0
  %v2544 = vadd.f32 %v1654, %v2543
  %2545 = vdwg.mxu0
  %2546 = vmatpush.bf16.msra.mxu0 %v2106
  %2547 = vmatpush.bf16.msra.mxu0 %v2102
  %2548 = vmatpush.bf16.msra.mxu0 %v2098
  %2549 = vmatpush.bf16.msra.mxu0 %v2094
  %2550 = vmatpush.bf16.msra.mxu0 %v2090
  %2551 = vmatpush.bf16.msra.mxu0 %v2086
  %2552 = vmatpush.bf16.msra.mxu0 %v2082
  %2553 = vmatpush.bf16.msra.mxu0 %v2078
  %2554 = vmatmul.bf16.gmra.mxu0 %v1492
  %v2555 = vpop.f32.mrf.mxu0
  %v2556 = vadd.f32 %v2507, %v2555
  %v2557 = vpop.f32.mrf.mxu0
  %v2558 = vadd.f32 %v2509, %v2557
  %2559 = vmatmul.bf16.gmra.mxu0 %v1496
  %v2560 = vpop.f32.mrf.mxu0
  %v2561 = vadd.f32 %v2512, %v2560
  %v2562 = vpop.f32.mrf.mxu0
  %v2563 = vadd.f32 %v2514, %v2562
  %2564 = vmatmul.bf16.gmra.mxu0 %v1500
  %v2565 = vpop.f32.mrf.mxu0
  %v2566 = vadd.f32 %v2517, %v2565
  %v2567 = vpop.f32.mrf.mxu0
  %v2568 = vadd.f32 %v2519, %v2567
  %2569 = vmatmul.bf16.gmra.mxu0 %v1504
  %v2570 = vpop.f32.mrf.mxu0
  %v2571 = vadd.f32 %v2522, %v2570
  %v2572 = vpop.f32.mrf.mxu0
  %v2573 = vadd.f32 %v2524, %v2572
  %2574 = vmatmul.bf16.gmra.mxu0 %v1508
  %v2575 = vpop.f32.mrf.mxu0
  %v2576 = vadd.f32 %v2527, %v2575
  %v2577 = vpop.f32.mrf.mxu0
  %v2578 = vadd.f32 %v2529, %v2577
  %2579 = vmatmul.bf16.gmra.mxu0 %v1512
  %v2580 = vpop.f32.mrf.mxu0
  %v2581 = vadd.f32 %v2532, %v2580
  %v2582 = vpop.f32.mrf.mxu0
  %v2583 = vadd.f32 %v2534, %v2582
  %2584 = vmatmul.bf16.gmra.mxu0 %v1516
  %v2585 = vpop.f32.mrf.mxu0
  %v2586 = vadd.f32 %v2537, %v2585
  %v2587 = vpop.f32.mrf.mxu0
  %v2588 = vadd.f32 %v2539, %v2587
  %2589 = vmatmul.bf16.gmra.mxu0 %v1520
  %v2590 = vpop.f32.mrf.mxu0
  %v2591 = vadd.f32 %v2542, %v2590
  %v2592 = vpop.f32.mrf.mxu0
  %v2593 = vadd.f32 %v2544, %v2592
  %2594 = vdwg.mxu0
  %2595 = vmatpush.bf16.msra.mxu0 %v2138
  %2596 = vmatpush.bf16.msra.mxu0 %v2134
  %2597 = vmatpush.bf16.msra.mxu0 %v2130
  %2598 = vmatpush.bf16.msra.mxu0 %v2126
  %2599 = vmatpush.bf16.msra.mxu0 %v2122
  %2600 = vmatpush.bf16.msra.mxu0 %v2118
  %2601 = vmatpush.bf16.msra.mxu0 %v2114
  %2602 = vmatpush.bf16.msra.mxu0 %v2110
  %2603 = vmatmul.bf16.gmra.mxu0 %v1493
  %v2604 = vpop.f32.mrf.mxu0
  %v2605 = vadd.f32 %v2556, %v2604
  %v2606 = vpop.f32.mrf.mxu0
  %v2607 = vadd.f32 %v2558, %v2606
  %2608 = vmatmul.bf16.gmra.mxu0 %v1497
  %v2609 = vpop.f32.mrf.mxu0
  %v2610 = vadd.f32 %v2561, %v2609
  %v2611 = vpop.f32.mrf.mxu0
  %v2612 = vadd.f32 %v2563, %v2611
  %2613 = vmatmul.bf16.gmra.mxu0 %v1501
  %v2614 = vpop.f32.mrf.mxu0
  %v2615 = vadd.f32 %v2566, %v2614
  %v2616 = vpop.f32.mrf.mxu0
  %v2617 = vadd.f32 %v2568, %v2616
  %2618 = vmatmul.bf16.gmra.mxu0 %v1505
  %v2619 = vpop.f32.mrf.mxu0
  %v2620 = vadd.f32 %v2571, %v2619
  %v2621 = vpop.f32.mrf.mxu0
  %v2622 = vadd.f32 %v2573, %v2621
  %2623 = vmatmul.bf16.gmra.mxu0 %v1509
  %v2624 = vpop.f32.mrf.mxu0
  %v2625 = vadd.f32 %v2576, %v2624
  %v2626 = vpop.f32.mrf.mxu0
  %v2627 = vadd.f32 %v2578, %v2626
  %2628 = vmatmul.bf16.gmra.mxu0 %v1513
  %v2629 = vpop.f32.mrf.mxu0
  %v2630 = vadd.f32 %v2581, %v2629
  %v2631 = vpop.f32.mrf.mxu0
  %v2632 = vadd.f32 %v2583, %v2631
  %2633 = vmatmul.bf16.gmra.mxu0 %v1517
  %v2634 = vpop.f32.mrf.mxu0
  %v2635 = vadd.f32 %v2586, %v2634
  %v2636 = vpop.f32.mrf.mxu0
  %v2637 = vadd.f32 %v2588, %v2636
  %2638 = vmatmul.bf16.gmra.mxu0 %v1521
  %v2639 = vpop.f32.mrf.mxu0
  %v2640 = vadd.f32 %v2591, %v2639
  %v2641 = vpop.f32.mrf.mxu0
  %v2642 = vadd.f32 %v2593, %v2641
  %2643 = vdwg.mxu0
  %2644 = vmatpush.bf16.msra.mxu0 %v2170
  %2645 = vmatpush.bf16.msra.mxu0 %v2166
  %2646 = vmatpush.bf16.msra.mxu0 %v2162
  %2647 = vmatpush.bf16.msra.mxu0 %v2158
  %2648 = vmatpush.bf16.msra.mxu0 %v2154
  %2649 = vmatpush.bf16.msra.mxu0 %v2150
  %2650 = vmatpush.bf16.msra.mxu0 %v2146
  %2651 = vmatpush.bf16.msra.mxu0 %v2142
  %2652 = vmatmul.bf16.gmra.mxu0 %v1494
  %v2653 = vpop.f32.mrf.mxu0
  %v2654 = vadd.f32 %v2605, %v2653
  %v2655 = vpop.f32.mrf.mxu0
  %v2656 = vadd.f32 %v2607, %v2655
  %2657 = vmatmul.bf16.gmra.mxu0 %v1498
  %v2658 = vpop.f32.mrf.mxu0
  %v2659 = vadd.f32 %v2610, %v2658
  %v2660 = vpop.f32.mrf.mxu0
  %v2661 = vadd.f32 %v2612, %v2660
  %2662 = vmatmul.bf16.gmra.mxu0 %v1502
  %v2663 = vpop.f32.mrf.mxu0
  %v2664 = vadd.f32 %v2615, %v2663
  %v2665 = vpop.f32.mrf.mxu0
  %v2666 = vadd.f32 %v2617, %v2665
  %2667 = vmatmul.bf16.gmra.mxu0 %v1506
  %v2668 = vpop.f32.mrf.mxu0
  %v2669 = vadd.f32 %v2620, %v2668
  %v2670 = vpop.f32.mrf.mxu0
  %v2671 = vadd.f32 %v2622, %v2670
  %2672 = vmatmul.bf16.gmra.mxu0 %v1510
  %v2673 = vpop.f32.mrf.mxu0
  %v2674 = vadd.f32 %v2625, %v2673
  %v2675 = vpop.f32.mrf.mxu0
  %v2676 = vadd.f32 %v2627, %v2675
  %2677 = vmatmul.bf16.gmra.mxu0 %v1514
  %v2678 = vpop.f32.mrf.mxu0
  %v2679 = vadd.f32 %v2630, %v2678
  %v2680 = vpop.f32.mrf.mxu0
  %v2681 = vadd.f32 %v2632, %v2680
  %2682 = vmatmul.bf16.gmra.mxu0 %v1518
  %v2683 = vpop.f32.mrf.mxu0
  %v2684 = vadd.f32 %v2635, %v2683
  %v2685 = vpop.f32.mrf.mxu0
  %v2686 = vadd.f32 %v2637, %v2685
  %2687 = vmatmul.bf16.gmra.mxu0 %v1522
  %v2688 = vpop.f32.mrf.mxu0
  %v2689 = vadd.f32 %v2640, %v2688
  %v2690 = vpop.f32.mrf.mxu0
  %v2691 = vadd.f32 %v2642, %v2690
  %2692 = vdwg.mxu0
  %2693 = vmatpush.bf16.msra.mxu0 %v2075
  %2694 = vmatpush.bf16.msra.mxu0 %v2071
  %2695 = vmatpush.bf16.msra.mxu0 %v2067
  %2696 = vmatpush.bf16.msra.mxu0 %v2063
  %2697 = vmatpush.bf16.msra.mxu0 %v2059
  %2698 = vmatpush.bf16.msra.mxu0 %v2055
  %2699 = vmatpush.bf16.msra.mxu0 %v2051
  %2700 = vmatpush.bf16.msra.mxu0 %v2047
  %2701 = vmatmul.bf16.gmra.mxu0 %v1491
  %v2702 = vpop.f32.mrf.mxu0
  %v2703 = vadd.f32 %v1655, %v2702
  %v2704 = vpop.f32.mrf.mxu0
  %v2705 = vadd.f32 %v1655, %v2704
  %2706 = vmatmul.bf16.gmra.mxu0 %v1495
  %v2707 = vpop.f32.mrf.mxu0
  %v2708 = vadd.f32 %v1655, %v2707
  %v2709 = vpop.f32.mrf.mxu0
  %v2710 = vadd.f32 %v1655, %v2709
  %2711 = vmatmul.bf16.gmra.mxu0 %v1499
  %v2712 = vpop.f32.mrf.mxu0
  %v2713 = vadd.f32 %v1655, %v2712
  %v2714 = vpop.f32.mrf.mxu0
  %v2715 = vadd.f32 %v1655, %v2714
  %2716 = vmatmul.bf16.gmra.mxu0 %v1503
  %v2717 = vpop.f32.mrf.mxu0
  %v2718 = vadd.f32 %v1655, %v2717
  %v2719 = vpop.f32.mrf.mxu0
  %v2720 = vadd.f32 %v1655, %v2719
  %2721 = vmatmul.bf16.gmra.mxu0 %v1507
  %v2722 = vpop.f32.mrf.mxu0
  %v2723 = vadd.f32 %v1655, %v2722
  %v2724 = vpop.f32.mrf.mxu0
  %v2725 = vadd.f32 %v1655, %v2724
  %2726 = vmatmul.bf16.gmra.mxu0 %v1511
  %v2727 = vpop.f32.mrf.mxu0
  %v2728 = vadd.f32 %v1655, %v2727
  %v2729 = vpop.f32.mrf.mxu0
  %v2730 = vadd.f32 %v1655, %v2729
  %2731 = vmatmul.bf16.gmra.mxu0 %v1515
  %v2732 = vpop.f32.mrf.mxu0
  %v2733 = vadd.f32 %v1655, %v2732
  %v2734 = vpop.f32.mrf.mxu0
  %v2735 = vadd.f32 %v1655, %v2734
  %2736 = vmatmul.bf16.gmra.mxu0 %v1519
  %v2737 = vpop.f32.mrf.mxu0
  %v2738 = vadd.f32 %v1655, %v2737
  %v2739 = vpop.f32.mrf.mxu0
  %v2740 = vadd.f32 %v1655, %v2739
  %2741 = vdwg.mxu0
  %2742 = vmatpush.bf16.msra.mxu0 %v2107
  %2743 = vmatpush.bf16.msra.mxu0 %v2103
  %2744 = vmatpush.bf16.msra.mxu0 %v2099
  %2745 = vmatpush.bf16.msra.mxu0 %v2095
  %2746 = vmatpush.bf16.msra.mxu0 %v2091
  %2747 = vmatpush.bf16.msra.mxu0 %v2087
  %2748 = vmatpush.bf16.msra.mxu0 %v2083
  %2749 = vmatpush.bf16.msra.mxu0 %v2079
  %2750 = vmatmul.bf16.gmra.mxu0 %v1492
  %v2751 = vpop.f32.mrf.mxu0
  %v2752 = vadd.f32 %v2703, %v2751
  %v2753 = vpop.f32.mrf.mxu0
  %v2754 = vadd.f32 %v2705, %v2753
  %2755 = vmatmul.bf16.gmra.mxu0 %v1496
  %v2756 = vpop.f32.mrf.mxu0
  %v2757 = vadd.f32 %v2708, %v2756
  %v2758 = vpop.f32.mrf.mxu0
  %v2759 = vadd.f32 %v2710, %v2758
  %2760 = vmatmul.bf16.gmra.mxu0 %v1500
  %v2761 = vpop.f32.mrf.mxu0
  %v2762 = vadd.f32 %v2713, %v2761
  %v2763 = vpop.f32.mrf.mxu0
  %v2764 = vadd.f32 %v2715, %v2763
  %2765 = vmatmul.bf16.gmra.mxu0 %v1504
  %v2766 = vpop.f32.mrf.mxu0
  %v2767 = vadd.f32 %v2718, %v2766
  %v2768 = vpop.f32.mrf.mxu0
  %v2769 = vadd.f32 %v2720, %v2768
  %2770 = vmatmul.bf16.gmra.mxu0 %v1508
  %v2771 = vpop.f32.mrf.mxu0
  %v2772 = vadd.f32 %v2723, %v2771
  %v2773 = vpop.f32.mrf.mxu0
  %v2774 = vadd.f32 %v2725, %v2773
  %2775 = vmatmul.bf16.gmra.mxu0 %v1512
  %v2776 = vpop.f32.mrf.mxu0
  %v2777 = vadd.f32 %v2728, %v2776
  %v2778 = vpop.f32.mrf.mxu0
  %v2779 = vadd.f32 %v2730, %v2778
  %2780 = vmatmul.bf16.gmra.mxu0 %v1516
  %v2781 = vpop.f32.mrf.mxu0
  %v2782 = vadd.f32 %v2733, %v2781
  %v2783 = vpop.f32.mrf.mxu0
  %v2784 = vadd.f32 %v2735, %v2783
  %2785 = vmatmul.bf16.gmra.mxu0 %v1520
  %v2786 = vpop.f32.mrf.mxu0
  %v2787 = vadd.f32 %v2738, %v2786
  %v2788 = vpop.f32.mrf.mxu0
  %v2789 = vadd.f32 %v2740, %v2788
  %2790 = vdwg.mxu0
  %2791 = vmatpush.bf16.msra.mxu0 %v2139
  %2792 = vmatpush.bf16.msra.mxu0 %v2135
  %2793 = vmatpush.bf16.msra.mxu0 %v2131
  %2794 = vmatpush.bf16.msra.mxu0 %v2127
  %2795 = vmatpush.bf16.msra.mxu0 %v2123
  %2796 = vmatpush.bf16.msra.mxu0 %v2119
  %2797 = vmatpush.bf16.msra.mxu0 %v2115
  %2798 = vmatpush.bf16.msra.mxu0 %v2111
  %2799 = vmatmul.bf16.gmra.mxu0 %v1493
  %v2800 = vpop.f32.mrf.mxu0
  %v2801 = vadd.f32 %v2752, %v2800
  %v2802 = vpop.f32.mrf.mxu0
  %v2803 = vadd.f32 %v2754, %v2802
  %2804 = vmatmul.bf16.gmra.mxu0 %v1497
  %v2805 = vpop.f32.mrf.mxu0
  %v2806 = vadd.f32 %v2757, %v2805
  %v2807 = vpop.f32.mrf.mxu0
  %v2808 = vadd.f32 %v2759, %v2807
  %2809 = vmatmul.bf16.gmra.mxu0 %v1501
  %v2810 = vpop.f32.mrf.mxu0
  %v2811 = vadd.f32 %v2762, %v2810
  %v2812 = vpop.f32.mrf.mxu0
  %v2813 = vadd.f32 %v2764, %v2812
  %2814 = vmatmul.bf16.gmra.mxu0 %v1505
  %v2815 = vpop.f32.mrf.mxu0
  %v2816 = vadd.f32 %v2767, %v2815
  %v2817 = vpop.f32.mrf.mxu0
  %v2818 = vadd.f32 %v2769, %v2817
  %2819 = vmatmul.bf16.gmra.mxu0 %v1509
  %v2820 = vpop.f32.mrf.mxu0
  %v2821 = vadd.f32 %v2772, %v2820
  %v2822 = vpop.f32.mrf.mxu0
  %v2823 = vadd.f32 %v2774, %v2822
  %2824 = vmatmul.bf16.gmra.mxu0 %v1513
  %v2825 = vpop.f32.mrf.mxu0
  %v2826 = vadd.f32 %v2777, %v2825
  %v2827 = vpop.f32.mrf.mxu0
  %v2828 = vadd.f32 %v2779, %v2827
  %2829 = vmatmul.bf16.gmra.mxu0 %v1517
  %v2830 = vpop.f32.mrf.mxu0
  %v2831 = vadd.f32 %v2782, %v2830
  %v2832 = vpop.f32.mrf.mxu0
  %v2833 = vadd.f32 %v2784, %v2832
  %2834 = vmatmul.bf16.gmra.mxu0 %v1521
  %v2835 = vpop.f32.mrf.mxu0
  %v2836 = vadd.f32 %v2787, %v2835
  %v2837 = vpop.f32.mrf.mxu0
  %v2838 = vadd.f32 %v2789, %v2837
  %2839 = vdwg.mxu0
  %2840 = vmatpush.bf16.msra.mxu0 %v2171
  %2841 = vmatpush.bf16.msra.mxu0 %v2167
  %2842 = vmatpush.bf16.msra.mxu0 %v2163
  %2843 = vmatpush.bf16.msra.mxu0 %v2159
  %2844 = vmatpush.bf16.msra.mxu0 %v2155
  %2845 = vmatpush.bf16.msra.mxu0 %v2151
  %2846 = vmatpush.bf16.msra.mxu0 %v2147
  %2847 = vmatpush.bf16.msra.mxu0 %v2143
  %2848 = vmatmul.bf16.gmra.mxu0 %v1494
  %v2849 = vpop.f32.mrf.mxu0
  %v2850 = vadd.f32 %v2801, %v2849
  %v2851 = vpop.f32.mrf.mxu0
  %v2852 = vadd.f32 %v2803, %v2851
  %2853 = vmatmul.bf16.gmra.mxu0 %v1498
  %v2854 = vpop.f32.mrf.mxu0
  %v2855 = vadd.f32 %v2806, %v2854
  %v2856 = vpop.f32.mrf.mxu0
  %v2857 = vadd.f32 %v2808, %v2856
  %2858 = vmatmul.bf16.gmra.mxu0 %v1502
  %v2859 = vpop.f32.mrf.mxu0
  %v2860 = vadd.f32 %v2811, %v2859
  %v2861 = vpop.f32.mrf.mxu0
  %v2862 = vadd.f32 %v2813, %v2861
  %2863 = vmatmul.bf16.gmra.mxu0 %v1506
  %v2864 = vpop.f32.mrf.mxu0
  %v2865 = vadd.f32 %v2816, %v2864
  %v2866 = vpop.f32.mrf.mxu0
  %v2867 = vadd.f32 %v2818, %v2866
  %2868 = vmatmul.bf16.gmra.mxu0 %v1510
  %v2869 = vpop.f32.mrf.mxu0
  %v2870 = vadd.f32 %v2821, %v2869
  %v2871 = vpop.f32.mrf.mxu0
  %v2872 = vadd.f32 %v2823, %v2871
  %2873 = vmatmul.bf16.gmra.mxu0 %v1514
  %v2874 = vpop.f32.mrf.mxu0
  %v2875 = vadd.f32 %v2826, %v2874
  %v2876 = vpop.f32.mrf.mxu0
  %v2877 = vadd.f32 %v2828, %v2876
  %2878 = vmatmul.bf16.gmra.mxu0 %v1518
  %v2879 = vpop.f32.mrf.mxu0
  %v2880 = vadd.f32 %v2831, %v2879
  %v2881 = vpop.f32.mrf.mxu0
  %v2882 = vadd.f32 %v2833, %v2881
  %2883 = vmatmul.bf16.gmra.mxu0 %v1522
  %v2884 = vpop.f32.mrf.mxu0
  %v2885 = vadd.f32 %v2836, %v2884
  %v2886 = vpop.f32.mrf.mxu0
  %v2887 = vadd.f32 %v2838, %v2886
  %2888 = vdwg.mxu0
  %2889 = vmatpush.bf16.msra.mxu0 %v2076
  %2890 = vmatpush.bf16.msra.mxu0 %v2072
  %2891 = vmatpush.bf16.msra.mxu0 %v2068
  %2892 = vmatpush.bf16.msra.mxu0 %v2064
  %2893 = vmatpush.bf16.msra.mxu0 %v2060
  %2894 = vmatpush.bf16.msra.mxu0 %v2056
  %2895 = vmatpush.bf16.msra.mxu0 %v2052
  %2896 = vmatpush.bf16.msra.mxu0 %v2048
  %2897 = vmatmul.bf16.gmra.mxu0 %v1491
  %v2898 = vpop.f32.mrf.mxu0
  %v2899 = vadd.f32 %v1656, %v2898
  %v2900 = vpop.f32.mrf.mxu0
  %v2901 = vadd.f32 %v1656, %v2900
  %2902 = vmatmul.bf16.gmra.mxu0 %v1495
  %v2903 = vpop.f32.mrf.mxu0
  %v2904 = vadd.f32 %v1656, %v2903
  %v2905 = vpop.f32.mrf.mxu0
  %v2906 = vadd.f32 %v1656, %v2905
  %2907 = vmatmul.bf16.gmra.mxu0 %v1499
  %v2908 = vpop.f32.mrf.mxu0
  %v2909 = vadd.f32 %v1656, %v2908
  %v2910 = vpop.f32.mrf.mxu0
  %v2911 = vadd.f32 %v1656, %v2910
  %2912 = vmatmul.bf16.gmra.mxu0 %v1503
  %v2913 = vpop.f32.mrf.mxu0
  %v2914 = vadd.f32 %v1656, %v2913
  %v2915 = vpop.f32.mrf.mxu0
  %v2916 = vadd.f32 %v1656, %v2915
  %2917 = vmatmul.bf16.gmra.mxu0 %v1507
  %v2918 = vpop.f32.mrf.mxu0
  %v2919 = vadd.f32 %v1656, %v2918
  %v2920 = vpop.f32.mrf.mxu0
  %v2921 = vadd.f32 %v1656, %v2920
  %2922 = vmatmul.bf16.gmra.mxu0 %v1511
  %v2923 = vpop.f32.mrf.mxu0
  %v2924 = vadd.f32 %v1656, %v2923
  %v2925 = vpop.f32.mrf.mxu0
  %v2926 = vadd.f32 %v1656, %v2925
  %2927 = vmatmul.bf16.gmra.mxu0 %v1515
  %v2928 = vpop.f32.mrf.mxu0
  %v2929 = vadd.f32 %v1656, %v2928
  %v2930 = vpop.f32.mrf.mxu0
  %v2931 = vadd.f32 %v1656, %v2930
  %2932 = vmatmul.bf16.gmra.mxu0 %v1519
  %v2933 = vpop.f32.mrf.mxu0
  %v2934 = vadd.f32 %v1656, %v2933
  %v2935 = vpop.f32.mrf.mxu0
  %v2936 = vadd.f32 %v1656, %v2935
  %2937 = vdwg.mxu0
  %2938 = vmatpush.bf16.msra.mxu0 %v2108
  %2939 = vmatpush.bf16.msra.mxu0 %v2104
  %2940 = vmatpush.bf16.msra.mxu0 %v2100
  %2941 = vmatpush.bf16.msra.mxu0 %v2096
  %2942 = vmatpush.bf16.msra.mxu0 %v2092
  %2943 = vmatpush.bf16.msra.mxu0 %v2088
  %2944 = vmatpush.bf16.msra.mxu0 %v2084
  %2945 = vmatpush.bf16.msra.mxu0 %v2080
  %2946 = vmatmul.bf16.gmra.mxu0 %v1492
  %v2947 = vpop.f32.mrf.mxu0
  %v2948 = vadd.f32 %v2899, %v2947
  %v2949 = vpop.f32.mrf.mxu0
  %v2950 = vadd.f32 %v2901, %v2949
  %2951 = vmatmul.bf16.gmra.mxu0 %v1496
  %v2952 = vpop.f32.mrf.mxu0
  %v2953 = vadd.f32 %v2904, %v2952
  %v2954 = vpop.f32.mrf.mxu0
  %v2955 = vadd.f32 %v2906, %v2954
  %2956 = vmatmul.bf16.gmra.mxu0 %v1500
  %v2957 = vpop.f32.mrf.mxu0
  %v2958 = vadd.f32 %v2909, %v2957
  %v2959 = vpop.f32.mrf.mxu0
  %v2960 = vadd.f32 %v2911, %v2959
  %2961 = vmatmul.bf16.gmra.mxu0 %v1504
  %v2962 = vpop.f32.mrf.mxu0
  %v2963 = vadd.f32 %v2914, %v2962
  %v2964 = vpop.f32.mrf.mxu0
  %v2965 = vadd.f32 %v2916, %v2964
  %2966 = vmatmul.bf16.gmra.mxu0 %v1508
  %v2967 = vpop.f32.mrf.mxu0
  %v2968 = vadd.f32 %v2919, %v2967
  %v2969 = vpop.f32.mrf.mxu0
  %v2970 = vadd.f32 %v2921, %v2969
  %2971 = vmatmul.bf16.gmra.mxu0 %v1512
  %v2972 = vpop.f32.mrf.mxu0
  %v2973 = vadd.f32 %v2924, %v2972
  %v2974 = vpop.f32.mrf.mxu0
  %v2975 = vadd.f32 %v2926, %v2974
  %2976 = vmatmul.bf16.gmra.mxu0 %v1516
  %v2977 = vpop.f32.mrf.mxu0
  %v2978 = vadd.f32 %v2929, %v2977
  %v2979 = vpop.f32.mrf.mxu0
  %v2980 = vadd.f32 %v2931, %v2979
  %2981 = vmatmul.bf16.gmra.mxu0 %v1520
  %v2982 = vpop.f32.mrf.mxu0
  %v2983 = vadd.f32 %v2934, %v2982
  %v2984 = vpop.f32.mrf.mxu0
  %v2985 = vadd.f32 %v2936, %v2984
  %2986 = vdwg.mxu0
  %2987 = vmatpush.bf16.msra.mxu0 %v2140
  %2988 = vmatpush.bf16.msra.mxu0 %v2136
  %2989 = vmatpush.bf16.msra.mxu0 %v2132
  %2990 = vmatpush.bf16.msra.mxu0 %v2128
  %2991 = vmatpush.bf16.msra.mxu0 %v2124
  %2992 = vmatpush.bf16.msra.mxu0 %v2120
  %2993 = vmatpush.bf16.msra.mxu0 %v2116
  %2994 = vmatpush.bf16.msra.mxu0 %v2112
  %2995 = vmatmul.bf16.gmra.mxu0 %v1493
  %v2996 = vpop.f32.mrf.mxu0
  %v2997 = vadd.f32 %v2948, %v2996
  %v2998 = vpop.f32.mrf.mxu0
  %v2999 = vadd.f32 %v2950, %v2998
  %3000 = vmatmul.bf16.gmra.mxu0 %v1497
  %v3001 = vpop.f32.mrf.mxu0
  %v3002 = vadd.f32 %v2953, %v3001
  %v3003 = vpop.f32.mrf.mxu0
  %v3004 = vadd.f32 %v2955, %v3003
  %3005 = vmatmul.bf16.gmra.mxu0 %v1501
  %v3006 = vpop.f32.mrf.mxu0
  %v3007 = vadd.f32 %v2958, %v3006
  %v3008 = vpop.f32.mrf.mxu0
  %v3009 = vadd.f32 %v2960, %v3008
  %3010 = vmatmul.bf16.gmra.mxu0 %v1505
  %v3011 = vpop.f32.mrf.mxu0
  %v3012 = vadd.f32 %v2963, %v3011
  %v3013 = vpop.f32.mrf.mxu0
  %v3014 = vadd.f32 %v2965, %v3013
  %3015 = vmatmul.bf16.gmra.mxu0 %v1509
  %v3016 = vpop.f32.mrf.mxu0
  %v3017 = vadd.f32 %v2968, %v3016
  %v3018 = vpop.f32.mrf.mxu0
  %v3019 = vadd.f32 %v2970, %v3018
  %3020 = vmatmul.bf16.gmra.mxu0 %v1513
  %v3021 = vpop.f32.mrf.mxu0
  %v3022 = vadd.f32 %v2973, %v3021
  %v3023 = vpop.f32.mrf.mxu0
  %v3024 = vadd.f32 %v2975, %v3023
  %3025 = vmatmul.bf16.gmra.mxu0 %v1517
  %v3026 = vpop.f32.mrf.mxu0
  %v3027 = vadd.f32 %v2978, %v3026
  %v3028 = vpop.f32.mrf.mxu0
  %v3029 = vadd.f32 %v2980, %v3028
  %3030 = vmatmul.bf16.gmra.mxu0 %v1521
  %v3031 = vpop.f32.mrf.mxu0
  %v3032 = vadd.f32 %v2983, %v3031
  %v3033 = vpop.f32.mrf.mxu0
  %v3034 = vadd.f32 %v2985, %v3033
  %3035 = vdwg.mxu0
  %3036 = vmatpush.bf16.msra.mxu0 %v2172
  %3037 = vmatpush.bf16.msra.mxu0 %v2168
  %3038 = vmatpush.bf16.msra.mxu0 %v2164
  %3039 = vmatpush.bf16.msra.mxu0 %v2160
  %3040 = vmatpush.bf16.msra.mxu0 %v2156
  %3041 = vmatpush.bf16.msra.mxu0 %v2152
  %3042 = vmatpush.bf16.msra.mxu0 %v2148
  %3043 = vmatpush.bf16.msra.mxu0 %v2144
  %3044 = vmatmul.bf16.gmra.mxu0 %v1494
  %v3045 = vpop.f32.mrf.mxu0
  %v3046 = vadd.f32 %v2997, %v3045
  %v3047 = vpop.f32.mrf.mxu0
  %v3048 = vadd.f32 %v2999, %v3047
  %3049 = vmatmul.bf16.gmra.mxu0 %v1498
  %v3050 = vpop.f32.mrf.mxu0
  %v3051 = vadd.f32 %v3002, %v3050
  %v3052 = vpop.f32.mrf.mxu0
  %v3053 = vadd.f32 %v3004, %v3052
  %3054 = vmatmul.bf16.gmra.mxu0 %v1502
  %v3055 = vpop.f32.mrf.mxu0
  %v3056 = vadd.f32 %v3007, %v3055
  %v3057 = vpop.f32.mrf.mxu0
  %v3058 = vadd.f32 %v3009, %v3057
  %3059 = vmatmul.bf16.gmra.mxu0 %v1506
  %v3060 = vpop.f32.mrf.mxu0
  %v3061 = vadd.f32 %v3012, %v3060
  %v3062 = vpop.f32.mrf.mxu0
  %v3063 = vadd.f32 %v3014, %v3062
  %3064 = vmatmul.bf16.gmra.mxu0 %v1510
  %v3065 = vpop.f32.mrf.mxu0
  %v3066 = vadd.f32 %v3017, %v3065
  %v3067 = vpop.f32.mrf.mxu0
  %v3068 = vadd.f32 %v3019, %v3067
  %3069 = vmatmul.bf16.gmra.mxu0 %v1514
  %v3070 = vpop.f32.mrf.mxu0
  %v3071 = vadd.f32 %v3022, %v3070
  %v3072 = vpop.f32.mrf.mxu0
  %v3073 = vadd.f32 %v3024, %v3072
  %3074 = vmatmul.bf16.gmra.mxu0 %v1518
  %v3075 = vpop.f32.mrf.mxu0
  %v3076 = vadd.f32 %v3027, %v3075
  %v3077 = vpop.f32.mrf.mxu0
  %v3078 = vadd.f32 %v3029, %v3077
  %3079 = vmatmul.bf16.gmra.mxu0 %v1522
  %v3080 = vpop.f32.mrf.mxu0
  %v3081 = vadd.f32 %v3032, %v3080
  %v3082 = vpop.f32.mrf.mxu0
  %v3083 = vadd.f32 %v3034, %v3082
  %3084 = vdwg.mxu0
  %vm3085 = vcmp.gt.f32.partialorder %v2458, 0.0
  %vm3086 = vcmp.gt.f32.partialorder %v2654, 0.0
  %vm3087 = vcmp.gt.f32.partialorder %v2850, 0.0
  %vm3088 = vcmp.gt.f32.partialorder %v3046, 0.0
  %vm3089 = vcmp.gt.f32.partialorder %v2460, 0.0
  %vm3090 = vcmp.gt.f32.partialorder %v2656, 0.0
  %vm3091 = vcmp.gt.f32.partialorder %v2852, 0.0
  %vm3092 = vcmp.gt.f32.partialorder %v3048, 0.0
  %vm3093 = vcmp.gt.f32.partialorder %v2463, 0.0
  %vm3094 = vcmp.gt.f32.partialorder %v2659, 0.0
  %vm3095 = vcmp.gt.f32.partialorder %v2855, 0.0
  %vm3096 = vcmp.gt.f32.partialorder %v3051, 0.0
  %vm3097 = vcmp.gt.f32.partialorder %v2465, 0.0
  %vm3098 = vcmp.gt.f32.partialorder %v2661, 0.0
  %vm3099 = vcmp.gt.f32.partialorder %v2857, 0.0
  %vm3100 = vcmp.gt.f32.partialorder %v3053, 0.0
  %vm3101 = vcmp.gt.f32.partialorder %v2468, 0.0
  %vm3102 = vcmp.gt.f32.partialorder %v2664, 0.0
  %vm3103 = vcmp.gt.f32.partialorder %v2860, 0.0
  %vm3104 = vcmp.gt.f32.partialorder %v3056, 0.0
  %vm3105 = vcmp.gt.f32.partialorder %v2470, 0.0
  %vm3106 = vcmp.gt.f32.partialorder %v2666, 0.0
  %vm3107 = vcmp.gt.f32.partialorder %v2862, 0.0
  %vm3108 = vcmp.gt.f32.partialorder %v3058, 0.0
  %vm3109 = vcmp.gt.f32.partialorder %v2473, 0.0
  %vm3110 = vcmp.gt.f32.partialorder %v2669, 0.0
  %vm3111 = vcmp.gt.f32.partialorder %v2865, 0.0
  %vm3112 = vcmp.gt.f32.partialorder %v3061, 0.0
  %vm3113 = vcmp.gt.f32.partialorder %v2475, 0.0
  %vm3114 = vcmp.gt.f32.partialorder %v2671, 0.0
  %vm3115 = vcmp.gt.f32.partialorder %v2867, 0.0
  %vm3116 = vcmp.gt.f32.partialorder %v3063, 0.0
  %vm3117 = vcmp.gt.f32.partialorder %v2478, 0.0
  %vm3118 = vcmp.gt.f32.partialorder %v2674, 0.0
  %vm3119 = vcmp.gt.f32.partialorder %v2870, 0.0
  %vm3120 = vcmp.gt.f32.partialorder %v3066, 0.0
  %vm3121 = vcmp.gt.f32.partialorder %v2480, 0.0
  %vm3122 = vcmp.gt.f32.partialorder %v2676, 0.0
  %vm3123 = vcmp.gt.f32.partialorder %v2872, 0.0
  %vm3124 = vcmp.gt.f32.partialorder %v3068, 0.0
  %vm3125 = vcmp.gt.f32.partialorder %v2483, 0.0
  %vm3126 = vcmp.gt.f32.partialorder %v2679, 0.0
  %vm3127 = vcmp.gt.f32.partialorder %v2875, 0.0
  %vm3128 = vcmp.gt.f32.partialorder %v3071, 0.0
  %vm3129 = vcmp.gt.f32.partialorder %v2485, 0.0
  %vm3130 = vcmp.gt.f32.partialorder %v2681, 0.0
  %vm3131 = vcmp.gt.f32.partialorder %v2877, 0.0
  %vm3132 = vcmp.gt.f32.partialorder %v3073, 0.0
  %vm3133 = vcmp.gt.f32.partialorder %v2488, 0.0
  %vm3134 = vcmp.gt.f32.partialorder %v2684, 0.0
  %vm3135 = vcmp.gt.f32.partialorder %v2880, 0.0
  %vm3136 = vcmp.gt.f32.partialorder %v3076, 0.0
  %vm3137 = vcmp.gt.f32.partialorder %v2490, 0.0
  %vm3138 = vcmp.gt.f32.partialorder %v2686, 0.0
  %vm3139 = vcmp.gt.f32.partialorder %v2882, 0.0
  %vm3140 = vcmp.gt.f32.partialorder %v3078, 0.0
  %vm3141 = vcmp.gt.f32.partialorder %v2493, 0.0
  %vm3142 = vcmp.gt.f32.partialorder %v2689, 0.0
  %vm3143 = vcmp.gt.f32.partialorder %v2885, 0.0
  %vm3144 = vcmp.gt.f32.partialorder %v3081, 0.0
  %vm3145 = vcmp.gt.f32.partialorder %v2495, 0.0
  %vm3146 = vcmp.gt.f32.partialorder %v2691, 0.0
  %vm3147 = vcmp.gt.f32.partialorder %v2887, 0.0
  %vm3148 = vcmp.gt.f32.partialorder %v3083, 0.0
  %v3149 = vmul.f32 %v2458, 0.2
  %v3150 = vmul.f32 %v2654, 0.2
  %v3151 = vmul.f32 %v2850, 0.2
  %v3152 = vmul.f32 %v3046, 0.2
  %v3153 = vmul.f32 %v2460, 0.2
  %v3154 = vmul.f32 %v2656, 0.2
  %v3155 = vmul.f32 %v2852, 0.2
  %v3156 = vmul.f32 %v3048, 0.2
  %v3157 = vmul.f32 %v2463, 0.2
  %v3158 = vmul.f32 %v2659, 0.2
  %v3159 = vmul.f32 %v2855, 0.2
  %v3160 = vmul.f32 %v3051, 0.2
  %v3161 = vmul.f32 %v2465, 0.2
  %v3162 = vmul.f32 %v2661, 0.2
  %v3163 = vmul.f32 %v2857, 0.2
  %v3164 = vmul.f32 %v3053, 0.2
  %v3165 = vmul.f32 %v2468, 0.2
  %v3166 = vmul.f32 %v2664, 0.2
  %v3167 = vmul.f32 %v2860, 0.2
  %v3168 = vmul.f32 %v3056, 0.2
  %v3169 = vmul.f32 %v2470, 0.2
  %v3170 = vmul.f32 %v2666, 0.2
  %v3171 = vmul.f32 %v2862, 0.2
  %v3172 = vmul.f32 %v3058, 0.2
  %v3173 = vmul.f32 %v2473, 0.2
  %v3174 = vmul.f32 %v2669, 0.2
  %v3175 = vmul.f32 %v2865, 0.2
  %v3176 = vmul.f32 %v3061, 0.2
  %v3177 = vmul.f32 %v2475, 0.2
  %v3178 = vmul.f32 %v2671, 0.2
  %v3179 = vmul.f32 %v2867, 0.2
  %v3180 = vmul.f32 %v3063, 0.2
  %v3181 = vmul.f32 %v2478, 0.2
  %v3182 = vmul.f32 %v2674, 0.2
  %v3183 = vmul.f32 %v2870, 0.2
  %v3184 = vmul.f32 %v3066, 0.2
  %v3185 = vmul.f32 %v2480, 0.2
  %v3186 = vmul.f32 %v2676, 0.2
  %v3187 = vmul.f32 %v2872, 0.2
  %v3188 = vmul.f32 %v3068, 0.2
  %v3189 = vmul.f32 %v2483, 0.2
  %v3190 = vmul.f32 %v2679, 0.2
  %v3191 = vmul.f32 %v2875, 0.2
  %v3192 = vmul.f32 %v3071, 0.2
  %v3193 = vmul.f32 %v2485, 0.2
  %v3194 = vmul.f32 %v2681, 0.2
  %v3195 = vmul.f32 %v2877, 0.2
  %v3196 = vmul.f32 %v3073, 0.2
  %v3197 = vmul.f32 %v2488, 0.2
  %v3198 = vmul.f32 %v2684, 0.2
  %v3199 = vmul.f32 %v2880, 0.2
  %v3200 = vmul.f32 %v3076, 0.2
  %v3201 = vmul.f32 %v2490, 0.2
  %v3202 = vmul.f32 %v2686, 0.2
  %v3203 = vmul.f32 %v2882, 0.2
  %v3204 = vmul.f32 %v3078, 0.2
  %v3205 = vmul.f32 %v2493, 0.2
  %v3206 = vmul.f32 %v2689, 0.2
  %v3207 = vmul.f32 %v2885, 0.2
  %v3208 = vmul.f32 %v3081, 0.2
  %v3209 = vmul.f32 %v2495, 0.2
  %v3210 = vmul.f32 %v2691, 0.2
  %v3211 = vmul.f32 %v2887, 0.2
  %v3212 = vmul.f32 %v3083, 0.2
  %v3213 = vsel %vm3085, %v2458, %v3149
  %v3214 = vsel %vm3086, %v2654, %v3150
  %v3215 = vsel %vm3087, %v2850, %v3151
  %v3216 = vsel %vm3088, %v3046, %v3152
  %v3217 = vsel %vm3089, %v2460, %v3153
  %v3218 = vsel %vm3090, %v2656, %v3154
  %v3219 = vsel %vm3091, %v2852, %v3155
  %v3220 = vsel %vm3092, %v3048, %v3156
  %v3221 = vsel %vm3093, %v2463, %v3157
  %v3222 = vsel %vm3094, %v2659, %v3158
  %v3223 = vsel %vm3095, %v2855, %v3159
  %v3224 = vsel %vm3096, %v3051, %v3160
  %v3225 = vsel %vm3097, %v2465, %v3161
  %v3226 = vsel %vm3098, %v2661, %v3162
  %v3227 = vsel %vm3099, %v2857, %v3163
  %v3228 = vsel %vm3100, %v3053, %v3164
  %v3229 = vsel %vm3101, %v2468, %v3165
  %v3230 = vsel %vm3102, %v2664, %v3166
  %v3231 = vsel %vm3103, %v2860, %v3167
  %v3232 = vsel %vm3104, %v3056, %v3168
  %v3233 = vsel %vm3105, %v2470, %v3169
  %v3234 = vsel %vm3106, %v2666, %v3170
  %v3235 = vsel %vm3107, %v2862, %v3171
  %v3236 = vsel %vm3108, %v3058, %v3172
  %v3237 = vsel %vm3109, %v2473, %v3173
  %v3238 = vsel %vm3110, %v2669, %v3174
  %v3239 = vsel %vm3111, %v2865, %v3175
  %v3240 = vsel %vm3112, %v3061, %v3176
  %v3241 = vsel %vm3113, %v2475, %v3177
  %v3242 = vsel %vm3114, %v2671, %v3178
  %v3243 = vsel %vm3115, %v2867, %v3179
  %v3244 = vsel %vm3116, %v3063, %v3180
  %v3245 = vsel %vm3117, %v2478, %v3181
  %v3246 = vsel %vm3118, %v2674, %v3182
  %v3247 = vsel %vm3119, %v2870, %v3183
  %v3248 = vsel %vm3120, %v3066, %v3184
  %v3249 = vsel %vm3121, %v2480, %v3185
  %v3250 = vsel %vm3122, %v2676, %v3186
  %v3251 = vsel %vm3123, %v2872, %v3187
  %v3252 = vsel %vm3124, %v3068, %v3188
  %v3253 = vsel %vm3125, %v2483, %v3189
  %v3254 = vsel %vm3126, %v2679, %v3190
  %v3255 = vsel %vm3127, %v2875, %v3191
  %v3256 = vsel %vm3128, %v3071, %v3192
  %v3257 = vsel %vm3129, %v2485, %v3193
  %v3258 = vsel %vm3130, %v2681, %v3194
  %v3259 = vsel %vm3131, %v2877, %v3195
  %v3260 = vsel %vm3132, %v3073, %v3196
  %v3261 = vsel %vm3133, %v2488, %v3197
  %v3262 = vsel %vm3134, %v2684, %v3198
  %v3263 = vsel %vm3135, %v2880, %v3199
  %v3264 = vsel %vm3136, %v3076, %v3200
  %v3265 = vsel %vm3137, %v2490, %v3201
  %v3266 = vsel %vm3138, %v2686, %v3202
  %v3267 = vsel %vm3139, %v2882, %v3203
  %v3268 = vsel %vm3140, %v3078, %v3204
  %v3269 = vsel %vm3141, %v2493, %v3205
  %v3270 = vsel %vm3142, %v2689, %v3206
  %v3271 = vsel %vm3143, %v2885, %v3207
  %v3272 = vsel %vm3144, %v3081, %v3208
  %v3273 = vsel %vm3145, %v2495, %v3209
  %v3274 = vsel %vm3146, %v2691, %v3210
  %v3275 = vsel %vm3147, %v2887, %v3211
  %v3276 = vsel %vm3148, %v3083, %v3212
  %v3277 = vpack.c.bf16 %v3217, %v3213
  %v3278 = vpack.c.bf16 %v3218, %v3214
  %v3279 = vpack.c.bf16 %v3219, %v3215
  %v3280 = vpack.c.bf16 %v3220, %v3216
  %v3281 = vpack.c.bf16 %v3225, %v3221
  %v3282 = vpack.c.bf16 %v3226, %v3222
  %v3283 = vpack.c.bf16 %v3227, %v3223
  %v3284 = vpack.c.bf16 %v3228, %v3224
  %v3285 = vpack.c.bf16 %v3233, %v3229
  %v3286 = vpack.c.bf16 %v3234, %v3230
  %v3287 = vpack.c.bf16 %v3235, %v3231
  %v3288 = vpack.c.bf16 %v3236, %v3232
  %v3289 = vpack.c.bf16 %v3241, %v3237
  %v3290 = vpack.c.bf16 %v3242, %v3238
  %v3291 = vpack.c.bf16 %v3243, %v3239
  %v3292 = vpack.c.bf16 %v3244, %v3240
  %v3293 = vpack.c.bf16 %v3249, %v3245
  %v3294 = vpack.c.bf16 %v3250, %v3246
  %v3295 = vpack.c.bf16 %v3251, %v3247
  %v3296 = vpack.c.bf16 %v3252, %v3248
  %v3297 = vpack.c.bf16 %v3257, %v3253
  %v3298 = vpack.c.bf16 %v3258, %v3254
  %v3299 = vpack.c.bf16 %v3259, %v3255
  %v3300 = vpack.c.bf16 %v3260, %v3256
  %v3301 = vpack.c.bf16 %v3265, %v3261
  %v3302 = vpack.c.bf16 %v3266, %v3262
  %v3303 = vpack.c.bf16 %v3267, %v3263
  %v3304 = vpack.c.bf16 %v3268, %v3264
  %v3305 = vpack.c.bf16 %v3273, %v3269
  %v3306 = vpack.c.bf16 %v3274, %v3270
  %v3307 = vpack.c.bf16 %v3275, %v3271
  %v3308 = vpack.c.bf16 %v3276, %v3272
  %v3309 = vld [vmem:[%s6] sm:$0xff]
  %v3310 = vld [vmem:[%s6 + $0x8] sm:$0xff]
  %v3311 = vld [vmem:[%s6 + $0x10] sm:$0xff]
  %v3312 = vld [vmem:[%s6 + $0x18] sm:$0xff]
  %v3313 = vld [vmem:[%s6 + $0x20] sm:$0xff]
  %v3314 = vld [vmem:[%s6 + $0x28] sm:$0xff]
  %v3315 = vld [vmem:[%s6 + $0x30] sm:$0xff]
  %v3316 = vld [vmem:[%s6 + $0x38] sm:$0xff]
  %v3317 = vld [vmem:[%s6 + $0x40] sm:$0xff]
  %v3318 = vld [vmem:[%s6 + $0x48] sm:$0xff]
  %v3319 = vld [vmem:[%s6 + $0x50] sm:$0xff]
  %v3320 = vld [vmem:[%s6 + $0x58] sm:$0xff]
  %v3321 = vld [vmem:[%s6 + $0x60] sm:$0xff]
  %v3322 = vld [vmem:[%s6 + $0x68] sm:$0xff]
  %v3323 = vld [vmem:[%s6 + $0x70] sm:$0xff]
  %v3324 = vld [vmem:[%s6 + $0x78] sm:$0xff]
  %v3325 = vld [vmem:[%s6 + $0x80] sm:$0xff]
  %v3326 = vld [vmem:[%s6 + $0x88] sm:$0xff]
  %v3327 = vld [vmem:[%s6 + $0x90] sm:$0xff]
  %v3328 = vld [vmem:[%s6 + $0x98] sm:$0xff]
  %v3329 = vld [vmem:[%s6 + $0xa0] sm:$0xff]
  %v3330 = vld [vmem:[%s6 + $0xa8] sm:$0xff]
  %v3331 = vld [vmem:[%s6 + $0xb0] sm:$0xff]
  %v3332 = vld [vmem:[%s6 + $0xb8] sm:$0xff]
  %v3333 = vld [vmem:[%s6 + $0xc0] sm:$0xff]
  %v3334 = vld [vmem:[%s6 + $0xc8] sm:$0xff]
  %v3335 = vld [vmem:[%s6 + $0xd0] sm:$0xff]
  %v3336 = vld [vmem:[%s6 + $0xd8] sm:$0xff]
  %v3337 = vld [vmem:[%s6 + $0xe0] sm:$0xff]
  %v3338 = vld [vmem:[%s6 + $0xe8] sm:$0xff]
  %v3339 = vld [vmem:[%s6 + $0xf0] sm:$0xff]
  %v3340 = vld [vmem:[%s6 + $0xf8] sm:$0xff]
  %v3341 = vld [vmem:[%s6 + $0x100] sm:$0xff]
  %v3342 = vld [vmem:[%s6 + $0x108] sm:$0xff]
  %v3343 = vld [vmem:[%s6 + $0x110] sm:$0xff]
  %v3344 = vld [vmem:[%s6 + $0x118] sm:$0xff]
  %v3345 = vld [vmem:[%s6 + $0x120] sm:$0xff]
  %v3346 = vld [vmem:[%s6 + $0x128] sm:$0xff]
  %v3347 = vld [vmem:[%s6 + $0x130] sm:$0xff]
  %v3348 = vld [vmem:[%s6 + $0x138] sm:$0xff]
  %v3349 = vld [vmem:[%s6 + $0x140] sm:$0xff]
  %v3350 = vld [vmem:[%s6 + $0x148] sm:$0xff]
  %v3351 = vld [vmem:[%s6 + $0x150] sm:$0xff]
  %v3352 = vld [vmem:[%s6 + $0x158] sm:$0xff]
  %v3353 = vld [vmem:[%s6 + $0x160] sm:$0xff]
  %v3354 = vld [vmem:[%s6 + $0x168] sm:$0xff]
  %v3355 = vld [vmem:[%s6 + $0x170] sm:$0xff]
  %v3356 = vld [vmem:[%s6 + $0x178] sm:$0xff]
  %v3357 = vld [vmem:[%s6 + $0x180] sm:$0xff]
  %v3358 = vld [vmem:[%s6 + $0x188] sm:$0xff]
  %v3359 = vld [vmem:[%s6 + $0x190] sm:$0xff]
  %v3360 = vld [vmem:[%s6 + $0x198] sm:$0xff]
  %v3361 = vld [vmem:[%s6 + $0x1a0] sm:$0xff]
  %v3362 = vld [vmem:[%s6 + $0x1a8] sm:$0xff]
  %v3363 = vld [vmem:[%s6 + $0x1b0] sm:$0xff]
  %v3364 = vld [vmem:[%s6 + $0x1b8] sm:$0xff]
  %v3365 = vld [vmem:[%s6 + $0x1c0] sm:$0xff]
  %v3366 = vld [vmem:[%s6 + $0x1c8] sm:$0xff]
  %v3367 = vld [vmem:[%s6 + $0x1d0] sm:$0xff]
  %v3368 = vld [vmem:[%s6 + $0x1d8] sm:$0xff]
  %v3369 = vld [vmem:[%s6 + $0x1e0] sm:$0xff]
  %v3370 = vld [vmem:[%s6 + $0x1e8] sm:$0xff]
  %v3371 = vld [vmem:[%s6 + $0x1f0] sm:$0xff]
  %v3372 = vld [vmem:[%s6 + $0x1f8] sm:$0xff]
  %v3373 = vld [vmem:[%s6 + $0x200] sm:$0xff]
  %v3374 = vld [vmem:[%s6 + $0x208] sm:$0xff]
  %v3375 = vld [vmem:[%s6 + $0x210] sm:$0xff]
  %v3376 = vld [vmem:[%s6 + $0x218] sm:$0xff]
  %v3377 = vld [vmem:[%s6 + $0x220] sm:$0xff]
  %v3378 = vld [vmem:[%s6 + $0x228] sm:$0xff]
  %v3379 = vld [vmem:[%s6 + $0x230] sm:$0xff]
  %v3380 = vld [vmem:[%s6 + $0x238] sm:$0xff]
  %v3381 = vld [vmem:[%s6 + $0x240] sm:$0xff]
  %v3382 = vld [vmem:[%s6 + $0x248] sm:$0xff]
  %v3383 = vld [vmem:[%s6 + $0x250] sm:$0xff]
  %v3384 = vld [vmem:[%s6 + $0x258] sm:$0xff]
  %v3385 = vld [vmem:[%s6 + $0x260] sm:$0xff]
  %v3386 = vld [vmem:[%s6 + $0x268] sm:$0xff]
  %v3387 = vld [vmem:[%s6 + $0x270] sm:$0xff]
  %v3388 = vld [vmem:[%s6 + $0x278] sm:$0xff]
  %v3389 = vld [vmem:[%s6 + $0x280] sm:$0xff]
  %v3390 = vld [vmem:[%s6 + $0x288] sm:$0xff]
  %v3391 = vld [vmem:[%s6 + $0x290] sm:$0xff]
  %v3392 = vld [vmem:[%s6 + $0x298] sm:$0xff]
  %v3393 = vld [vmem:[%s6 + $0x2a0] sm:$0xff]
  %v3394 = vld [vmem:[%s6 + $0x2a8] sm:$0xff]
  %v3395 = vld [vmem:[%s6 + $0x2b0] sm:$0xff]
  %v3396 = vld [vmem:[%s6 + $0x2b8] sm:$0xff]
  %v3397 = vld [vmem:[%s6 + $0x2c0] sm:$0xff]
  %v3398 = vld [vmem:[%s6 + $0x2c8] sm:$0xff]
  %v3399 = vld [vmem:[%s6 + $0x2d0] sm:$0xff]
  %v3400 = vld [vmem:[%s6 + $0x2d8] sm:$0xff]
  %v3401 = vld [vmem:[%s6 + $0x2e0] sm:$0xff]
  %v3402 = vld [vmem:[%s6 + $0x2e8] sm:$0xff]
  %v3403 = vld [vmem:[%s6 + $0x2f0] sm:$0xff]
  %v3404 = vld [vmem:[%s6 + $0x2f8] sm:$0xff]
  %v3405 = vld [vmem:[%s6 + $0x300] sm:$0xff]
  %v3406 = vld [vmem:[%s6 + $0x308] sm:$0xff]
  %v3407 = vld [vmem:[%s6 + $0x310] sm:$0xff]
  %v3408 = vld [vmem:[%s6 + $0x318] sm:$0xff]
  %v3409 = vld [vmem:[%s6 + $0x320] sm:$0xff]
  %v3410 = vld [vmem:[%s6 + $0x328] sm:$0xff]
  %v3411 = vld [vmem:[%s6 + $0x330] sm:$0xff]
  %v3412 = vld [vmem:[%s6 + $0x338] sm:$0xff]
  %v3413 = vld [vmem:[%s6 + $0x340] sm:$0xff]
  %v3414 = vld [vmem:[%s6 + $0x348] sm:$0xff]
  %v3415 = vld [vmem:[%s6 + $0x350] sm:$0xff]
  %v3416 = vld [vmem:[%s6 + $0x358] sm:$0xff]
  %v3417 = vld [vmem:[%s6 + $0x360] sm:$0xff]
  %v3418 = vld [vmem:[%s6 + $0x368] sm:$0xff]
  %v3419 = vld [vmem:[%s6 + $0x370] sm:$0xff]
  %v3420 = vld [vmem:[%s6 + $0x378] sm:$0xff]
  %v3421 = vld [vmem:[%s6 + $0x380] sm:$0xff]
  %v3422 = vld [vmem:[%s6 + $0x388] sm:$0xff]
  %v3423 = vld [vmem:[%s6 + $0x390] sm:$0xff]
  %v3424 = vld [vmem:[%s6 + $0x398] sm:$0xff]
  %v3425 = vld [vmem:[%s6 + $0x3a0] sm:$0xff]
  %v3426 = vld [vmem:[%s6 + $0x3a8] sm:$0xff]
  %v3427 = vld [vmem:[%s6 + $0x3b0] sm:$0xff]
  %v3428 = vld [vmem:[%s6 + $0x3b8] sm:$0xff]
  %v3429 = vld [vmem:[%s6 + $0x3c0] sm:$0xff]
  %v3430 = vld [vmem:[%s6 + $0x3c8] sm:$0xff]
  %v3431 = vld [vmem:[%s6 + $0x3d0] sm:$0xff]
  %v3432 = vld [vmem:[%s6 + $0x3d8] sm:$0xff]
  %v3433 = vld [vmem:[%s6 + $0x3e0] sm:$0xff]
  %v3434 = vld [vmem:[%s6 + $0x3e8] sm:$0xff]
  %v3435 = vld [vmem:[%s6 + $0x3f0] sm:$0xff]
  %v3436 = vld [vmem:[%s6 + $0x3f8] sm:$0xff]
  %v3437 = vld [vmem:[%s7] sm:$0xf]
  %v3439 = vperm.slane %v3437, 0
  %v3440 = vperm.slane %v3437, 1
  %v3441 = vperm.slane %v3437, 2
  %v3442 = vperm.slane %v3437, 3
  %v3575 = vunpack.c.l.b16 %v3309
  %v3576 = vunpack.c.h.b16 %v3309
  %v3577 = vunpack.c.l.b16 %v3310
  %v3578 = vunpack.c.h.b16 %v3310
  %v3579 = vunpack.c.l.b16 %v3311
  %v3580 = vunpack.c.h.b16 %v3311
  %v3581 = vunpack.c.l.b16 %v3312
  %v3582 = vunpack.c.h.b16 %v3312
  %v3583 = vunpack.c.l.b16 %v3313
  %v3584 = vunpack.c.h.b16 %v3313
  %v3585 = vunpack.c.l.b16 %v3314
  %v3586 = vunpack.c.h.b16 %v3314
  %v3587 = vunpack.c.l.b16 %v3315
  %v3588 = vunpack.c.h.b16 %v3315
  %v3589 = vunpack.c.l.b16 %v3316
  %v3590 = vunpack.c.h.b16 %v3316
  %v3591 = vunpack.c.l.b16 %v3317
  %v3592 = vunpack.c.h.b16 %v3317
  %v3593 = vunpack.c.l.b16 %v3318
  %v3594 = vunpack.c.h.b16 %v3318
  %v3595 = vunpack.c.l.b16 %v3319
  %v3596 = vunpack.c.h.b16 %v3319
  %v3597 = vunpack.c.l.b16 %v3320
  %v3598 = vunpack.c.h.b16 %v3320
  %v3599 = vunpack.c.l.b16 %v3321
  %v3600 = vunpack.c.h.b16 %v3321
  %v3601 = vunpack.c.l.b16 %v3322
  %v3602 = vunpack.c.h.b16 %v3322
  %v3603 = vunpack.c.l.b16 %v3323
  %v3604 = vunpack.c.h.b16 %v3323
  %v3605 = vunpack.c.l.b16 %v3324
  %v3606 = vunpack.c.h.b16 %v3324
  %v3607 = vunpack.c.l.b16 %v3325
  %v3608 = vunpack.c.h.b16 %v3325
  %v3609 = vunpack.c.l.b16 %v3326
  %v3610 = vunpack.c.h.b16 %v3326
  %v3611 = vunpack.c.l.b16 %v3327
  %v3612 = vunpack.c.h.b16 %v3327
  %v3613 = vunpack.c.l.b16 %v3328
  %v3614 = vunpack.c.h.b16 %v3328
  %v3615 = vunpack.c.l.b16 %v3329
  %v3616 = vunpack.c.h.b16 %v3329
  %v3617 = vunpack.c.l.b16 %v3330
  %v3618 = vunpack.c.h.b16 %v3330
  %v3619 = vunpack.c.l.b16 %v3331
  %v3620 = vunpack.c.h.b16 %v3331
  %v3621 = vunpack.c.l.b16 %v3332
  %v3622 = vunpack.c.h.b16 %v3332
  %v3623 = vunpack.c.l.b16 %v3333
  %v3624 = vunpack.c.h.b16 %v3333
  %v3625 = vunpack.c.l.b16 %v3334
  %v3626 = vunpack.c.h.b16 %v3334
  %v3627 = vunpack.c.l.b16 %v3335
  %v3628 = vunpack.c.h.b16 %v3335
  %v3629 = vunpack.c.l.b16 %v3336
  %v3630 = vunpack.c.h.b16 %v3336
  %v3631 = vunpack.c.l.b16 %v3337
  %v3632 = vunpack.c.h.b16 %v3337
  %v3633 = vunpack.c.l.b16 %v3338
  %v3634 = vunpack.c.h.b16 %v3338
  %v3635 = vunpack.c.l.b16 %v3339
  %v3636 = vunpack.c.h.b16 %v3339
  %v3637 = vunpack.c.l.b16 %v3340
  %v3638 = vunpack.c.h.b16 %v3340
  %v3639 = vunpack.c.l.b16 %v3341
  %v3640 = vunpack.c.h.b16 %v3341
  %v3641 = vunpack.c.l.b16 %v3342
  %v3642 = vunpack.c.h.b16 %v3342
  %v3643 = vunpack.c.l.b16 %v3343
  %v3644 = vunpack.c.h.b16 %v3343
  %v3645 = vunpack.c.l.b16 %v3344
  %v3646 = vunpack.c.h.b16 %v3344
  %v3647 = vunpack.c.l.b16 %v3345
  %v3648 = vunpack.c.h.b16 %v3345
  %v3649 = vunpack.c.l.b16 %v3346
  %v3650 = vunpack.c.h.b16 %v3346
  %v3651 = vunpack.c.l.b16 %v3347
  %v3652 = vunpack.c.h.b16 %v3347
  %v3653 = vunpack.c.l.b16 %v3348
  %v3654 = vunpack.c.h.b16 %v3348
  %v3655 = vunpack.c.l.b16 %v3349
  %v3656 = vunpack.c.h.b16 %v3349
  %v3657 = vunpack.c.l.b16 %v3350
  %v3658 = vunpack.c.h.b16 %v3350
  %v3659 = vunpack.c.l.b16 %v3351
  %v3660 = vunpack.c.h.b16 %v3351
  %v3661 = vunpack.c.l.b16 %v3352
  %v3662 = vunpack.c.h.b16 %v3352
  %v3663 = vunpack.c.l.b16 %v3353
  %v3664 = vunpack.c.h.b16 %v3353
  %v3665 = vunpack.c.l.b16 %v3354
  %v3666 = vunpack.c.h.b16 %v3354
  %v3667 = vunpack.c.l.b16 %v3355
  %v3668 = vunpack.c.h.b16 %v3355
  %v3669 = vunpack.c.l.b16 %v3356
  %v3670 = vunpack.c.h.b16 %v3356
  %v3671 = vunpack.c.l.b16 %v3357
  %v3672 = vunpack.c.h.b16 %v3357
  %v3673 = vunpack.c.l.b16 %v3358
  %v3674 = vunpack.c.h.b16 %v3358
  %v3675 = vunpack.c.l.b16 %v3359
  %v3676 = vunpack.c.h.b16 %v3359
  %v3677 = vunpack.c.l.b16 %v3360
  %v3678 = vunpack.c.h.b16 %v3360
  %v3679 = vunpack.c.l.b16 %v3361
  %v3680 = vunpack.c.h.b16 %v3361
  %v3681 = vunpack.c.l.b16 %v3362
  %v3682 = vunpack.c.h.b16 %v3362
  %v3683 = vunpack.c.l.b16 %v3363
  %v3684 = vunpack.c.h.b16 %v3363
  %v3685 = vunpack.c.l.b16 %v3364
  %v3686 = vunpack.c.h.b16 %v3364
  %v3687 = vunpack.c.l.b16 %v3365
  %v3688 = vunpack.c.h.b16 %v3365
  %v3689 = vunpack.c.l.b16 %v3366
  %v3690 = vunpack.c.h.b16 %v3366
  %v3691 = vunpack.c.l.b16 %v3367
  %v3692 = vunpack.c.h.b16 %v3367
  %v3693 = vunpack.c.l.b16 %v3368
  %v3694 = vunpack.c.h.b16 %v3368
  %v3695 = vunpack.c.l.b16 %v3369
  %v3696 = vunpack.c.h.b16 %v3369
  %v3697 = vunpack.c.l.b16 %v3370
  %v3698 = vunpack.c.h.b16 %v3370
  %v3699 = vunpack.c.l.b16 %v3371
  %v3700 = vunpack.c.h.b16 %v3371
  %v3701 = vunpack.c.l.b16 %v3372
  %v3702 = vunpack.c.h.b16 %v3372
  %v3703 = vunpack.c.l.b16 %v3373
  %v3704 = vunpack.c.h.b16 %v3373
  %v3705 = vunpack.c.l.b16 %v3374
  %v3706 = vunpack.c.h.b16 %v3374
  %v3707 = vunpack.c.l.b16 %v3375
  %v3708 = vunpack.c.h.b16 %v3375
  %v3709 = vunpack.c.l.b16 %v3376
  %v3710 = vunpack.c.h.b16 %v3376
  %v3711 = vunpack.c.l.b16 %v3377
  %v3712 = vunpack.c.h.b16 %v3377
  %v3713 = vunpack.c.l.b16 %v3378
  %v3714 = vunpack.c.h.b16 %v3378
  %v3715 = vunpack.c.l.b16 %v3379
  %v3716 = vunpack.c.h.b16 %v3379
  %v3717 = vunpack.c.l.b16 %v3380
  %v3718 = vunpack.c.h.b16 %v3380
  %v3719 = vunpack.c.l.b16 %v3381
  %v3720 = vunpack.c.h.b16 %v3381
  %v3721 = vunpack.c.l.b16 %v3382
  %v3722 = vunpack.c.h.b16 %v3382
  %v3723 = vunpack.c.l.b16 %v3383
  %v3724 = vunpack.c.h.b16 %v3383
  %v3725 = vunpack.c.l.b16 %v3384
  %v3726 = vunpack.c.h.b16 %v3384
  %v3727 = vunpack.c.l.b16 %v3385
  %v3728 = vunpack.c.h.b16 %v3385
  %v3729 = vunpack.c.l.b16 %v3386
  %v3730 = vunpack.c.h.b16 %v3386
  %v3731 = vunpack.c.l.b16 %v3387
  %v3732 = vunpack.c.h.b16 %v3387
  %v3733 = vunpack.c.l.b16 %v3388
  %v3734 = vunpack.c.h.b16 %v3388
  %v3735 = vunpack.c.l.b16 %v3389
  %v3736 = vunpack.c.h.b16 %v3389
  %v3737 = vunpack.c.l.b16 %v3390
  %v3738 = vunpack.c.h.b16 %v3390
  %v3739 = vunpack.c.l.b16 %v3391
  %v3740 = vunpack.c.h.b16 %v3391
  %v3741 = vunpack.c.l.b16 %v3392
  %v3742 = vunpack.c.h.b16 %v3392
  %v3743 = vunpack.c.l.b16 %v3393
  %v3744 = vunpack.c.h.b16 %v3393
  %v3745 = vunpack.c.l.b16 %v3394
  %v3746 = vunpack.c.h.b16 %v3394
  %v3747 = vunpack.c.l.b16 %v3395
  %v3748 = vunpack.c.h.b16 %v3395
  %v3749 = vunpack.c.l.b16 %v3396
  %v3750 = vunpack.c.h.b16 %v3396
  %v3751 = vunpack.c.l.b16 %v3397
  %v3752 = vunpack.c.h.b16 %v3397
  %v3753 = vunpack.c.l.b16 %v3398
  %v3754 = vunpack.c.h.b16 %v3398
  %v3755 = vunpack.c.l.b16 %v3399
  %v3756 = vunpack.c.h.b16 %v3399
  %v3757 = vunpack.c.l.b16 %v3400
  %v3758 = vunpack.c.h.b16 %v3400
  %v3759 = vunpack.c.l.b16 %v3401
  %v3760 = vunpack.c.h.b16 %v3401
  %v3761 = vunpack.c.l.b16 %v3402
  %v3762 = vunpack.c.h.b16 %v3402
  %v3763 = vunpack.c.l.b16 %v3403
  %v3764 = vunpack.c.h.b16 %v3403
  %v3765 = vunpack.c.l.b16 %v3404
  %v3766 = vunpack.c.h.b16 %v3404
  %v3767 = vunpack.c.l.b16 %v3405
  %v3768 = vunpack.c.h.b16 %v3405
  %v3769 = vunpack.c.l.b16 %v3406
  %v3770 = vunpack.c.h.b16 %v3406
  %v3771 = vunpack.c.l.b16 %v3407
  %v3772 = vunpack.c.h.b16 %v3407
  %v3773 = vunpack.c.l.b16 %v3408
  %v3774 = vunpack.c.h.b16 %v3408
  %v3775 = vunpack.c.l.b16 %v3409
  %v3776 = vunpack.c.h.b16 %v3409
  %v3777 = vunpack.c.l.b16 %v3410
  %v3778 = vunpack.c.h.b16 %v3410
  %v3779 = vunpack.c.l.b16 %v3411
  %v3780 = vunpack.c.h.b16 %v3411
  %v3781 = vunpack.c.l.b16 %v3412
  %v3782 = vunpack.c.h.b16 %v3412
  %v3783 = vunpack.c.l.b16 %v3413
  %v3784 = vunpack.c.h.b16 %v3413
  %v3785 = vunpack.c.l.b16 %v3414
  %v3786 = vunpack.c.h.b16 %v3414
  %v3787 = vunpack.c.l.b16 %v3415
  %v3788 = vunpack.c.h.b16 %v3415
  %v3789 = vunpack.c.l.b16 %v3416
  %v3790 = vunpack.c.h.b16 %v3416
  %v3791 = vunpack.c.l.b16 %v3417
  %v3792 = vunpack.c.h.b16 %v3417
  %v3793 = vunpack.c.l.b16 %v3418
  %v3794 = vunpack.c.h.b16 %v3418
  %v3795 = vunpack.c.l.b16 %v3419
  %v3796 = vunpack.c.h.b16 %v3419
  %v3797 = vunpack.c.l.b16 %v3420
  %v3798 = vunpack.c.h.b16 %v3420
  %v3799 = vunpack.c.l.b16 %v3421
  %v3800 = vunpack.c.h.b16 %v3421
  %v3801 = vunpack.c.l.b16 %v3422
  %v3802 = vunpack.c.h.b16 %v3422
  %v3803 = vunpack.c.l.b16 %v3423
  %v3804 = vunpack.c.h.b16 %v3423
  %v3805 = vunpack.c.l.b16 %v3424
  %v3806 = vunpack.c.h.b16 %v3424
  %v3807 = vunpack.c.l.b16 %v3425
  %v3808 = vunpack.c.h.b16 %v3425
  %v3809 = vunpack.c.l.b16 %v3426
  %v3810 = vunpack.c.h.b16 %v3426
  %v3811 = vunpack.c.l.b16 %v3427
  %v3812 = vunpack.c.h.b16 %v3427
  %v3813 = vunpack.c.l.b16 %v3428
  %v3814 = vunpack.c.h.b16 %v3428
  %v3815 = vunpack.c.l.b16 %v3429
  %v3816 = vunpack.c.h.b16 %v3429
  %v3817 = vunpack.c.l.b16 %v3430
  %v3818 = vunpack.c.h.b16 %v3430
  %v3819 = vunpack.c.l.b16 %v3431
  %v3820 = vunpack.c.h.b16 %v3431
  %v3821 = vunpack.c.l.b16 %v3432
  %v3822 = vunpack.c.h.b16 %v3432
  %v3823 = vunpack.c.l.b16 %v3433
  %v3824 = vunpack.c.h.b16 %v3433
  %v3825 = vunpack.c.l.b16 %v3434
  %v3826 = vunpack.c.h.b16 %v3434
  %v3827 = vunpack.c.l.b16 %v3435
  %v3828 = vunpack.c.h.b16 %v3435
  %v3829 = vunpack.c.l.b16 %v3436
  %v3830 = vunpack.c.h.b16 %v3436
  %v3831 = vpack.c.b16 %v3579, %v3575
  %v3832 = vpack.c.b16 %v3580, %v3576
  %v3833 = vpack.c.b16 %v3581, %v3577
  %v3834 = vpack.c.b16 %v3582, %v3578
  %v3835 = vpack.c.b16 %v3587, %v3583
  %v3836 = vpack.c.b16 %v3588, %v3584
  %v3837 = vpack.c.b16 %v3589, %v3585
  %v3838 = vpack.c.b16 %v3590, %v3586
  %v3839 = vpack.c.b16 %v3595, %v3591
  %v3840 = vpack.c.b16 %v3596, %v3592
  %v3841 = vpack.c.b16 %v3597, %v3593
  %v3842 = vpack.c.b16 %v3598, %v3594
  %v3843 = vpack.c.b16 %v3603, %v3599
  %v3844 = vpack.c.b16 %v3604, %v3600
  %v3845 = vpack.c.b16 %v3605, %v3601
  %v3846 = vpack.c.b16 %v3606, %v3602
  %v3847 = vpack.c.b16 %v3611, %v3607
  %v3848 = vpack.c.b16 %v3612, %v3608
  %v3849 = vpack.c.b16 %v3613, %v3609
  %v3850 = vpack.c.b16 %v3614, %v3610
  %v3851 = vpack.c.b16 %v3619, %v3615
  %v3852 = vpack.c.b16 %v3620, %v3616
  %v3853 = vpack.c.b16 %v3621, %v3617
  %v3854 = vpack.c.b16 %v3622, %v3618
  %v3855 = vpack.c.b16 %v3627, %v3623
  %v3856 = vpack.c.b16 %v3628, %v3624
  %v3857 = vpack.c.b16 %v3629, %v3625
  %v3858 = vpack.c.b16 %v3630, %v3626
  %v3859 = vpack.c.b16 %v3635, %v3631
  %v3860 = vpack.c.b16 %v3636, %v3632
  %v3861 = vpack.c.b16 %v3637, %v3633
  %v3862 = vpack.c.b16 %v3638, %v3634
  %v3863 = vpack.c.b16 %v3643, %v3639
  %v3864 = vpack.c.b16 %v3644, %v3640
  %v3865 = vpack.c.b16 %v3645, %v3641
  %v3866 = vpack.c.b16 %v3646, %v3642
  %v3867 = vpack.c.b16 %v3651, %v3647
  %v3868 = vpack.c.b16 %v3652, %v3648
  %v3869 = vpack.c.b16 %v3653, %v3649
  %v3870 = vpack.c.b16 %v3654, %v3650
  %v3871 = vpack.c.b16 %v3659, %v3655
  %v3872 = vpack.c.b16 %v3660, %v3656
  %v3873 = vpack.c.b16 %v3661, %v3657
  %v3874 = vpack.c.b16 %v3662, %v3658
  %v3875 = vpack.c.b16 %v3667, %v3663
  %v3876 = vpack.c.b16 %v3668, %v3664
  %v3877 = vpack.c.b16 %v3669, %v3665
  %v3878 = vpack.c.b16 %v3670, %v3666
  %v3879 = vpack.c.b16 %v3675, %v3671
  %v3880 = vpack.c.b16 %v3676, %v3672
  %v3881 = vpack.c.b16 %v3677, %v3673
  %v3882 = vpack.c.b16 %v3678, %v3674
  %v3883 = vpack.c.b16 %v3683, %v3679
  %v3884 = vpack.c.b16 %v3684, %v3680
  %v3885 = vpack.c.b16 %v3685, %v3681
  %v3886 = vpack.c.b16 %v3686, %v3682
  %v3887 = vpack.c.b16 %v3691, %v3687
  %v3888 = vpack.c.b16 %v3692, %v3688
  %v3889 = vpack.c.b16 %v3693, %v3689
  %v3890 = vpack.c.b16 %v3694, %v3690
  %v3891 = vpack.c.b16 %v3699, %v3695
  %v3892 = vpack.c.b16 %v3700, %v3696
  %v3893 = vpack.c.b16 %v3701, %v3697
  %v3894 = vpack.c.b16 %v3702, %v3698
  %v3895 = vpack.c.b16 %v3707, %v3703
  %v3896 = vpack.c.b16 %v3708, %v3704
  %v3897 = vpack.c.b16 %v3709, %v3705
  %v3898 = vpack.c.b16 %v3710, %v3706
  %v3899 = vpack.c.b16 %v3715, %v3711
  %v3900 = vpack.c.b16 %v3716, %v3712
  %v3901 = vpack.c.b16 %v3717, %v3713
  %v3902 = vpack.c.b16 %v3718, %v3714
  %v3903 = vpack.c.b16 %v3723, %v3719
  %v3904 = vpack.c.b16 %v3724, %v3720
  %v3905 = vpack.c.b16 %v3725, %v3721
  %v3906 = vpack.c.b16 %v3726, %v3722
  %v3907 = vpack.c.b16 %v3731, %v3727
  %v3908 = vpack.c.b16 %v3732, %v3728
  %v3909 = vpack.c.b16 %v3733, %v3729
  %v3910 = vpack.c.b16 %v3734, %v3730
  %v3911 = vpack.c.b16 %v3739, %v3735
  %v3912 = vpack.c.b16 %v3740, %v3736
  %v3913 = vpack.c.b16 %v3741, %v3737
  %v3914 = vpack.c.b16 %v3742, %v3738
  %v3915 = vpack.c.b16 %v3747, %v3743
  %v3916 = vpack.c.b16 %v3748, %v3744
  %v3917 = vpack.c.b16 %v3749, %v3745
  %v3918 = vpack.c.b16 %v3750, %v3746
  %v3919 = vpack.c.b16 %v3755, %v3751
  %v3920 = vpack.c.b16 %v3756, %v3752
  %v3921 = vpack.c.b16 %v3757, %v3753
  %v3922 = vpack.c.b16 %v3758, %v3754
  %v3923 = vpack.c.b16 %v3763, %v3759
  %v3924 = vpack.c.b16 %v3764, %v3760
  %v3925 = vpack.c.b16 %v3765, %v3761
  %v3926 = vpack.c.b16 %v3766, %v3762
  %v3927 = vpack.c.b16 %v3771, %v3767
  %v3928 = vpack.c.b16 %v3772, %v3768
  %v3929 = vpack.c.b16 %v3773, %v3769
  %v3930 = vpack.c.b16 %v3774, %v3770
  %v3931 = vpack.c.b16 %v3779, %v3775
  %v3932 = vpack.c.b16 %v3780, %v3776
  %v3933 = vpack.c.b16 %v3781, %v3777
  %v3934 = vpack.c.b16 %v3782, %v3778
  %v3935 = vpack.c.b16 %v3787, %v3783
  %v3936 = vpack.c.b16 %v3788, %v3784
  %v3937 = vpack.c.b16 %v3789, %v3785
  %v3938 = vpack.c.b16 %v3790, %v3786
  %v3939 = vpack.c.b16 %v3795, %v3791
  %v3940 = vpack.c.b16 %v3796, %v3792
  %v3941 = vpack.c.b16 %v3797, %v3793
  %v3942 = vpack.c.b16 %v3798, %v3794
  %v3943 = vpack.c.b16 %v3803, %v3799
  %v3944 = vpack.c.b16 %v3804, %v3800
  %v3945 = vpack.c.b16 %v3805, %v3801
  %v3946 = vpack.c.b16 %v3806, %v3802
  %v3947 = vpack.c.b16 %v3811, %v3807
  %v3948 = vpack.c.b16 %v3812, %v3808
  %v3949 = vpack.c.b16 %v3813, %v3809
  %v3950 = vpack.c.b16 %v3814, %v3810
  %v3951 = vpack.c.b16 %v3819, %v3815
  %v3952 = vpack.c.b16 %v3820, %v3816
  %v3953 = vpack.c.b16 %v3821, %v3817
  %v3954 = vpack.c.b16 %v3822, %v3818
  %v3955 = vpack.c.b16 %v3827, %v3823
  %v3956 = vpack.c.b16 %v3828, %v3824
  %v3957 = vpack.c.b16 %v3829, %v3825
  %v3958 = vpack.c.b16 %v3830, %v3826
  %4087 = vmatpush.bf16.msra.mxu0 %v3859
  %4088 = vmatpush.bf16.msra.mxu0 %v3855
  %4089 = vmatpush.bf16.msra.mxu0 %v3851
  %4090 = vmatpush.bf16.msra.mxu0 %v3847
  %4091 = vmatpush.bf16.msra.mxu0 %v3843
  %4092 = vmatpush.bf16.msra.mxu0 %v3839
  %4093 = vmatpush.bf16.msra.mxu0 %v3835
  %4094 = vmatpush.bf16.msra.mxu0 %v3831
  %4095 = vmatmul.bf16.gmra.mxu0 %v3277
  %v4096 = vpop.f32.mrf.mxu0
  %v4097 = vadd.f32 %v3439, %v4096
  %v4098 = vpop.f32.mrf.mxu0
  %v4099 = vadd.f32 %v3439, %v4098
  %4100 = vmatmul.bf16.gmra.mxu0 %v3281
  %v4101 = vpop.f32.mrf.mxu0
  %v4102 = vadd.f32 %v3439, %v4101
  %v4103 = vpop.f32.mrf.mxu0
  %v4104 = vadd.f32 %v3439, %v4103
  %4105 = vmatmul.bf16.gmra.mxu0 %v3285
  %v4106 = vpop.f32.mrf.mxu0
  %v4107 = vadd.f32 %v3439, %v4106
  %v4108 = vpop.f32.mrf.mxu0
  %v4109 = vadd.f32 %v3439, %v4108
  %4110 = vmatmul.bf16.gmra.mxu0 %v3289
  %v4111 = vpop.f32.mrf.mxu0
  %v4112 = vadd.f32 %v3439, %v4111
  %v4113 = vpop.f32.mrf.mxu0
  %v4114 = vadd.f32 %v3439, %v4113
  %4115 = vmatmul.bf16.gmra.mxu0 %v3293
  %v4116 = vpop.f32.mrf.mxu0
  %v4117 = vadd.f32 %v3439, %v4116
  %v4118 = vpop.f32.mrf.mxu0
  %v4119 = vadd.f32 %v3439, %v4118
  %4120 = vmatmul.bf16.gmra.mxu0 %v3297
  %v4121 = vpop.f32.mrf.mxu0
  %v4122 = vadd.f32 %v3439, %v4121
  %v4123 = vpop.f32.mrf.mxu0
  %v4124 = vadd.f32 %v3439, %v4123
  %4125 = vmatmul.bf16.gmra.mxu0 %v3301
  %v4126 = vpop.f32.mrf.mxu0
  %v4127 = vadd.f32 %v3439, %v4126
  %v4128 = vpop.f32.mrf.mxu0
  %v4129 = vadd.f32 %v3439, %v4128
  %4130 = vmatmul.bf16.gmra.mxu0 %v3305
  %v4131 = vpop.f32.mrf.mxu0
  %v4132 = vadd.f32 %v3439, %v4131
  %v4133 = vpop.f32.mrf.mxu0
  %v4134 = vadd.f32 %v3439, %v4133
  %4135 = vdwg.mxu0
  %4136 = vmatpush.bf16.msra.mxu0 %v3891
  %4137 = vmatpush.bf16.msra.mxu0 %v3887
  %4138 = vmatpush.bf16.msra.mxu0 %v3883
  %4139 = vmatpush.bf16.msra.mxu0 %v3879
  %4140 = vmatpush.bf16.msra.mxu0 %v3875
  %4141 = vmatpush.bf16.msra.mxu0 %v3871
  %4142 = vmatpush.bf16.msra.mxu0 %v3867
  %4143 = vmatpush.bf16.msra.mxu0 %v3863
  %4144 = vmatmul.bf16.gmra.mxu0 %v3278
  %v4145 = vpop.f32.mrf.mxu0
  %v4146 = vadd.f32 %v4097, %v4145
  %v4147 = vpop.f32.mrf.mxu0
  %v4148 = vadd.f32 %v4099, %v4147
  %4149 = vmatmul.bf16.gmra.mxu0 %v3282
  %v4150 = vpop.f32.mrf.mxu0
  %v4151 = vadd.f32 %v4102, %v4150
  %v4152 = vpop.f32.mrf.mxu0
  %v4153 = vadd.f32 %v4104, %v4152
  %4154 = vmatmul.bf16.gmra.mxu0 %v3286
  %v4155 = vpop.f32.mrf.mxu0
  %v4156 = vadd.f32 %v4107, %v4155
  %v4157 = vpop.f32.mrf.mxu0
  %v4158 = vadd.f32 %v4109, %v4157
  %4159 = vmatmul.bf16.gmra.mxu0 %v3290
  %v4160 = vpop.f32.mrf.mxu0
  %v4161 = vadd.f32 %v4112, %v4160
  %v4162 = vpop.f32.mrf.mxu0
  %v4163 = vadd.f32 %v4114, %v4162
  %4164 = vmatmul.bf16.gmra.mxu0 %v3294
  %v4165 = vpop.f32.mrf.mxu0
  %v4166 = vadd.f32 %v4117, %v4165
  %v4167 = vpop.f32.mrf.mxu0
  %v4168 = vadd.f32 %v4119, %v4167
  %4169 = vmatmul.bf16.gmra.mxu0 %v3298
  %v4170 = vpop.f32.mrf.mxu0
  %v4171 = vadd.f32 %v4122, %v4170
  %v4172 = vpop.f32.mrf.mxu0
  %v4173 = vadd.f32 %v4124, %v4172
  %4174 = vmatmul.bf16.gmra.mxu0 %v3302
  %v4175 = vpop.f32.mrf.mxu0
  %v4176 = vadd.f32 %v4127, %v4175
  %v4177 = vpop.f32.mrf.mxu0
  %v4178 = vadd.f32 %v4129, %v4177
  %4179 = vmatmul.bf16.gmra.mxu0 %v3306
  %v4180 = vpop.f32.mrf.mxu0
  %v4181 = vadd.f32 %v4132, %v4180
  %v4182 = vpop.f32.mrf.mxu0
  %v4183 = vadd.f32 %v4134, %v4182
  %4184 = vdwg.mxu0
  %4185 = vmatpush.bf16.msra.mxu0 %v3923
  %4186 = vmatpush.bf16.msra.mxu0 %v3919
  %4187 = vmatpush.bf16.msra.mxu0 %v3915
  %4188 = vmatpush.bf16.msra.mxu0 %v3911
  %4189 = vmatpush.bf16.msra.mxu0 %v3907
  %4190 = vmatpush.bf16.msra.mxu0 %v3903
  %4191 = vmatpush.bf16.msra.mxu0 %v3899
  %4192 = vmatpush.bf16.msra.mxu0 %v3895
  %4193 = vmatmul.bf16.gmra.mxu0 %v3279
  %v4194 = vpop.f32.mrf.mxu0
  %v4195 = vadd.f32 %v4146, %v4194
  %v4196 = vpop.f32.mrf.mxu0
  %v4197 = vadd.f32 %v4148, %v4196
  %4198 = vmatmul.bf16.gmra.mxu0 %v3283
  %v4199 = vpop.f32.mrf.mxu0
  %v4200 = vadd.f32 %v4151, %v4199
  %v4201 = vpop.f32.mrf.mxu0
  %v4202 = vadd.f32 %v4153, %v4201
  %4203 = vmatmul.bf16.gmra.mxu0 %v3287
  %v4204 = vpop.f32.mrf.mxu0
  %v4205 = vadd.f32 %v4156, %v4204
  %v4206 = vpop.f32.mrf.mxu0
  %v4207 = vadd.f32 %v4158, %v4206
  %4208 = vmatmul.bf16.gmra.mxu0 %v3291
  %v4209 = vpop.f32.mrf.mxu0
  %v4210 = vadd.f32 %v4161, %v4209
  %v4211 = vpop.f32.mrf.mxu0
  %v4212 = vadd.f32 %v4163, %v4211
  %4213 = vmatmul.bf16.gmra.mxu0 %v3295
  %v4214 = vpop.f32.mrf.mxu0
  %v4215 = vadd.f32 %v4166, %v4214
  %v4216 = vpop.f32.mrf.mxu0
  %v4217 = vadd.f32 %v4168, %v4216
  %4218 = vmatmul.bf16.gmra.mxu0 %v3299
  %v4219 = vpop.f32.mrf.mxu0
  %v4220 = vadd.f32 %v4171, %v4219
  %v4221 = vpop.f32.mrf.mxu0
  %v4222 = vadd.f32 %v4173, %v4221
  %4223 = vmatmul.bf16.gmra.mxu0 %v3303
  %v4224 = vpop.f32.mrf.mxu0
  %v4225 = vadd.f32 %v4176, %v4224
  %v4226 = vpop.f32.mrf.mxu0
  %v4227 = vadd.f32 %v4178, %v4226
  %4228 = vmatmul.bf16.gmra.mxu0 %v3307
  %v4229 = vpop.f32.mrf.mxu0
  %v4230 = vadd.f32 %v4181, %v4229
  %v4231 = vpop.f32.mrf.mxu0
  %v4232 = vadd.f32 %v4183, %v4231
  %4233 = vdwg.mxu0
  %4234 = vmatpush.bf16.msra.mxu0 %v3955
  %4235 = vmatpush.bf16.msra.mxu0 %v3951
  %4236 = vmatpush.bf16.msra.mxu0 %v3947
  %4237 = vmatpush.bf16.msra.mxu0 %v3943
  %4238 = vmatpush.bf16.msra.mxu0 %v3939
  %4239 = vmatpush.bf16.msra.mxu0 %v3935
  %4240 = vmatpush.bf16.msra.mxu0 %v3931
  %4241 = vmatpush.bf16.msra.mxu0 %v3927
  %4242 = vmatmul.bf16.gmra.mxu0 %v3280
  %v4243 = vpop.f32.mrf.mxu0
  %v4244 = vadd.f32 %v4195, %v4243
  %v4245 = vpop.f32.mrf.mxu0
  %v4246 = vadd.f32 %v4197, %v4245
  %4247 = vmatmul.bf16.gmra.mxu0 %v3284
  %v4248 = vpop.f32.mrf.mxu0
  %v4249 = vadd.f32 %v4200, %v4248
  %v4250 = vpop.f32.mrf.mxu0
  %v4251 = vadd.f32 %v4202, %v4250
  %4252 = vmatmul.bf16.gmra.mxu0 %v3288
  %v4253 = vpop.f32.mrf.mxu0
  %v4254 = vadd.f32 %v4205, %v4253
  %v4255 = vpop.f32.mrf.mxu0
  %v4256 = vadd.f32 %v4207, %v4255
  %4257 = vmatmul.bf16.gmra.mxu0 %v3292
  %v4258 = vpop.f32.mrf.mxu0
  %v4259 = vadd.f32 %v4210, %v4258
  %v4260 = vpop.f32.mrf.mxu0
  %v4261 = vadd.f32 %v4212, %v4260
  %4262 = vmatmul.bf16.gmra.mxu0 %v3296
  %v4263 = vpop.f32.mrf.mxu0
  %v4264 = vadd.f32 %v4215, %v4263
  %v4265 = vpop.f32.mrf.mxu0
  %v4266 = vadd.f32 %v4217, %v4265
  %4267 = vmatmul.bf16.gmra.mxu0 %v3300
  %v4268 = vpop.f32.mrf.mxu0
  %v4269 = vadd.f32 %v4220, %v4268
  %v4270 = vpop.f32.mrf.mxu0
  %v4271 = vadd.f32 %v4222, %v4270
  %4272 = vmatmul.bf16.gmra.mxu0 %v3304
  %v4273 = vpop.f32.mrf.mxu0
  %v4274 = vadd.f32 %v4225, %v4273
  %v4275 = vpop.f32.mrf.mxu0
  %v4276 = vadd.f32 %v4227, %v4275
  %4277 = vmatmul.bf16.gmra.mxu0 %v3308
  %v4278 = vpop.f32.mrf.mxu0
  %v4279 = vadd.f32 %v4230, %v4278
  %v4280 = vpop.f32.mrf.mxu0
  %v4281 = vadd.f32 %v4232, %v4280
  %4282 = vdwg.mxu0
  %4283 = vmatpush.bf16.msra.mxu0 %v3860
  %4284 = vmatpush.bf16.msra.mxu0 %v3856
  %4285 = vmatpush.bf16.msra.mxu0 %v3852
  %4286 = vmatpush.bf16.msra.mxu0 %v3848
  %4287 = vmatpush.bf16.msra.mxu0 %v3844
  %4288 = vmatpush.bf16.msra.mxu0 %v3840
  %4289 = vmatpush.bf16.msra.mxu0 %v3836
  %4290 = vmatpush.bf16.msra.mxu0 %v3832
  %4291 = vmatmul.bf16.gmra.mxu0 %v3277
  %v4292 = vpop.f32.mrf.mxu0
  %v4293 = vadd.f32 %v3440, %v4292
  %v4294 = vpop.f32.mrf.mxu0
  %v4295 = vadd.f32 %v3440, %v4294
  %4296 = vmatmul.bf16.gmra.mxu0 %v3281
  %v4297 = vpop.f32.mrf.mxu0
  %v4298 = vadd.f32 %v3440, %v4297
  %v4299 = vpop.f32.mrf.mxu0
  %v4300 = vadd.f32 %v3440, %v4299
  %4301 = vmatmul.bf16.gmra.mxu0 %v3285
  %v4302 = vpop.f32.mrf.mxu0
  %v4303 = vadd.f32 %v3440, %v4302
  %v4304 = vpop.f32.mrf.mxu0
  %v4305 = vadd.f32 %v3440, %v4304
  %4306 = vmatmul.bf16.gmra.mxu0 %v3289
  %v4307 = vpop.f32.mrf.mxu0
  %v4308 = vadd.f32 %v3440, %v4307
  %v4309 = vpop.f32.mrf.mxu0
  %v4310 = vadd.f32 %v3440, %v4309
  %4311 = vmatmul.bf16.gmra.mxu0 %v3293
  %v4312 = vpop.f32.mrf.mxu0
  %v4313 = vadd.f32 %v3440, %v4312
  %v4314 = vpop.f32.mrf.mxu0
  %v4315 = vadd.f32 %v3440, %v4314
  %4316 = vmatmul.bf16.gmra.mxu0 %v3297
  %v4317 = vpop.f32.mrf.mxu0
  %v4318 = vadd.f32 %v3440, %v4317
  %v4319 = vpop.f32.mrf.mxu0
  %v4320 = vadd.f32 %v3440, %v4319
  %4321 = vmatmul.bf16.gmra.mxu0 %v3301
  %v4322 = vpop.f32.mrf.mxu0
  %v4323 = vadd.f32 %v3440, %v4322
  %v4324 = vpop.f32.mrf.mxu0
  %v4325 = vadd.f32 %v3440, %v4324
  %4326 = vmatmul.bf16.gmra.mxu0 %v3305
  %v4327 = vpop.f32.mrf.mxu0
  %v4328 = vadd.f32 %v3440, %v4327
  %v4329 = vpop.f32.mrf.mxu0
  %v4330 = vadd.f32 %v3440, %v4329
  %4331 = vdwg.mxu0
  %4332 = vmatpush.bf16.msra.mxu0 %v3892
  %4333 = vmatpush.bf16.msra.mxu0 %v3888
  %4334 = vmatpush.bf16.msra.mxu0 %v3884
  %4335 = vmatpush.bf16.msra.mxu0 %v3880
  %4336 = vmatpush.bf16.msra.mxu0 %v3876
  %4337 = vmatpush.bf16.msra.mxu0 %v3872
  %4338 = vmatpush.bf16.msra.mxu0 %v3868
  %4339 = vmatpush.bf16.msra.mxu0 %v3864
  %4340 = vmatmul.bf16.gmra.mxu0 %v3278
  %v4341 = vpop.f32.mrf.mxu0
  %v4342 = vadd.f32 %v4293, %v4341
  %v4343 = vpop.f32.mrf.mxu0
  %v4344 = vadd.f32 %v4295, %v4343
  %4345 = vmatmul.bf16.gmra.mxu0 %v3282
  %v4346 = vpop.f32.mrf.mxu0
  %v4347 = vadd.f32 %v4298, %v4346
  %v4348 = vpop.f32.mrf.mxu0
  %v4349 = vadd.f32 %v4300, %v4348
  %4350 = vmatmul.bf16.gmra.mxu0 %v3286
  %v4351 = vpop.f32.mrf.mxu0
  %v4352 = vadd.f32 %v4303, %v4351
  %v4353 = vpop.f32.mrf.mxu0
  %v4354 = vadd.f32 %v4305, %v4353
  %4355 = vmatmul.bf16.gmra.mxu0 %v3290
  %v4356 = vpop.f32.mrf.mxu0
  %v4357 = vadd.f32 %v4308, %v4356
  %v4358 = vpop.f32.mrf.mxu0
  %v4359 = vadd.f32 %v4310, %v4358
  %4360 = vmatmul.bf16.gmra.mxu0 %v3294
  %v4361 = vpop.f32.mrf.mxu0
  %v4362 = vadd.f32 %v4313, %v4361
  %v4363 = vpop.f32.mrf.mxu0
  %v4364 = vadd.f32 %v4315, %v4363
  %4365 = vmatmul.bf16.gmra.mxu0 %v3298
  %v4366 = vpop.f32.mrf.mxu0
  %v4367 = vadd.f32 %v4318, %v4366
  %v4368 = vpop.f32.mrf.mxu0
  %v4369 = vadd.f32 %v4320, %v4368
  %4370 = vmatmul.bf16.gmra.mxu0 %v3302
  %v4371 = vpop.f32.mrf.mxu0
  %v4372 = vadd.f32 %v4323, %v4371
  %v4373 = vpop.f32.mrf.mxu0
  %v4374 = vadd.f32 %v4325, %v4373
  %4375 = vmatmul.bf16.gmra.mxu0 %v3306
  %v4376 = vpop.f32.mrf.mxu0
  %v4377 = vadd.f32 %v4328, %v4376
  %v4378 = vpop.f32.mrf.mxu0
  %v4379 = vadd.f32 %v4330, %v4378
  %4380 = vdwg.mxu0
  %4381 = vmatpush.bf16.msra.mxu0 %v3924
  %4382 = vmatpush.bf16.msra.mxu0 %v3920
  %4383 = vmatpush.bf16.msra.mxu0 %v3916
  %4384 = vmatpush.bf16.msra.mxu0 %v3912
  %4385 = vmatpush.bf16.msra.mxu0 %v3908
  %4386 = vmatpush.bf16.msra.mxu0 %v3904
  %4387 = vmatpush.bf16.msra.mxu0 %v3900
  %4388 = vmatpush.bf16.msra.mxu0 %v3896
  %4389 = vmatmul.bf16.gmra.mxu0 %v3279
  %v4390 = vpop.f32.mrf.mxu0
  %v4391 = vadd.f32 %v4342, %v4390
  %v4392 = vpop.f32.mrf.mxu0
  %v4393 = vadd.f32 %v4344, %v4392
  %4394 = vmatmul.bf16.gmra.mxu0 %v3283
  %v4395 = vpop.f32.mrf.mxu0
  %v4396 = vadd.f32 %v4347, %v4395
  %v4397 = vpop.f32.mrf.mxu0
  %v4398 = vadd.f32 %v4349, %v4397
  %4399 = vmatmul.bf16.gmra.mxu0 %v3287
  %v4400 = vpop.f32.mrf.mxu0
  %v4401 = vadd.f32 %v4352, %v4400
  %v4402 = vpop.f32.mrf.mxu0
  %v4403 = vadd.f32 %v4354, %v4402
  %4404 = vmatmul.bf16.gmra.mxu0 %v3291
  %v4405 = vpop.f32.mrf.mxu0
  %v4406 = vadd.f32 %v4357, %v4405
  %v4407 = vpop.f32.mrf.mxu0
  %v4408 = vadd.f32 %v4359, %v4407
  %4409 = vmatmul.bf16.gmra.mxu0 %v3295
  %v4410 = vpop.f32.mrf.mxu0
  %v4411 = vadd.f32 %v4362, %v4410
  %v4412 = vpop.f32.mrf.mxu0
  %v4413 = vadd.f32 %v4364, %v4412
  %4414 = vmatmul.bf16.gmra.mxu0 %v3299
  %v4415 = vpop.f32.mrf.mxu0
  %v4416 = vadd.f32 %v4367, %v4415
  %v4417 = vpop.f32.mrf.mxu0
  %v4418 = vadd.f32 %v4369, %v4417
  %4419 = vmatmul.bf16.gmra.mxu0 %v3303
  %v4420 = vpop.f32.mrf.mxu0
  %v4421 = vadd.f32 %v4372, %v4420
  %v4422 = vpop.f32.mrf.mxu0
  %v4423 = vadd.f32 %v4374, %v4422
  %4424 = vmatmul.bf16.gmra.mxu0 %v3307
  %v4425 = vpop.f32.mrf.mxu0
  %v4426 = vadd.f32 %v4377, %v4425
  %v4427 = vpop.f32.mrf.mxu0
  %v4428 = vadd.f32 %v4379, %v4427
  %4429 = vdwg.mxu0
  %4430 = vmatpush.bf16.msra.mxu0 %v3956
  %4431 = vmatpush.bf16.msra.mxu0 %v3952
  %4432 = vmatpush.bf16.msra.mxu0 %v3948
  %4433 = vmatpush.bf16.msra.mxu0 %v3944
  %4434 = vmatpush.bf16.msra.mxu0 %v3940
  %4435 = vmatpush.bf16.msra.mxu0 %v3936
  %4436 = vmatpush.bf16.msra.mxu0 %v3932
  %4437 = vmatpush.bf16.msra.mxu0 %v3928
  %4438 = vmatmul.bf16.gmra.mxu0 %v3280
  %v4439 = vpop.f32.mrf.mxu0
  %v4440 = vadd.f32 %v4391, %v4439
  %v4441 = vpop.f32.mrf.mxu0
  %v4442 = vadd.f32 %v4393, %v4441
  %4443 = vmatmul.bf16.gmra.mxu0 %v3284
  %v4444 = vpop.f32.mrf.mxu0
  %v4445 = vadd.f32 %v4396, %v4444
  %v4446 = vpop.f32.mrf.mxu0
  %v4447 = vadd.f32 %v4398, %v4446
  %4448 = vmatmul.bf16.gmra.mxu0 %v3288
  %v4449 = vpop.f32.mrf.mxu0
  %v4450 = vadd.f32 %v4401, %v4449
  %v4451 = vpop.f32.mrf.mxu0
  %v4452 = vadd.f32 %v4403, %v4451
  %4453 = vmatmul.bf16.gmra.mxu0 %v3292
  %v4454 = vpop.f32.mrf.mxu0
  %v4455 = vadd.f32 %v4406, %v4454
  %v4456 = vpop.f32.mrf.mxu0
  %v4457 = vadd.f32 %v4408, %v4456
  %4458 = vmatmul.bf16.gmra.mxu0 %v3296
  %v4459 = vpop.f32.mrf.mxu0
  %v4460 = vadd.f32 %v4411, %v4459
  %v4461 = vpop.f32.mrf.mxu0
  %v4462 = vadd.f32 %v4413, %v4461
  %4463 = vmatmul.bf16.gmra.mxu0 %v3300
  %v4464 = vpop.f32.mrf.mxu0
  %v4465 = vadd.f32 %v4416, %v4464
  %v4466 = vpop.f32.mrf.mxu0
  %v4467 = vadd.f32 %v4418, %v4466
  %4468 = vmatmul.bf16.gmra.mxu0 %v3304
  %v4469 = vpop.f32.mrf.mxu0
  %v4470 = vadd.f32 %v4421, %v4469
  %v4471 = vpop.f32.mrf.mxu0
  %v4472 = vadd.f32 %v4423, %v4471
  %4473 = vmatmul.bf16.gmra.mxu0 %v3308
  %v4474 = vpop.f32.mrf.mxu0
  %v4475 = vadd.f32 %v4426, %v4474
  %v4476 = vpop.f32.mrf.mxu0
  %v4477 = vadd.f32 %v4428, %v4476
  %4478 = vdwg.mxu0
  %4479 = vmatpush.bf16.msra.mxu0 %v3861
  %4480 = vmatpush.bf16.msra.mxu0 %v3857
  %4481 = vmatpush.bf16.msra.mxu0 %v3853
  %4482 = vmatpush.bf16.msra.mxu0 %v3849
  %4483 = vmatpush.bf16.msra.mxu0 %v3845
  %4484 = vmatpush.bf16.msra.mxu0 %v3841
  %4485 = vmatpush.bf16.msra.mxu0 %v3837
  %4486 = vmatpush.bf16.msra.mxu0 %v3833
  %4487 = vmatmul.bf16.gmra.mxu0 %v3277
  %v4488 = vpop.f32.mrf.mxu0
  %v4489 = vadd.f32 %v3441, %v4488
  %v4490 = vpop.f32.mrf.mxu0
  %v4491 = vadd.f32 %v3441, %v4490
  %4492 = vmatmul.bf16.gmra.mxu0 %v3281
  %v4493 = vpop.f32.mrf.mxu0
  %v4494 = vadd.f32 %v3441, %v4493
  %v4495 = vpop.f32.mrf.mxu0
  %v4496 = vadd.f32 %v3441, %v4495
  %4497 = vmatmul.bf16.gmra.mxu0 %v3285
  %v4498 = vpop.f32.mrf.mxu0
  %v4499 = vadd.f32 %v3441, %v4498
  %v4500 = vpop.f32.mrf.mxu0
  %v4501 = vadd.f32 %v3441, %v4500
  %4502 = vmatmul.bf16.gmra.mxu0 %v3289
  %v4503 = vpop.f32.mrf.mxu0
  %v4504 = vadd.f32 %v3441, %v4503
  %v4505 = vpop.f32.mrf.mxu0
  %v4506 = vadd.f32 %v3441, %v4505
  %4507 = vmatmul.bf16.gmra.mxu0 %v3293
  %v4508 = vpop.f32.mrf.mxu0
  %v4509 = vadd.f32 %v3441, %v4508
  %v4510 = vpop.f32.mrf.mxu0
  %v4511 = vadd.f32 %v3441, %v4510
  %4512 = vmatmul.bf16.gmra.mxu0 %v3297
  %v4513 = vpop.f32.mrf.mxu0
  %v4514 = vadd.f32 %v3441, %v4513
  %v4515 = vpop.f32.mrf.mxu0
  %v4516 = vadd.f32 %v3441, %v4515
  %4517 = vmatmul.bf16.gmra.mxu0 %v3301
  %v4518 = vpop.f32.mrf.mxu0
  %v4519 = vadd.f32 %v3441, %v4518
  %v4520 = vpop.f32.mrf.mxu0
  %v4521 = vadd.f32 %v3441, %v4520
  %4522 = vmatmul.bf16.gmra.mxu0 %v3305
  %v4523 = vpop.f32.mrf.mxu0
  %v4524 = vadd.f32 %v3441, %v4523
  %v4525 = vpop.f32.mrf.mxu0
  %v4526 = vadd.f32 %v3441, %v4525
  %4527 = vdwg.mxu0
  %4528 = vmatpush.bf16.msra.mxu0 %v3893
  %4529 = vmatpush.bf16.msra.mxu0 %v3889
  %4530 = vmatpush.bf16.msra.mxu0 %v3885
  %4531 = vmatpush.bf16.msra.mxu0 %v3881
  %4532 = vmatpush.bf16.msra.mxu0 %v3877
  %4533 = vmatpush.bf16.msra.mxu0 %v3873
  %4534 = vmatpush.bf16.msra.mxu0 %v3869
  %4535 = vmatpush.bf16.msra.mxu0 %v3865
  %4536 = vmatmul.bf16.gmra.mxu0 %v3278
  %v4537 = vpop.f32.mrf.mxu0
  %v4538 = vadd.f32 %v4489, %v4537
  %v4539 = vpop.f32.mrf.mxu0
  %v4540 = vadd.f32 %v4491, %v4539
  %4541 = vmatmul.bf16.gmra.mxu0 %v3282
  %v4542 = vpop.f32.mrf.mxu0
  %v4543 = vadd.f32 %v4494, %v4542
  %v4544 = vpop.f32.mrf.mxu0
  %v4545 = vadd.f32 %v4496, %v4544
  %4546 = vmatmul.bf16.gmra.mxu0 %v3286
  %v4547 = vpop.f32.mrf.mxu0
  %v4548 = vadd.f32 %v4499, %v4547
  %v4549 = vpop.f32.mrf.mxu0
  %v4550 = vadd.f32 %v4501, %v4549
  %4551 = vmatmul.bf16.gmra.mxu0 %v3290
  %v4552 = vpop.f32.mrf.mxu0
  %v4553 = vadd.f32 %v4504, %v4552
  %v4554 = vpop.f32.mrf.mxu0
  %v4555 = vadd.f32 %v4506, %v4554
  %4556 = vmatmul.bf16.gmra.mxu0 %v3294
  %v4557 = vpop.f32.mrf.mxu0
  %v4558 = vadd.f32 %v4509, %v4557
  %v4559 = vpop.f32.mrf.mxu0
  %v4560 = vadd.f32 %v4511, %v4559
  %4561 = vmatmul.bf16.gmra.mxu0 %v3298
  %v4562 = vpop.f32.mrf.mxu0
  %v4563 = vadd.f32 %v4514, %v4562
  %v4564 = vpop.f32.mrf.mxu0
  %v4565 = vadd.f32 %v4516, %v4564
  %4566 = vmatmul.bf16.gmra.mxu0 %v3302
  %v4567 = vpop.f32.mrf.mxu0
  %v4568 = vadd.f32 %v4519, %v4567
  %v4569 = vpop.f32.mrf.mxu0
  %v4570 = vadd.f32 %v4521, %v4569
  %4571 = vmatmul.bf16.gmra.mxu0 %v3306
  %v4572 = vpop.f32.mrf.mxu0
  %v4573 = vadd.f32 %v4524, %v4572
  %v4574 = vpop.f32.mrf.mxu0
  %v4575 = vadd.f32 %v4526, %v4574
  %4576 = vdwg.mxu0
  %4577 = vmatpush.bf16.msra.mxu0 %v3925
  %4578 = vmatpush.bf16.msra.mxu0 %v3921
  %4579 = vmatpush.bf16.msra.mxu0 %v3917
  %4580 = vmatpush.bf16.msra.mxu0 %v3913
  %4581 = vmatpush.bf16.msra.mxu0 %v3909
  %4582 = vmatpush.bf16.msra.mxu0 %v3905
  %4583 = vmatpush.bf16.msra.mxu0 %v3901
  %4584 = vmatpush.bf16.msra.mxu0 %v3897
  %4585 = vmatmul.bf16.gmra.mxu0 %v3279
  %v4586 = vpop.f32.mrf.mxu0
  %v4587 = vadd.f32 %v4538, %v4586
  %v4588 = vpop.f32.mrf.mxu0
  %v4589 = vadd.f32 %v4540, %v4588
  %4590 = vmatmul.bf16.gmra.mxu0 %v3283
  %v4591 = vpop.f32.mrf.mxu0
  %v4592 = vadd.f32 %v4543, %v4591
  %v4593 = vpop.f32.mrf.mxu0
  %v4594 = vadd.f32 %v4545, %v4593
  %4595 = vmatmul.bf16.gmra.mxu0 %v3287
  %v4596 = vpop.f32.mrf.mxu0
  %v4597 = vadd.f32 %v4548, %v4596
  %v4598 = vpop.f32.mrf.mxu0
  %v4599 = vadd.f32 %v4550, %v4598
  %4600 = vmatmul.bf16.gmra.mxu0 %v3291
  %v4601 = vpop.f32.mrf.mxu0
  %v4602 = vadd.f32 %v4553, %v4601
  %v4603 = vpop.f32.mrf.mxu0
  %v4604 = vadd.f32 %v4555, %v4603
  %4605 = vmatmul.bf16.gmra.mxu0 %v3295
  %v4606 = vpop.f32.mrf.mxu0
  %v4607 = vadd.f32 %v4558, %v4606
  %v4608 = vpop.f32.mrf.mxu0
  %v4609 = vadd.f32 %v4560, %v4608
  %4610 = vmatmul.bf16.gmra.mxu0 %v3299
  %v4611 = vpop.f32.mrf.mxu0
  %v4612 = vadd.f32 %v4563, %v4611
  %v4613 = vpop.f32.mrf.mxu0
  %v4614 = vadd.f32 %v4565, %v4613
  %4615 = vmatmul.bf16.gmra.mxu0 %v3303
  %v4616 = vpop.f32.mrf.mxu0
  %v4617 = vadd.f32 %v4568, %v4616
  %v4618 = vpop.f32.mrf.mxu0
  %v4619 = vadd.f32 %v4570, %v4618
  %4620 = vmatmul.bf16.gmra.mxu0 %v3307
  %v4621 = vpop.f32.mrf.mxu0
  %v4622 = vadd.f32 %v4573, %v4621
  %v4623 = vpop.f32.mrf.mxu0
  %v4624 = vadd.f32 %v4575, %v4623
  %4625 = vdwg.mxu0
  %4626 = vmatpush.bf16.msra.mxu0 %v3957
  %4627 = vmatpush.bf16.msra.mxu0 %v3953
  %4628 = vmatpush.bf16.msra.mxu0 %v3949
  %4629 = vmatpush.bf16.msra.mxu0 %v3945
  %4630 = vmatpush.bf16.msra.mxu0 %v3941
  %4631 = vmatpush.bf16.msra.mxu0 %v3937
  %4632 = vmatpush.bf16.msra.mxu0 %v3933
  %4633 = vmatpush.bf16.msra.mxu0 %v3929
  %4634 = vmatmul.bf16.gmra.mxu0 %v3280
  %v4635 = vpop.f32.mrf.mxu0
  %v4636 = vadd.f32 %v4587, %v4635
  %v4637 = vpop.f32.mrf.mxu0
  %v4638 = vadd.f32 %v4589, %v4637
  %4639 = vmatmul.bf16.gmra.mxu0 %v3284
  %v4640 = vpop.f32.mrf.mxu0
  %v4641 = vadd.f32 %v4592, %v4640
  %v4642 = vpop.f32.mrf.mxu0
  %v4643 = vadd.f32 %v4594, %v4642
  %4644 = vmatmul.bf16.gmra.mxu0 %v3288
  %v4645 = vpop.f32.mrf.mxu0
  %v4646 = vadd.f32 %v4597, %v4645
  %v4647 = vpop.f32.mrf.mxu0
  %v4648 = vadd.f32 %v4599, %v4647
  %4649 = vmatmul.bf16.gmra.mxu0 %v3292
  %v4650 = vpop.f32.mrf.mxu0
  %v4651 = vadd.f32 %v4602, %v4650
  %v4652 = vpop.f32.mrf.mxu0
  %v4653 = vadd.f32 %v4604, %v4652
  %4654 = vmatmul.bf16.gmra.mxu0 %v3296
  %v4655 = vpop.f32.mrf.mxu0
  %v4656 = vadd.f32 %v4607, %v4655
  %v4657 = vpop.f32.mrf.mxu0
  %v4658 = vadd.f32 %v4609, %v4657
  %4659 = vmatmul.bf16.gmra.mxu0 %v3300
  %v4660 = vpop.f32.mrf.mxu0
  %v4661 = vadd.f32 %v4612, %v4660
  %v4662 = vpop.f32.mrf.mxu0
  %v4663 = vadd.f32 %v4614, %v4662
  %4664 = vmatmul.bf16.gmra.mxu0 %v3304
  %v4665 = vpop.f32.mrf.mxu0
  %v4666 = vadd.f32 %v4617, %v4665
  %v4667 = vpop.f32.mrf.mxu0
  %v4668 = vadd.f32 %v4619, %v4667
  %4669 = vmatmul.bf16.gmra.mxu0 %v3308
  %v4670 = vpop.f32.mrf.mxu0
  %v4671 = vadd.f32 %v4622, %v4670
  %v4672 = vpop.f32.mrf.mxu0
  %v4673 = vadd.f32 %v4624, %v4672
  %4674 = vdwg.mxu0
  %4675 = vmatpush.bf16.msra.mxu0 %v3862
  %4676 = vmatpush.bf16.msra.mxu0 %v3858
  %4677 = vmatpush.bf16.msra.mxu0 %v3854
  %4678 = vmatpush.bf16.msra.mxu0 %v3850
  %4679 = vmatpush.bf16.msra.mxu0 %v3846
  %4680 = vmatpush.bf16.msra.mxu0 %v3842
  %4681 = vmatpush.bf16.msra.mxu0 %v3838
  %4682 = vmatpush.bf16.msra.mxu0 %v3834
  %4683 = vmatmul.bf16.gmra.mxu0 %v3277
  %v4684 = vpop.f32.mrf.mxu0
  %v4685 = vadd.f32 %v3442, %v4684
  %v4686 = vpop.f32.mrf.mxu0
  %v4687 = vadd.f32 %v3442, %v4686
  %4688 = vmatmul.bf16.gmra.mxu0 %v3281
  %v4689 = vpop.f32.mrf.mxu0
  %v4690 = vadd.f32 %v3442, %v4689
  %v4691 = vpop.f32.mrf.mxu0
  %v4692 = vadd.f32 %v3442, %v4691
  %4693 = vmatmul.bf16.gmra.mxu0 %v3285
  %v4694 = vpop.f32.mrf.mxu0
  %v4695 = vadd.f32 %v3442, %v4694
  %v4696 = vpop.f32.mrf.mxu0
  %v4697 = vadd.f32 %v3442, %v4696
  %4698 = vmatmul.bf16.gmra.mxu0 %v3289
  %v4699 = vpop.f32.mrf.mxu0
  %v4700 = vadd.f32 %v3442, %v4699
  %v4701 = vpop.f32.mrf.mxu0
  %v4702 = vadd.f32 %v3442, %v4701
  %4703 = vmatmul.bf16.gmra.mxu0 %v3293
  %v4704 = vpop.f32.mrf.mxu0
  %v4705 = vadd.f32 %v3442, %v4704
  %v4706 = vpop.f32.mrf.mxu0
  %v4707 = vadd.f32 %v3442, %v4706
  %4708 = vmatmul.bf16.gmra.mxu0 %v3297
  %v4709 = vpop.f32.mrf.mxu0
  %v4710 = vadd.f32 %v3442, %v4709
  %v4711 = vpop.f32.mrf.mxu0
  %v4712 = vadd.f32 %v3442, %v4711
  %4713 = vmatmul.bf16.gmra.mxu0 %v3301
  %v4714 = vpop.f32.mrf.mxu0
  %v4715 = vadd.f32 %v3442, %v4714
  %v4716 = vpop.f32.mrf.mxu0
  %v4717 = vadd.f32 %v3442, %v4716
  %4718 = vmatmul.bf16.gmra.mxu0 %v3305
  %v4719 = vpop.f32.mrf.mxu0
  %v4720 = vadd.f32 %v3442, %v4719
  %v4721 = vpop.f32.mrf.mxu0
  %v4722 = vadd.f32 %v3442, %v4721
  %4723 = vdwg.mxu0
  %4724 = vmatpush.bf16.msra.mxu0 %v3894
  %4725 = vmatpush.bf16.msra.mxu0 %v3890
  %4726 = vmatpush.bf16.msra.mxu0 %v3886
  %4727 = vmatpush.bf16.msra.mxu0 %v3882
  %4728 = vmatpush.bf16.msra.mxu0 %v3878
  %4729 = vmatpush.bf16.msra.mxu0 %v3874
  %4730 = vmatpush.bf16.msra.mxu0 %v3870
  %4731 = vmatpush.bf16.msra.mxu0 %v3866
  %4732 = vmatmul.bf16.gmra.mxu0 %v3278
  %v4733 = vpop.f32.mrf.mxu0
  %v4734 = vadd.f32 %v4685, %v4733
  %v4735 = vpop.f32.mrf.mxu0
  %v4736 = vadd.f32 %v4687, %v4735
  %4737 = vmatmul.bf16.gmra.mxu0 %v3282
  %v4738 = vpop.f32.mrf.mxu0
  %v4739 = vadd.f32 %v4690, %v4738
  %v4740 = vpop.f32.mrf.mxu0
  %v4741 = vadd.f32 %v4692, %v4740
  %4742 = vmatmul.bf16.gmra.mxu0 %v3286
  %v4743 = vpop.f32.mrf.mxu0
  %v4744 = vadd.f32 %v4695, %v4743
  %v4745 = vpop.f32.mrf.mxu0
  %v4746 = vadd.f32 %v4697, %v4745
  %4747 = vmatmul.bf16.gmra.mxu0 %v3290
  %v4748 = vpop.f32.mrf.mxu0
  %v4749 = vadd.f32 %v4700, %v4748
  %v4750 = vpop.f32.mrf.mxu0
  %v4751 = vadd.f32 %v4702, %v4750
  %4752 = vmatmul.bf16.gmra.mxu0 %v3294
  %v4753 = vpop.f32.mrf.mxu0
  %v4754 = vadd.f32 %v4705, %v4753
  %v4755 = vpop.f32.mrf.mxu0
  %v4756 = vadd.f32 %v4707, %v4755
  %4757 = vmatmul.bf16.gmra.mxu0 %v3298
  %v4758 = vpop.f32.mrf.mxu0
  %v4759 = vadd.f32 %v4710, %v4758
  %v4760 = vpop.f32.mrf.mxu0
  %v4761 = vadd.f32 %v4712, %v4760
  %4762 = vmatmul.bf16.gmra.mxu0 %v3302
  %v4763 = vpop.f32.mrf.mxu0
  %v4764 = vadd.f32 %v4715, %v4763
  %v4765 = vpop.f32.mrf.mxu0
  %v4766 = vadd.f32 %v4717, %v4765
  %4767 = vmatmul.bf16.gmra.mxu0 %v3306
  %v4768 = vpop.f32.mrf.mxu0
  %v4769 = vadd.f32 %v4720, %v4768
  %v4770 = vpop.f32.mrf.mxu0
  %v4771 = vadd.f32 %v4722, %v4770
  %4772 = vdwg.mxu0
  %4773 = vmatpush.bf16.msra.mxu0 %v3926
  %4774 = vmatpush.bf16.msra.mxu0 %v3922
  %4775 = vmatpush.bf16.msra.mxu0 %v3918
  %4776 = vmatpush.bf16.msra.mxu0 %v3914
  %4777 = vmatpush.bf16.msra.mxu0 %v3910
  %4778 = vmatpush.bf16.msra.mxu0 %v3906
  %4779 = vmatpush.bf16.msra.mxu0 %v3902
  %4780 = vmatpush.bf16.msra.mxu0 %v3898
  %4781 = vmatmul.bf16.gmra.mxu0 %v3279
  %v4782 = vpop.f32.mrf.mxu0
  %v4783 = vadd.f32 %v4734, %v4782
  %v4784 = vpop.f32.mrf.mxu0
  %v4785 = vadd.f32 %v4736, %v4784
  %4786 = vmatmul.bf16.gmra.mxu0 %v3283
  %v4787 = vpop.f32.mrf.mxu0
  %v4788 = vadd.f32 %v4739, %v4787
  %v4789 = vpop.f32.mrf.mxu0
  %v4790 = vadd.f32 %v4741, %v4789
  %4791 = vmatmul.bf16.gmra.mxu0 %v3287
  %v4792 = vpop.f32.mrf.mxu0
  %v4793 = vadd.f32 %v4744, %v4792
  %v4794 = vpop.f32.mrf.mxu0
  %v4795 = vadd.f32 %v4746, %v4794
  %4796 = vmatmul.bf16.gmra.mxu0 %v3291
  %v4797 = vpop.f32.mrf.mxu0
  %v4798 = vadd.f32 %v4749, %v4797
  %v4799 = vpop.f32.mrf.mxu0
  %v4800 = vadd.f32 %v4751, %v4799
  %4801 = vmatmul.bf16.gmra.mxu0 %v3295
  %v4802 = vpop.f32.mrf.mxu0
  %v4803 = vadd.f32 %v4754, %v4802
  %v4804 = vpop.f32.mrf.mxu0
  %v4805 = vadd.f32 %v4756, %v4804
  %4806 = vmatmul.bf16.gmra.mxu0 %v3299
  %v4807 = vpop.f32.mrf.mxu0
  %v4808 = vadd.f32 %v4759, %v4807
  %v4809 = vpop.f32.mrf.mxu0
  %v4810 = vadd.f32 %v4761, %v4809
  %4811 = vmatmul.bf16.gmra.mxu0 %v3303
  %v4812 = vpop.f32.mrf.mxu0
  %v4813 = vadd.f32 %v4764, %v4812
  %v4814 = vpop.f32.mrf.mxu0
  %v4815 = vadd.f32 %v4766, %v4814
  %4816 = vmatmul.bf16.gmra.mxu0 %v3307
  %v4817 = vpop.f32.mrf.mxu0
  %v4818 = vadd.f32 %v4769, %v4817
  %v4819 = vpop.f32.mrf.mxu0
  %v4820 = vadd.f32 %v4771, %v4819
  %4821 = vdwg.mxu0
  %4822 = vmatpush.bf16.msra.mxu0 %v3958
  %4823 = vmatpush.bf16.msra.mxu0 %v3954
  %4824 = vmatpush.bf16.msra.mxu0 %v3950
  %4825 = vmatpush.bf16.msra.mxu0 %v3946
  %4826 = vmatpush.bf16.msra.mxu0 %v3942
  %4827 = vmatpush.bf16.msra.mxu0 %v3938
  %4828 = vmatpush.bf16.msra.mxu0 %v3934
  %4829 = vmatpush.bf16.msra.mxu0 %v3930
  %4830 = vmatmul.bf16.gmra.mxu0 %v3280
  %v4831 = vpop.f32.mrf.mxu0
  %v4832 = vadd.f32 %v4783, %v4831
  %v4833 = vpop.f32.mrf.mxu0
  %v4834 = vadd.f32 %v4785, %v4833
  %4835 = vmatmul.bf16.gmra.mxu0 %v3284
  %v4836 = vpop.f32.mrf.mxu0
  %v4837 = vadd.f32 %v4788, %v4836
  %v4838 = vpop.f32.mrf.mxu0
  %v4839 = vadd.f32 %v4790, %v4838
  %4840 = vmatmul.bf16.gmra.mxu0 %v3288
  %v4841 = vpop.f32.mrf.mxu0
  %v4842 = vadd.f32 %v4793, %v4841
  %v4843 = vpop.f32.mrf.mxu0
  %v4844 = vadd.f32 %v4795, %v4843
  %4845 = vmatmul.bf16.gmra.mxu0 %v3292
  %v4846 = vpop.f32.mrf.mxu0
  %v4847 = vadd.f32 %v4798, %v4846
  %v4848 = vpop.f32.mrf.mxu0
  %v4849 = vadd.f32 %v4800, %v4848
  %4850 = vmatmul.bf16.gmra.mxu0 %v3296
  %v4851 = vpop.f32.mrf.mxu0
  %v4852 = vadd.f32 %v4803, %v4851
  %v4853 = vpop.f32.mrf.mxu0
  %v4854 = vadd.f32 %v4805, %v4853
  %4855 = vmatmul.bf16.gmra.mxu0 %v3300
  %v4856 = vpop.f32.mrf.mxu0
  %v4857 = vadd.f32 %v4808, %v4856
  %v4858 = vpop.f32.mrf.mxu0
  %v4859 = vadd.f32 %v4810, %v4858
  %4860 = vmatmul.bf16.gmra.mxu0 %v3304
  %v4861 = vpop.f32.mrf.mxu0
  %v4862 = vadd.f32 %v4813, %v4861
  %v4863 = vpop.f32.mrf.mxu0
  %v4864 = vadd.f32 %v4815, %v4863
  %4865 = vmatmul.bf16.gmra.mxu0 %v3308
  %v4866 = vpop.f32.mrf.mxu0
  %v4867 = vadd.f32 %v4818, %v4866
  %v4868 = vpop.f32.mrf.mxu0
  %v4869 = vadd.f32 %v4820, %v4868
  %4870 = vdwg.mxu0
  %vm4871 = vcmp.gt.f32.partialorder %v4244, 0.0
  %vm4872 = vcmp.gt.f32.partialorder %v4440, 0.0
  %vm4873 = vcmp.gt.f32.partialorder %v4636, 0.0
  %vm4874 = vcmp.gt.f32.partialorder %v4832, 0.0
  %vm4875 = vcmp.gt.f32.partialorder %v4246, 0.0
  %vm4876 = vcmp.gt.f32.partialorder %v4442, 0.0
  %vm4877 = vcmp.gt.f32.partialorder %v4638, 0.0
  %vm4878 = vcmp.gt.f32.partialorder %v4834, 0.0
  %vm4879 = vcmp.gt.f32.partialorder %v4249, 0.0
  %vm4880 = vcmp.gt.f32.partialorder %v4445, 0.0
  %vm4881 = vcmp.gt.f32.partialorder %v4641, 0.0
  %vm4882 = vcmp.gt.f32.partialorder %v4837, 0.0
  %vm4883 = vcmp.gt.f32.partialorder %v4251, 0.0
  %vm4884 = vcmp.gt.f32.partialorder %v4447, 0.0
  %vm4885 = vcmp.gt.f32.partialorder %v4643, 0.0
  %vm4886 = vcmp.gt.f32.partialorder %v4839, 0.0
  %vm4887 = vcmp.gt.f32.partialorder %v4254, 0.0
  %vm4888 = vcmp.gt.f32.partialorder %v4450, 0.0
  %vm4889 = vcmp.gt.f32.partialorder %v4646, 0.0
  %vm4890 = vcmp.gt.f32.partialorder %v4842, 0.0
  %vm4891 = vcmp.gt.f32.partialorder %v4256, 0.0
  %vm4892 = vcmp.gt.f32.partialorder %v4452, 0.0
  %vm4893 = vcmp.gt.f32.partialorder %v4648, 0.0
  %vm4894 = vcmp.gt.f32.partialorder %v4844, 0.0
  %vm4895 = vcmp.gt.f32.partialorder %v4259, 0.0
  %vm4896 = vcmp.gt.f32.partialorder %v4455, 0.0
  %vm4897 = vcmp.gt.f32.partialorder %v4651, 0.0
  %vm4898 = vcmp.gt.f32.partialorder %v4847, 0.0
  %vm4899 = vcmp.gt.f32.partialorder %v4261, 0.0
  %vm4900 = vcmp.gt.f32.partialorder %v4457, 0.0
  %vm4901 = vcmp.gt.f32.partialorder %v4653, 0.0
  %vm4902 = vcmp.gt.f32.partialorder %v4849, 0.0
  %vm4903 = vcmp.gt.f32.partialorder %v4264, 0.0
  %vm4904 = vcmp.gt.f32.partialorder %v4460, 0.0
  %vm4905 = vcmp.gt.f32.partialorder %v4656, 0.0
  %vm4906 = vcmp.gt.f32.partialorder %v4852, 0.0
  %vm4907 = vcmp.gt.f32.partialorder %v4266, 0.0
  %vm4908 = vcmp.gt.f32.partialorder %v4462, 0.0
  %vm4909 = vcmp.gt.f32.partialorder %v4658, 0.0
  %vm4910 = vcmp.gt.f32.partialorder %v4854, 0.0
  %vm4911 = vcmp.gt.f32.partialorder %v4269, 0.0
  %vm4912 = vcmp.gt.f32.partialorder %v4465, 0.0
  %vm4913 = vcmp.gt.f32.partialorder %v4661, 0.0
  %vm4914 = vcmp.gt.f32.partialorder %v4857, 0.0
  %vm4915 = vcmp.gt.f32.partialorder %v4271, 0.0
  %vm4916 = vcmp.gt.f32.partialorder %v4467, 0.0
  %vm4917 = vcmp.gt.f32.partialorder %v4663, 0.0
  %vm4918 = vcmp.gt.f32.partialorder %v4859, 0.0
  %vm4919 = vcmp.gt.f32.partialorder %v4274, 0.0
  %vm4920 = vcmp.gt.f32.partialorder %v4470, 0.0
  %vm4921 = vcmp.gt.f32.partialorder %v4666, 0.0
  %vm4922 = vcmp.gt.f32.partialorder %v4862, 0.0
  %vm4923 = vcmp.gt.f32.partialorder %v4276, 0.0
  %vm4924 = vcmp.gt.f32.partialorder %v4472, 0.0
  %vm4925 = vcmp.gt.f32.partialorder %v4668, 0.0
  %vm4926 = vcmp.gt.f32.partialorder %v4864, 0.0
  %vm4927 = vcmp.gt.f32.partialorder %v4279, 0.0
  %vm4928 = vcmp.gt.f32.partialorder %v4475, 0.0
  %vm4929 = vcmp.gt.f32.partialorder %v4671, 0.0
  %vm4930 = vcmp.gt.f32.partialorder %v4867, 0.0
  %vm4931 = vcmp.gt.f32.partialorder %v4281, 0.0
  %vm4932 = vcmp.gt.f32.partialorder %v4477, 0.0
  %vm4933 = vcmp.gt.f32.partialorder %v4673, 0.0
  %vm4934 = vcmp.gt.f32.partialorder %v4869, 0.0
  %v4935 = vmul.f32 %v4244, 0.2
  %v4936 = vmul.f32 %v4440, 0.2
  %v4937 = vmul.f32 %v4636, 0.2
  %v4938 = vmul.f32 %v4832, 0.2
  %v4939 = vmul.f32 %v4246, 0.2
  %v4940 = vmul.f32 %v4442, 0.2
  %v4941 = vmul.f32 %v4638, 0.2
  %v4942 = vmul.f32 %v4834, 0.2
  %v4943 = vmul.f32 %v4249, 0.2
  %v4944 = vmul.f32 %v4445, 0.2
  %v4945 = vmul.f32 %v4641, 0.2
  %v4946 = vmul.f32 %v4837, 0.2
  %v4947 = vmul.f32 %v4251, 0.2
  %v4948 = vmul.f32 %v4447, 0.2
  %v4949 = vmul.f32 %v4643, 0.2
  %v4950 = vmul.f32 %v4839, 0.2
  %v4951 = vmul.f32 %v4254, 0.2
  %v4952 = vmul.f32 %v4450, 0.2
  %v4953 = vmul.f32 %v4646, 0.2
  %v4954 = vmul.f32 %v4842, 0.2
  %v4955 = vmul.f32 %v4256, 0.2
  %v4956 = vmul.f32 %v4452, 0.2
  %v4957 = vmul.f32 %v4648, 0.2
  %v4958 = vmul.f32 %v4844, 0.2
  %v4959 = vmul.f32 %v4259, 0.2
  %v4960 = vmul.f32 %v4455, 0.2
  %v4961 = vmul.f32 %v4651, 0.2
  %v4962 = vmul.f32 %v4847, 0.2
  %v4963 = vmul.f32 %v4261, 0.2
  %v4964 = vmul.f32 %v4457, 0.2
  %v4965 = vmul.f32 %v4653, 0.2
  %v4966 = vmul.f32 %v4849, 0.2
  %v4967 = vmul.f32 %v4264, 0.2
  %v4968 = vmul.f32 %v4460, 0.2
  %v4969 = vmul.f32 %v4656, 0.2
  %v4970 = vmul.f32 %v4852, 0.2
  %v4971 = vmul.f32 %v4266, 0.2
  %v4972 = vmul.f32 %v4462, 0.2
  %v4973 = vmul.f32 %v4658, 0.2
  %v4974 = vmul.f32 %v4854, 0.2
  %v4975 = vmul.f32 %v4269, 0.2
  %v4976 = vmul.f32 %v4465, 0.2
  %v4977 = vmul.f32 %v4661, 0.2
  %v4978 = vmul.f32 %v4857, 0.2
  %v4979 = vmul.f32 %v4271, 0.2
  %v4980 = vmul.f32 %v4467, 0.2
  %v4981 = vmul.f32 %v4663, 0.2
  %v4982 = vmul.f32 %v4859, 0.2
  %v4983 = vmul.f32 %v4274, 0.2
  %v4984 = vmul.f32 %v4470, 0.2
  %v4985 = vmul.f32 %v4666, 0.2
  %v4986 = vmul.f32 %v4862, 0.2
  %v4987 = vmul.f32 %v4276, 0.2
  %v4988 = vmul.f32 %v4472, 0.2
  %v4989 = vmul.f32 %v4668, 0.2
  %v4990 = vmul.f32 %v4864, 0.2
  %v4991 = vmul.f32 %v4279, 0.2
  %v4992 = vmul.f32 %v4475, 0.2
  %v4993 = vmul.f32 %v4671, 0.2
  %v4994 = vmul.f32 %v4867, 0.2
  %v4995 = vmul.f32 %v4281, 0.2
  %v4996 = vmul.f32 %v4477, 0.2
  %v4997 = vmul.f32 %v4673, 0.2
  %v4998 = vmul.f32 %v4869, 0.2
  %v4999 = vsel %vm4871, %v4244, %v4935
  %v5000 = vsel %vm4872, %v4440, %v4936
  %v5001 = vsel %vm4873, %v4636, %v4937
  %v5002 = vsel %vm4874, %v4832, %v4938
  %v5003 = vsel %vm4875, %v4246, %v4939
  %v5004 = vsel %vm4876, %v4442, %v4940
  %v5005 = vsel %vm4877, %v4638, %v4941
  %v5006 = vsel %vm4878, %v4834, %v4942
  %v5007 = vsel %vm4879, %v4249, %v4943
  %v5008 = vsel %vm4880, %v4445, %v4944
  %v5009 = vsel %vm4881, %v4641, %v4945
  %v5010 = vsel %vm4882, %v4837, %v4946
  %v5011 = vsel %vm4883, %v4251, %v4947
  %v5012 = vsel %vm4884, %v4447, %v4948
  %v5013 = vsel %vm4885, %v4643, %v4949
  %v5014 = vsel %vm4886, %v4839, %v4950
  %v5015 = vsel %vm4887, %v4254, %v4951
  %v5016 = vsel %vm4888, %v4450, %v4952
  %v5017 = vsel %vm4889, %v4646, %v4953
  %v5018 = vsel %vm4890, %v4842, %v4954
  %v5019 = vsel %vm4891, %v4256, %v4955
  %v5020 = vsel %vm4892, %v4452, %v4956
  %v5021 = vsel %vm4893, %v4648, %v4957
  %v5022 = vsel %vm4894, %v4844, %v4958
  %v5023 = vsel %vm4895, %v4259, %v4959
  %v5024 = vsel %vm4896, %v4455, %v4960
  %v5025 = vsel %vm4897, %v4651, %v4961
  %v5026 = vsel %vm4898, %v4847, %v4962
  %v5027 = vsel %vm4899, %v4261, %v4963
  %v5028 = vsel %vm4900, %v4457, %v4964
  %v5029 = vsel %vm4901, %v4653, %v4965
  %v5030 = vsel %vm4902, %v4849, %v4966
  %v5031 = vsel %vm4903, %v4264, %v4967
  %v5032 = vsel %vm4904, %v4460, %v4968
  %v5033 = vsel %vm4905, %v4656, %v4969
  %v5034 = vsel %vm4906, %v4852, %v4970
  %v5035 = vsel %vm4907, %v4266, %v4971
  %v5036 = vsel %vm4908, %v4462, %v4972
  %v5037 = vsel %vm4909, %v4658, %v4973
  %v5038 = vsel %vm4910, %v4854, %v4974
  %v5039 = vsel %vm4911, %v4269, %v4975
  %v5040 = vsel %vm4912, %v4465, %v4976
  %v5041 = vsel %vm4913, %v4661, %v4977
  %v5042 = vsel %vm4914, %v4857, %v4978
  %v5043 = vsel %vm4915, %v4271, %v4979
  %v5044 = vsel %vm4916, %v4467, %v4980
  %v5045 = vsel %vm4917, %v4663, %v4981
  %v5046 = vsel %vm4918, %v4859, %v4982
  %v5047 = vsel %vm4919, %v4274, %v4983
  %v5048 = vsel %vm4920, %v4470, %v4984
  %v5049 = vsel %vm4921, %v4666, %v4985
  %v5050 = vsel %vm4922, %v4862, %v4986
  %v5051 = vsel %vm4923, %v4276, %v4987
  %v5052 = vsel %vm4924, %v4472, %v4988
  %v5053 = vsel %vm4925, %v4668, %v4989
  %v5054 = vsel %vm4926, %v4864, %v4990
  %v5055 = vsel %vm4927, %v4279, %v4991
  %v5056 = vsel %vm4928, %v4475, %v4992
  %v5057 = vsel %vm4929, %v4671, %v4993
  %v5058 = vsel %vm4930, %v4867, %v4994
  %v5059 = vsel %vm4931, %v4281, %v4995
  %v5060 = vsel %vm4932, %v4477, %v4996
  %v5061 = vsel %vm4933, %v4673, %v4997
  %v5062 = vsel %vm4934, %v4869, %v4998
  %v5063 = vld [vmem:[%s8] sm:$0xf]
  %v5065 = vperm.slane %v5063, 0
  %v5066 = vperm.slane %v5063, 1
  %v5067 = vperm.slane %v5063, 2
  %v5068 = vperm.slane %v5063, 3
  %v5073 = vmul.f32 %v4999, %v5065
  %v5074 = vmul.f32 %v5000, %v5066
  %v5075 = vmul.f32 %v5001, %v5067
  %v5076 = vmul.f32 %v5002, %v5068
  %v5077 = vmul.f32 %v5003, %v5065
  %v5078 = vmul.f32 %v5004, %v5066
  %v5079 = vmul.f32 %v5005, %v5067
  %v5080 = vmul.f32 %v5006, %v5068
  %v5081 = vmul.f32 %v5007, %v5065
  %v5082 = vmul.f32 %v5008, %v5066
  %v5083 = vmul.f32 %v5009, %v5067
  %v5084 = vmul.f32 %v5010, %v5068
  %v5085 = vmul.f32 %v5011, %v5065
  %v5086 = vmul.f32 %v5012, %v5066
  %v5087 = vmul.f32 %v5013, %v5067
  %v5088 = vmul.f32 %v5014, %v5068
  %v5089 = vmul.f32 %v5015, %v5065
  %v5090 = vmul.f32 %v5016, %v5066
  %v5091 = vmul.f32 %v5017, %v5067
  %v5092 = vmul.f32 %v5018, %v5068
  %v5093 = vmul.f32 %v5019, %v5065
  %v5094 = vmul.f32 %v5020, %v5066
  %v5095 = vmul.f32 %v5021, %v5067
  %v5096 = vmul.f32 %v5022, %v5068
  %v5097 = vmul.f32 %v5023, %v5065
  %v5098 = vmul.f32 %v5024, %v5066
  %v5099 = vmul.f32 %v5025, %v5067
  %v5100 = vmul.f32 %v5026, %v5068
  %v5101 = vmul.f32 %v5027, %v5065
  %v5102 = vmul.f32 %v5028, %v5066
  %v5103 = vmul.f32 %v5029, %v5067
  %v5104 = vmul.f32 %v5030, %v5068
  %v5105 = vmul.f32 %v5031, %v5065
  %v5106 = vmul.f32 %v5032, %v5066
  %v5107 = vmul.f32 %v5033, %v5067
  %v5108 = vmul.f32 %v5034, %v5068
  %v5109 = vmul.f32 %v5035, %v5065
  %v5110 = vmul.f32 %v5036, %v5066
  %v5111 = vmul.f32 %v5037, %v5067
  %v5112 = vmul.f32 %v5038, %v5068
  %v5113 = vmul.f32 %v5039, %v5065
  %v5114 = vmul.f32 %v5040, %v5066
  %v5115 = vmul.f32 %v5041, %v5067
  %v5116 = vmul.f32 %v5042, %v5068
  %v5117 = vmul.f32 %v5043, %v5065
  %v5118 = vmul.f32 %v5044, %v5066
  %v5119 = vmul.f32 %v5045, %v5067
  %v5120 = vmul.f32 %v5046, %v5068
  %v5121 = vmul.f32 %v5047, %v5065
  %v5122 = vmul.f32 %v5048, %v5066
  %v5123 = vmul.f32 %v5049, %v5067
  %v5124 = vmul.f32 %v5050, %v5068
  %v5125 = vmul.f32 %v5051, %v5065
  %v5126 = vmul.f32 %v5052, %v5066
  %v5127 = vmul.f32 %v5053, %v5067
  %v5128 = vmul.f32 %v5054, %v5068
  %v5129 = vmul.f32 %v5055, %v5065
  %v5130 = vmul.f32 %v5056, %v5066
  %v5131 = vmul.f32 %v5057, %v5067
  %v5132 = vmul.f32 %v5058, %v5068
  %v5133 = vmul.f32 %v5059, %v5065
  %v5134 = vmul.f32 %v5060, %v5066
  %v5135 = vmul.f32 %v5061, %v5067
  %v5136 = vmul.f32 %v5062, %v5068
  %v5137 = vadd.f32 %v5073, %v5074
  %v5138 = vadd.f32 %v5137, %v5075
  %v5139 = vadd.f32 %v5138, %v5076
  %5140 = vadd.xlane.f32.xlu0 %v5139
  %v5141 = vpop.xlane.xlu0 %5140
  %v5142 = vadd.f32 %v5077, %v5078
  %v5143 = vadd.f32 %v5142, %v5079
  %v5144 = vadd.f32 %v5143, %v5080
  %5145 = vadd.xlane.f32.xlu0 %v5144
  %v5146 = vpop.xlane.xlu0 %5145
  %v5147 = vadd.f32 %v5081, %v5082
  %v5148 = vadd.f32 %v5147, %v5083
  %v5149 = vadd.f32 %v5148, %v5084
  %5150 = vadd.xlane.f32.xlu0 %v5149
  %v5151 = vpop.xlane.xlu0 %5150
  %v5152 = vadd.f32 %v5085, %v5086
  %v5153 = vadd.f32 %v5152, %v5087
  %v5154 = vadd.f32 %v5153, %v5088
  %5155 = vadd.xlane.f32.xlu0 %v5154
  %v5156 = vpop.xlane.xlu0 %5155
  %v5157 = vadd.f32 %v5089, %v5090
  %v5158 = vadd.f32 %v5157, %v5091
  %v5159 = vadd.f32 %v5158, %v5092
  %5160 = vadd.xlane.f32.xlu0 %v5159
  %v5161 = vpop.xlane.xlu0 %5160
  %v5162 = vadd.f32 %v5093, %v5094
  %v5163 = vadd.f32 %v5162, %v5095
  %v5164 = vadd.f32 %v5163, %v5096
  %5165 = vadd.xlane.f32.xlu0 %v5164
  %v5166 = vpop.xlane.xlu0 %5165
  %v5167 = vadd.f32 %v5097, %v5098
  %v5168 = vadd.f32 %v5167, %v5099
  %v5169 = vadd.f32 %v5168, %v5100
  %5170 = vadd.xlane.f32.xlu0 %v5169
  %v5171 = vpop.xlane.xlu0 %5170
  %v5172 = vadd.f32 %v5101, %v5102
  %v5173 = vadd.f32 %v5172, %v5103
  %v5174 = vadd.f32 %v5173, %v5104
  %5175 = vadd.xlane.f32.xlu0 %v5174
  %v5176 = vpop.xlane.xlu0 %5175
  %v5177 = vadd.f32 %v5105, %v5106
  %v5178 = vadd.f32 %v5177, %v5107
  %v5179 = vadd.f32 %v5178, %v5108
  %5180 = vadd.xlane.f32.xlu0 %v5179
  %v5181 = vpop.xlane.xlu0 %5180
  %v5182 = vadd.f32 %v5109, %v5110
  %v5183 = vadd.f32 %v5182, %v5111
  %v5184 = vadd.f32 %v5183, %v5112
  %5185 = vadd.xlane.f32.xlu0 %v5184
  %v5186 = vpop.xlane.xlu0 %5185
  %v5187 = vadd.f32 %v5113, %v5114
  %v5188 = vadd.f32 %v5187, %v5115
  %v5189 = vadd.f32 %v5188, %v5116
  %5190 = vadd.xlane.f32.xlu0 %v5189
  %v5191 = vpop.xlane.xlu0 %5190
  %v5192 = vadd.f32 %v5117, %v5118
  %v5193 = vadd.f32 %v5192, %v5119
  %v5194 = vadd.f32 %v5193, %v5120
  %5195 = vadd.xlane.f32.xlu0 %v5194
  %v5196 = vpop.xlane.xlu0 %5195
  %v5197 = vadd.f32 %v5121, %v5122
  %v5198 = vadd.f32 %v5197, %v5123
  %v5199 = vadd.f32 %v5198, %v5124
  %5200 = vadd.xlane.f32.xlu0 %v5199
  %v5201 = vpop.xlane.xlu0 %5200
  %v5202 = vadd.f32 %v5125, %v5126
  %v5203 = vadd.f32 %v5202, %v5127
  %v5204 = vadd.f32 %v5203, %v5128
  %5205 = vadd.xlane.f32.xlu0 %v5204
  %v5206 = vpop.xlane.xlu0 %5205
  %v5207 = vadd.f32 %v5129, %v5130
  %v5208 = vadd.f32 %v5207, %v5131
  %v5209 = vadd.f32 %v5208, %v5132
  %5210 = vadd.xlane.f32.xlu0 %v5209
  %v5211 = vpop.xlane.xlu0 %5210
  %v5212 = vadd.f32 %v5133, %v5134
  %v5213 = vadd.f32 %v5212, %v5135
  %v5214 = vadd.f32 %v5213, %v5136
  %5215 = vadd.xlane.f32.xlu0 %v5214
  %v5216 = vpop.xlane.xlu0 %5215
  %v5217 = vld [vmem:[#allocation2] sm:$0x1]
  %v5219 = vperm.slane %v5217, 0
  %v5221 = vadd.f32 %v5141, %v5219
  %v5222 = vadd.f32 %v5146, %v5219
  %v5223 = vadd.f32 %v5151, %v5219
  %v5224 = vadd.f32 %v5156, %v5219
  %v5225 = vadd.f32 %v5161, %v5219
  %v5226 = vadd.f32 %v5166, %v5219
  %v5227 = vadd.f32 %v5171, %v5219
  %v5228 = vadd.f32 %v5176, %v5219
  %v5229 = vadd.f32 %v5181, %v5219
  %v5230 = vadd.f32 %v5186, %v5219
  %v5231 = vadd.f32 %v5191, %v5219
  %v5232 = vadd.f32 %v5196, %v5219
  %v5233 = vadd.f32 %v5201, %v5219
  %v5234 = vadd.f32 %v5206, %v5219
  %v5235 = vadd.f32 %v5211, %v5219
  %v5236 = vadd.f32 %v5216, %v5219
  %v5237 = vxor.u32 %v5221, 2147483648
  %v5238 = vxor.u32 %v5222, 2147483648
  %v5239 = vxor.u32 %v5223, 2147483648
  %v5240 = vxor.u32 %v5224, 2147483648
  %v5241 = vxor.u32 %v5225, 2147483648
  %v5242 = vxor.u32 %v5226, 2147483648
  %v5243 = vxor.u32 %v5227, 2147483648
  %v5244 = vxor.u32 %v5228, 2147483648
  %v5245 = vxor.u32 %v5229, 2147483648
  %v5246 = vxor.u32 %v5230, 2147483648
  %v5247 = vxor.u32 %v5231, 2147483648
  %v5248 = vxor.u32 %v5232, 2147483648
  %v5249 = vxor.u32 %v5233, 2147483648
  %v5250 = vxor.u32 %v5234, 2147483648
  %v5251 = vxor.u32 %v5235, 2147483648
  %v5252 = vxor.u32 %v5236, 2147483648
  %v5253 = vmul.f32 %v5237, 1.442695
  %v5254 = vpow.pop %v5253
  %v5255 = vmul.f32 %v5238, 1.442695
  %v5256 = vpow.pop %v5255
  %v5257 = vmul.f32 %v5239, 1.442695
  %v5258 = vpow.pop %v5257
  %v5259 = vmul.f32 %v5240, 1.442695
  %v5260 = vpow.pop %v5259
  %v5261 = vmul.f32 %v5241, 1.442695
  %v5262 = vpow.pop %v5261
  %v5263 = vmul.f32 %v5242, 1.442695
  %v5264 = vpow.pop %v5263
  %v5265 = vmul.f32 %v5243, 1.442695
  %v5266 = vpow.pop %v5265
  %v5267 = vmul.f32 %v5244, 1.442695
  %v5268 = vpow.pop %v5267
  %v5269 = vmul.f32 %v5245, 1.442695
  %v5270 = vpow.pop %v5269
  %v5271 = vmul.f32 %v5246, 1.442695
  %v5272 = vpow.pop %v5271
  %v5273 = vmul.f32 %v5247, 1.442695
  %v5274 = vpow.pop %v5273
  %v5275 = vmul.f32 %v5248, 1.442695
  %v5276 = vpow.pop %v5275
  %v5277 = vmul.f32 %v5249, 1.442695
  %v5278 = vpow.pop %v5277
  %v5279 = vmul.f32 %v5250, 1.442695
  %v5280 = vpow.pop %v5279
  %v5281 = vmul.f32 %v5251, 1.442695
  %v5282 = vpow.pop %v5281
  %v5283 = vmul.f32 %v5252, 1.442695
  %v5284 = vpow.pop %v5283
  %v5285 = vadd.f32 %v5254, 1.0
  %v5286 = vadd.f32 %v5256, 1.0
  %v5287 = vadd.f32 %v5258, 1.0
  %v5288 = vadd.f32 %v5260, 1.0
  %v5289 = vadd.f32 %v5262, 1.0
  %v5290 = vadd.f32 %v5264, 1.0
  %v5291 = vadd.f32 %v5266, 1.0
  %v5292 = vadd.f32 %v5268, 1.0
  %v5293 = vadd.f32 %v5270, 1.0
  %v5294 = vadd.f32 %v5272, 1.0
  %v5295 = vadd.f32 %v5274, 1.0
  %v5296 = vadd.f32 %v5276, 1.0
  %v5297 = vadd.f32 %v5278, 1.0
  %v5298 = vadd.f32 %v5280, 1.0
  %v5299 = vadd.f32 %v5282, 1.0
  %v5300 = vadd.f32 %v5284, 1.0
  %v5301 = vrcp.pop %v5285
  %v5302 = vmul.f32 %v5285, %v5301
  %v5303 = vsub.f32 1.0, %v5302
  %v5304 = vmul.f32 %v5301, %v5303
  %v5305 = vadd.f32 %v5301, %v5304
  %vm5306 = vweird.f32 %v5285
  %vm5307 = vweird.f32 %v5301
  %vm5308 = vmor %vm5306, %vm5307
  %v5309 = vsel %vm5308, %v5301, %v5305
  %v5310 = vand.u32 2147483647, %v5285
  %vm5311 = vcmp.eq.f32.partialorder %v5310, 8.507059e+37
  %v5312 = vand.u32 %v5285, 2147483648
  %v5313 = vor.u32 1.1754944e-38, %v5312
  %v5314 = vsel %vm5311, %v5313, %v5309
  %v5315 = vmul.f32 1.0, %v5314
  %v5316 = vrcp.pop %v5286
  %v5317 = vmul.f32 %v5286, %v5316
  %v5318 = vsub.f32 1.0, %v5317
  %v5319 = vmul.f32 %v5316, %v5318
  %v5320 = vadd.f32 %v5316, %v5319
  %vm5321 = vweird.f32 %v5286
  %vm5322 = vweird.f32 %v5316
  %vm5323 = vmor %vm5321, %vm5322
  %v5324 = vsel %vm5323, %v5316, %v5320
  %v5325 = vand.u32 2147483647, %v5286
  %vm5326 = vcmp.eq.f32.partialorder %v5325, 8.507059e+37
  %v5327 = vand.u32 %v5286, 2147483648
  %v5328 = vor.u32 1.1754944e-38, %v5327
  %v5329 = vsel %vm5326, %v5328, %v5324
  %v5330 = vmul.f32 1.0, %v5329
  %v5331 = vrcp.pop %v5287
  %v5332 = vmul.f32 %v5287, %v5331
  %v5333 = vsub.f32 1.0, %v5332
  %v5334 = vmul.f32 %v5331, %v5333
  %v5335 = vadd.f32 %v5331, %v5334
  %vm5336 = vweird.f32 %v5287
  %vm5337 = vweird.f32 %v5331
  %vm5338 = vmor %vm5336, %vm5337
  %v5339 = vsel %vm5338, %v5331, %v5335
  %v5340 = vand.u32 2147483647, %v5287
  %vm5341 = vcmp.eq.f32.partialorder %v5340, 8.507059e+37
  %v5342 = vand.u32 %v5287, 2147483648
  %v5343 = vor.u32 1.1754944e-38, %v5342
  %v5344 = vsel %vm5341, %v5343, %v5339
  %v5345 = vmul.f32 1.0, %v5344
  %v5346 = vrcp.pop %v5288
  %v5347 = vmul.f32 %v5288, %v5346
  %v5348 = vsub.f32 1.0, %v5347
  %v5349 = vmul.f32 %v5346, %v5348
  %v5350 = vadd.f32 %v5346, %v5349
  %vm5351 = vweird.f32 %v5288
  %vm5352 = vweird.f32 %v5346
  %vm5353 = vmor %vm5351, %vm5352
  %v5354 = vsel %vm5353, %v5346, %v5350
  %v5355 = vand.u32 2147483647, %v5288
  %vm5356 = vcmp.eq.f32.partialorder %v5355, 8.507059e+37
  %v5357 = vand.u32 %v5288, 2147483648
  %v5358 = vor.u32 1.1754944e-38, %v5357
  %v5359 = vsel %vm5356, %v5358, %v5354
  %v5360 = vmul.f32 1.0, %v5359
  %v5361 = vrcp.pop %v5289
  %v5362 = vmul.f32 %v5289, %v5361
  %v5363 = vsub.f32 1.0, %v5362
  %v5364 = vmul.f32 %v5361, %v5363
  %v5365 = vadd.f32 %v5361, %v5364
  %vm5366 = vweird.f32 %v5289
  %vm5367 = vweird.f32 %v5361
  %vm5368 = vmor %vm5366, %vm5367
  %v5369 = vsel %vm5368, %v5361, %v5365
  %v5370 = vand.u32 2147483647, %v5289
  %vm5371 = vcmp.eq.f32.partialorder %v5370, 8.507059e+37
  %v5372 = vand.u32 %v5289, 2147483648
  %v5373 = vor.u32 1.1754944e-38, %v5372
  %v5374 = vsel %vm5371, %v5373, %v5369
  %v5375 = vmul.f32 1.0, %v5374
  %v5376 = vrcp.pop %v5290
  %v5377 = vmul.f32 %v5290, %v5376
  %v5378 = vsub.f32 1.0, %v5377
  %v5379 = vmul.f32 %v5376, %v5378
  %v5380 = vadd.f32 %v5376, %v5379
  %vm5381 = vweird.f32 %v5290
  %vm5382 = vweird.f32 %v5376
  %vm5383 = vmor %vm5381, %vm5382
  %v5384 = vsel %vm5383, %v5376, %v5380
  %v5385 = vand.u32 2147483647, %v5290
  %vm5386 = vcmp.eq.f32.partialorder %v5385, 8.507059e+37
  %v5387 = vand.u32 %v5290, 2147483648
  %v5388 = vor.u32 1.1754944e-38, %v5387
  %v5389 = vsel %vm5386, %v5388, %v5384
  %v5390 = vmul.f32 1.0, %v5389
  %v5391 = vrcp.pop %v5291
  %v5392 = vmul.f32 %v5291, %v5391
  %v5393 = vsub.f32 1.0, %v5392
  %v5394 = vmul.f32 %v5391, %v5393
  %v5395 = vadd.f32 %v5391, %v5394
  %vm5396 = vweird.f32 %v5291
  %vm5397 = vweird.f32 %v5391
  %vm5398 = vmor %vm5396, %vm5397
  %v5399 = vsel %vm5398, %v5391, %v5395
  %v5400 = vand.u32 2147483647, %v5291
  %vm5401 = vcmp.eq.f32.partialorder %v5400, 8.507059e+37
  %v5402 = vand.u32 %v5291, 2147483648
  %v5403 = vor.u32 1.1754944e-38, %v5402
  %v5404 = vsel %vm5401, %v5403, %v5399
  %v5405 = vmul.f32 1.0, %v5404
  %v5406 = vrcp.pop %v5292
  %v5407 = vmul.f32 %v5292, %v5406
  %v5408 = vsub.f32 1.0, %v5407
  %v5409 = vmul.f32 %v5406, %v5408
  %v5410 = vadd.f32 %v5406, %v5409
  %vm5411 = vweird.f32 %v5292
  %vm5412 = vweird.f32 %v5406
  %vm5413 = vmor %vm5411, %vm5412
  %v5414 = vsel %vm5413, %v5406, %v5410
  %v5415 = vand.u32 2147483647, %v5292
  %vm5416 = vcmp.eq.f32.partialorder %v5415, 8.507059e+37
  %v5417 = vand.u32 %v5292, 2147483648
  %v5418 = vor.u32 1.1754944e-38, %v5417
  %v5419 = vsel %vm5416, %v5418, %v5414
  %v5420 = vmul.f32 1.0, %v5419
  %v5421 = vrcp.pop %v5293
  %v5422 = vmul.f32 %v5293, %v5421
  %v5423 = vsub.f32 1.0, %v5422
  %v5424 = vmul.f32 %v5421, %v5423
  %v5425 = vadd.f32 %v5421, %v5424
  %vm5426 = vweird.f32 %v5293
  %vm5427 = vweird.f32 %v5421
  %vm5428 = vmor %vm5426, %vm5427
  %v5429 = vsel %vm5428, %v5421, %v5425
  %v5430 = vand.u32 2147483647, %v5293
  %vm5431 = vcmp.eq.f32.partialorder %v5430, 8.507059e+37
  %v5432 = vand.u32 %v5293, 2147483648
  %v5433 = vor.u32 1.1754944e-38, %v5432
  %v5434 = vsel %vm5431, %v5433, %v5429
  %v5435 = vmul.f32 1.0, %v5434
  %v5436 = vrcp.pop %v5294
  %v5437 = vmul.f32 %v5294, %v5436
  %v5438 = vsub.f32 1.0, %v5437
  %v5439 = vmul.f32 %v5436, %v5438
  %v5440 = vadd.f32 %v5436, %v5439
  %vm5441 = vweird.f32 %v5294
  %vm5442 = vweird.f32 %v5436
  %vm5443 = vmor %vm5441, %vm5442
  %v5444 = vsel %vm5443, %v5436, %v5440
  %v5445 = vand.u32 2147483647, %v5294
  %vm5446 = vcmp.eq.f32.partialorder %v5445, 8.507059e+37
  %v5447 = vand.u32 %v5294, 2147483648
  %v5448 = vor.u32 1.1754944e-38, %v5447
  %v5449 = vsel %vm5446, %v5448, %v5444
  %v5450 = vmul.f32 1.0, %v5449
  %v5451 = vrcp.pop %v5295
  %v5452 = vmul.f32 %v5295, %v5451
  %v5453 = vsub.f32 1.0, %v5452
  %v5454 = vmul.f32 %v5451, %v5453
  %v5455 = vadd.f32 %v5451, %v5454
  %vm5456 = vweird.f32 %v5295
  %vm5457 = vweird.f32 %v5451
  %vm5458 = vmor %vm5456, %vm5457
  %v5459 = vsel %vm5458, %v5451, %v5455
  %v5460 = vand.u32 2147483647, %v5295
  %vm5461 = vcmp.eq.f32.partialorder %v5460, 8.507059e+37
  %v5462 = vand.u32 %v5295, 2147483648
  %v5463 = vor.u32 1.1754944e-38, %v5462
  %v5464 = vsel %vm5461, %v5463, %v5459
  %v5465 = vmul.f32 1.0, %v5464
  %v5466 = vrcp.pop %v5296
  %v5467 = vmul.f32 %v5296, %v5466
  %v5468 = vsub.f32 1.0, %v5467
  %v5469 = vmul.f32 %v5466, %v5468
  %v5470 = vadd.f32 %v5466, %v5469
  %vm5471 = vweird.f32 %v5296
  %vm5472 = vweird.f32 %v5466
  %vm5473 = vmor %vm5471, %vm5472
  %v5474 = vsel %vm5473, %v5466, %v5470
  %v5475 = vand.u32 2147483647, %v5296
  %vm5476 = vcmp.eq.f32.partialorder %v5475, 8.507059e+37
  %v5477 = vand.u32 %v5296, 2147483648
  %v5478 = vor.u32 1.1754944e-38, %v5477
  %v5479 = vsel %vm5476, %v5478, %v5474
  %v5480 = vmul.f32 1.0, %v5479
  %v5481 = vrcp.pop %v5297
  %v5482 = vmul.f32 %v5297, %v5481
  %v5483 = vsub.f32 1.0, %v5482
  %v5484 = vmul.f32 %v5481, %v5483
  %v5485 = vadd.f32 %v5481, %v5484
  %vm5486 = vweird.f32 %v5297
  %vm5487 = vweird.f32 %v5481
  %vm5488 = vmor %vm5486, %vm5487
  %v5489 = vsel %vm5488, %v5481, %v5485
  %v5490 = vand.u32 2147483647, %v5297
  %vm5491 = vcmp.eq.f32.partialorder %v5490, 8.507059e+37
  %v5492 = vand.u32 %v5297, 2147483648
  %v5493 = vor.u32 1.1754944e-38, %v5492
  %v5494 = vsel %vm5491, %v5493, %v5489
  %v5495 = vmul.f32 1.0, %v5494
  %v5496 = vrcp.pop %v5298
  %v5497 = vmul.f32 %v5298, %v5496
  %v5498 = vsub.f32 1.0, %v5497
  %v5499 = vmul.f32 %v5496, %v5498
  %v5500 = vadd.f32 %v5496, %v5499
  %vm5501 = vweird.f32 %v5298
  %vm5502 = vweird.f32 %v5496
  %vm5503 = vmor %vm5501, %vm5502
  %v5504 = vsel %vm5503, %v5496, %v5500
  %v5505 = vand.u32 2147483647, %v5298
  %vm5506 = vcmp.eq.f32.partialorder %v5505, 8.507059e+37
  %v5507 = vand.u32 %v5298, 2147483648
  %v5508 = vor.u32 1.1754944e-38, %v5507
  %v5509 = vsel %vm5506, %v5508, %v5504
  %v5510 = vmul.f32 1.0, %v5509
  %v5511 = vrcp.pop %v5299
  %v5512 = vmul.f32 %v5299, %v5511
  %v5513 = vsub.f32 1.0, %v5512
  %v5514 = vmul.f32 %v5511, %v5513
  %v5515 = vadd.f32 %v5511, %v5514
  %vm5516 = vweird.f32 %v5299
  %vm5517 = vweird.f32 %v5511
  %vm5518 = vmor %vm5516, %vm5517
  %v5519 = vsel %vm5518, %v5511, %v5515
  %v5520 = vand.u32 2147483647, %v5299
  %vm5521 = vcmp.eq.f32.partialorder %v5520, 8.507059e+37
  %v5522 = vand.u32 %v5299, 2147483648
  %v5523 = vor.u32 1.1754944e-38, %v5522
  %v5524 = vsel %vm5521, %v5523, %v5519
  %v5525 = vmul.f32 1.0, %v5524
  %v5526 = vrcp.pop %v5300
  %v5527 = vmul.f32 %v5300, %v5526
  %v5528 = vsub.f32 1.0, %v5527
  %v5529 = vmul.f32 %v5526, %v5528
  %v5530 = vadd.f32 %v5526, %v5529
  %vm5531 = vweird.f32 %v5300
  %vm5532 = vweird.f32 %v5526
  %vm5533 = vmor %vm5531, %vm5532
  %v5534 = vsel %vm5533, %v5526, %v5530
  %v5535 = vand.u32 2147483647, %v5300
  %vm5536 = vcmp.eq.f32.partialorder %v5535, 8.507059e+37
  %v5537 = vand.u32 %v5300, 2147483648
  %v5538 = vor.u32 1.1754944e-38, %v5537
  %v5539 = vsel %vm5536, %v5538, %v5534
  %v5540 = vmul.f32 1.0, %v5539
  %vm5541 = vcmask 7168
  %5542 = vst.msk [vmem:[%s10] sm:$0xff] %vm5541, %v5315
  %5543 = vst.msk [vmem:[%s10 + $0x8] sm:$0xff] %vm5541, %v5330
  %5544 = vst.msk [vmem:[%s10 + $0x10] sm:$0xff] %vm5541, %v5345
  %5545 = vst.msk [vmem:[%s10 + $0x18] sm:$0xff] %vm5541, %v5360
  %5546 = vst.msk [vmem:[%s10 + $0x20] sm:$0xff] %vm5541, %v5375
  %5547 = vst.msk [vmem:[%s10 + $0x28] sm:$0xff] %vm5541, %v5390
  %5548 = vst.msk [vmem:[%s10 + $0x30] sm:$0xff] %vm5541, %v5405
  %5549 = vst.msk [vmem:[%s10 + $0x38] sm:$0xff] %vm5541, %v5420
  %5550 = vst.msk [vmem:[%s10 + $0x40] sm:$0xff] %vm5541, %v5435
  %5551 = vst.msk [vmem:[%s10 + $0x48] sm:$0xff] %vm5541, %v5450
  %5552 = vst.msk [vmem:[%s10 + $0x50] sm:$0xff] %vm5541, %v5465
  %5553 = vst.msk [vmem:[%s10 + $0x58] sm:$0xff] %vm5541, %v5480
  %5554 = vst.msk [vmem:[%s10 + $0x60] sm:$0xff] %vm5541, %v5495
  %5555 = vst.msk [vmem:[%s10 + $0x68] sm:$0xff] %vm5541, %v5510
  %5556 = vst.msk [vmem:[%s10 + $0x70] sm:$0xff] %vm5541, %v5525
  %5557 = vst.msk [vmem:[%s10 + $0x78] sm:$0xff] %vm5541, %v5540
  // Predicated region
  $region42: #{discriminator_forward.1} parent=0 // pred_check
    _
  $region43: #{discriminator_forward.1} parent=0 // pred_check_branch
    %5559 = sbr.rel (0) target = $region45
  $region44: #{discriminator_forward.1} parent=0 // pred_region
    _
  $region45: #{discriminator_forward.1} parent=0 // pred_fallthru
    _
  // Predicated region
  $region46: #{discriminator_forward.1} parent=0 // pred_check
    _
  $region47: #{discriminator_forward.1} parent=0 // pred_check_branch
    %5561 = sbr.rel (0) target = $region49
  $region48: #{discriminator_forward.1} parent=0 // pred_region
    _
  $region49: #{discriminator_forward.1} parent=0 // pred_fallthru
    _

</llo_original>
